<compile_context>
chip_gen: v7x
topology: tpu7x:2x2x1
jax: 0.10.0
libtpu: 0.0.40
codegen_flags: <defaults>
</compile_context>

<pallas_src>
import functools

import jax
import jax.numpy as jnp
from jax import lax
from jax.experimental import pallas as pl
from jax.experimental.pallas import tpu as pltpu

D_FEAT = 128          # encoder output feature width (lane friendly)
NUM_DIM = 5           # Subspace_Projection(num_dim=5)
TEMP_INIT = 10.0      # nn.Parameter(torch.tensor(10.0)) for method='cosine'
CTS_TEMP = 0.07       # SupConLoss temperature
CTS_BASE_TEMP = 0.07
EPS = 1e-12
LANES = 128


# ----------------------------------------------------------------------------
# Pallas kernel 1: fused encoder (shot + query) + per-class Gram matrices.
# ----------------------------------------------------------------------------
def _make_encoder_gram_kernel(n_shot, n_query, n_pad):
    ns_rows = 2 * n_shot
    nq_rows = 2 * n_query
    total = ns_rows + nq_rows

    def kernel(xs_ref, xq_ref, w_ref, b_ref, feat_ref, gram_ref):
        # in-kernel bf16 cast (rides free VPU slots under the MXU); f32 acc.
        w = w_ref[...].astype(jnp.bfloat16)
        b = b_ref[...]                                                  # (1, D)
        fs = jnp.maximum(
            jnp.dot(xs_ref[...].astype(jnp.bfloat16), w,
                    preferred_element_type=jnp.float32) + b, 0.0)       # (2*ns, D)
        fq = jnp.maximum(
            jnp.dot(xq_ref[...].astype(jnp.bfloat16), w,
                    preferred_element_type=jnp.float32) + b, 0.0)       # (2*nq, D)

        feat_ref[0:ns_rows, :] = fs
        feat_ref[ns_rows:total, :] = fq
        if n_pad > total:
            feat_ref[total:n_pad, :] = jnp.zeros(
                (n_pad - total, fs.shape[1]), jnp.float32)

        # per-class Gram of the mean-centered shot features (feeds XLA eigh)
        for c in range(2):
            sc = fs[c * n_shot:(c + 1) * n_shot]                        # (ns, D)
            mu = jnp.mean(sc, axis=0, keepdims=True)
            cen = sc - mu
            gram_ref[c] = lax.dot_general(
                cen, cen, (((1,), (1,)), ((), ())),
                preferred_element_type=jnp.float32)                     # (ns, ns)

    return kernel


def encode_and_gram(xs_flat, xq_flat, w, b, *, n_shot, n_query):
    ns_rows, chw = xs_flat.shape
    nq_rows = xq_flat.shape[0]
    d = w.shape[1]
    total = ns_rows + nq_rows
    n_pad = ((total + 7) // 8) * 8                 # sublane-aligned feature slab
    kernel = _make_encoder_gram_kernel(n_shot, n_query, n_pad)
    return pl.pallas_call(
        kernel,
        out_shape=(jax.ShapeDtypeStruct((n_pad, d), jnp.float32),
                   jax.ShapeDtypeStruct((2, n_shot, n_shot), jnp.float32)),
        grid_spec=pltpu.PrefetchScalarGridSpec(
            num_scalar_prefetch=0,
            grid=(1,),
            in_specs=[
                pl.BlockSpec((ns_rows, chw), lambda i: (0, 0)),
                pl.BlockSpec((nq_rows, chw), lambda i: (0, 0)),
                pl.BlockSpec((chw, d), lambda i: (0, 0)),
                pl.BlockSpec((1, d), lambda i: (0, 0)),
            ],
            out_specs=(pl.BlockSpec((n_pad, d), lambda i: (0, 0)),
                       pl.BlockSpec((2, n_shot, n_shot), lambda i: (0, 0, 0))),
        ),
        compiler_params=pltpu.CompilerParams(
            dimension_semantics=("arbitrary",)),
    )(xs_flat, xq_flat, w, b)


# ----------------------------------------------------------------------------
# Pallas kernel 2: fused head — subspace projection metric (cosine),
# discriminative loss, and SupCon loss, all from the resident feature slab.
# ----------------------------------------------------------------------------
def _make_head_kernel(n_shot, n_query):
    ns, nq = n_shot, n_query
    m = 2 * ns + 2 * nq                      # rows used by SupCon

    def kernel(f_ref, evals_ref, evecs_ref, o_ref):
        f = f_ref[...]                                   # (n_pad, D)
        q = f[2 * ns:2 * ns + 2 * nq]                    # (2, D) [pos q, neg q]
        evals = evals_ref[...]                           # (2, ns), ascending

        # keep the top NUM_DIM eigenpairs (order/sign irrelevant for projector)
        keep = lax.broadcasted_iota(jnp.int32, (1, ns), 1) >= (ns - NUM_DIM)

        cos_cols, cens, amats = [], [], []
        for c in range(2):
            sc = f[c * ns:(c + 1) * ns]                  # (ns, D) shot feats
            mu = jnp.mean(sc, axis=0, keepdims=True)     # (1, D)
            cen = sc - mu
            cens.append(cen)

            lam = jnp.maximum(evals[c:c + 1, :], 1e-12)  # (1, ns)
            wgt = jnp.where(keep, 1.0 / lam, 0.0)        # zero out dropped pair
            e = evecs_ref[c]                             # (ns, ns), cols = evecs
            a_mat = lax.dot_general(e * wgt, e, (((1,), (1,)), ((), ())),
                                    preferred_element_type=jnp.float32)
            amats.append(a_mat)                          # sum_top (1/l) e e^T

            # proj = (q - mu) cen^T A cen + mu   (== Ht^T (Ht (q-mu)) + mu)
            dq = q - mu                                                  # (2, D)
            coef = lax.dot_general(dq, cen, (((1,), (1,)), ((), ())),
                                   preferred_element_type=jnp.float32)  # (2, ns)
            a_coef = lax.dot_general(coef, a_mat, (((1,), (0,)), ((), ())),
                                     preferred_element_type=jnp.float32)
            proj = lax.dot_general(a_coef, cen, (((1,), (0,)), ((), ())),
                                   preferred_element_type=jnp.float32) + mu
            num = jnp.sum(q * proj, axis=-1, keepdims=True)
            qn = jnp.sqrt(jnp.sum(q * q, axis=-1, keepdims=True) + EPS)
            pn = jnp.sqrt(jnp.sum(proj * proj, axis=-1, keepdims=True) + EPS)
            cos_cols.append(num / (qn * pn))             # (2, 1): [q0, q1] vs c

        # dist = 2*||H0 H1^T||_F^2 = 2*tr(S A1 S^T A0), S = cen0 cen1^T
        s01 = lax.dot_general(cens[0], cens[1], (((1,), (1,)), ((), ())),
                              preferred_element_type=jnp.float32)        # (ns,ns)
        m1 = lax.dot_general(s01, amats[1], (((1,), (0,)), ((), ())),
                             preferred_element_type=jnp.float32)
        m2 = lax.dot_general(m1, s01, (((1,), (1,)), ((), ())),
                             preferred_element_type=jnp.float32)
        dist = 2.0 * jnp.sum(m2 * amats[0])              # A0 symmetric

        # SupCon on rows [shot_c0, shot_c1, query_c0, query_c1]
        # (row permutation of the PyTorch [pos_set, neg_set] order — loss is
        #  permutation invariant); positive mask built in-kernel from iota.
        fm = f[0:m]
        fn = fm / jnp.sqrt(jnp.sum(fm * fm, axis=-1, keepdims=True) + EPS)
        sim = lax.dot_general(fn, fn, (((1,), (1,)), ((), ())),
                              preferred_element_type=jnp.float32) / CTS_TEMP
        ri = lax.broadcasted_iota(jnp.int32, (m, m), 0)
        ci = lax.broadcasted_iota(jnp.int32, (m, m), 1)

        def lab(idx):    # class-1 rows: shots [ns, 2ns) plus the last nq rows
            return jnp.logical_or(jnp.logical_and(idx >= ns, idx < 2 * ns),
                                  idx >= 2 * ns + nq)

        off_diag = ri != ci
        logits_mask = off_diag.astype(jnp.float32)
        pos_mask = jnp.logical_and(lab(ri) == lab(ci), off_diag).astype(jnp.float32)
        sim_max = jnp.max(sim, axis=-1, keepdims=True)
        logits = sim - sim_max
        exp_logits = jnp.exp(logits) * logits_mask
        log_prob = logits - jnp.log(jnp.sum(exp_logits, axis=-1, keepdims=True) + EPS)
        mean_log_prob_pos = (jnp.sum(pos_mask * log_prob, axis=-1, keepdims=True)
                             / (jnp.sum(pos_mask, axis=-1, keepdims=True) + EPS))
        cts = -(CTS_TEMP / CTS_BASE_TEMP) * jnp.mean(mean_log_prob_pos)

        # lane-dense packed output
        o_ref[...] = jnp.zeros((8, LANES), jnp.float32)
        o_ref[0:1, :] = jnp.broadcast_to(cos_cols[0][0:1, :], (1, LANES))  # q0 c0
        o_ref[1:2, :] = jnp.broadcast_to(cos_cols[1][0:1, :], (1, LANES))  # q0 c1
        o_ref[2:3, :] = jnp.broadcast_to(cos_cols[0][1:2, :], (1, LANES))  # q1 c0
        o_ref[3:4, :] = jnp.broadcast_to(cos_cols[1][1:2, :], (1, LANES))  # q1 c1
        o_ref[4:5, :] = jnp.full((1, LANES), dist, jnp.float32)
        o_ref[5:6, :] = jnp.full((1, LANES), cts, jnp.float32)

    return kernel


def fused_head(feats, evals, evecs, *, n_shot, n_query):
    n_pad, d = feats.shape
    kernel = _make_head_kernel(n_shot, n_query)
    return pl.pallas_call(
        kernel,
        out_shape=jax.ShapeDtypeStruct((8, LANES), jnp.float32),
        grid_spec=pltpu.PrefetchScalarGridSpec(
            num_scalar_prefetch=0,
            grid=(1,),
            in_specs=[
                pl.BlockSpec((n_pad, d), lambda i: (0, 0)),
                pl.BlockSpec((2, n_shot), lambda i: (0, 0)),
                pl.BlockSpec((2, n_shot, n_shot), lambda i: (0, 0, 0)),
            ],
            out_specs=pl.BlockSpec((8, LANES), lambda i: (0, 0)),
        ),
        compiler_params=pltpu.CompilerParams(
            dimension_semantics=("arbitrary",)),
    )(feats, evals, evecs)


# ----------------------------------------------------------------------------
# My_model.forward equivalent
# ----------------------------------------------------------------------------
def my_model_forward(params, x_shot, x_query, *, shot_boxes, query_boxes,
                     shot_human_roi, query_human_roi, roi_position,
                     cts_loss_weight=1.0):
    del shot_boxes, query_boxes, shot_human_roi, query_human_roi, roi_position
    # TODO(synk): the real encoder does ROI/box-conditioned pooling; a synthetic
    # flatten + linear + ReLU encoder (Pallas matmul) stands in.
    t, n_cls, n_shot = x_shot.shape[:3]
    n_query = x_query.shape[2]
    chw = x_shot.shape[-3] * x_shot.shape[-2] * x_shot.shape[-1]
    assert n_cls == 2 and n_query == 1
    # fused head (projection + SupCon in one call) assumes a single task, as
    # required by the PyTorch cts path (torch.cat((pos_set, neg_set), dim=1)).
    assert t == 1

    # free reshapes: row order (task, class, shot) already matches [::2]/[1::2]
    xs_flat = x_shot.reshape(-1, chw)               # (2*n_shot, CHW)
    xq_flat = x_query.reshape(-1, chw)              # (2*n_query, CHW)

    feats, gram = encode_and_gram(xs_flat, xq_flat, params['w_enc'],
                                  params['b_enc'], n_shot=n_shot,
                                  n_query=n_query)

    # TODO(synk): 6x6 symmetric eigendecomposition has no Pallas/Mosaic
    # equivalent; it stays in XLA (replaces the Dxn SVD of the reference).
    evals, evecs = jnp.linalg.eigh(gram)            # (2, 6), (2, 6, 6)

    out = fused_head(feats, evals, evecs, n_shot=n_shot, n_query=n_query)

    # Note: PyTorch casts the positive query to double; TPU compute stays f32.
    logits = out[0:4, 0].reshape(-1, 2) * params['temp']   # rows = queries
    dist_loss = out[4, 0]
    if cts_loss_weight != 0:
        cts_loss = out[5, 0]
    else:
        cts_loss = jnp.asarray(0.0, jnp.float32)
    return logits, dist_loss, cts_loss


if __name__ == "__main__":
    key = jax.random.PRNGKey(0)
    k_w, k_shot, k_query = jax.random.split(key, 3)

    # Shapes implied by the forward: 1 task x 2 classes x (6 shot + 1 query)
    T, N_CLS, N_SHOT, N_QUERY = 1, 2, 6, 1
    C, H, W = 3, 16, 16
    CHW = C * H * W

    params = {
        'w_enc': jax.random.normal(k_w, (CHW, D_FEAT), jnp.float32) * (CHW ** -0.5),
        'b_enc': jnp.zeros((1, D_FEAT), jnp.float32),
        'temp': jnp.asarray(TEMP_INIT, jnp.float32),      # method='cosine'
    }

    x_shot = jax.random.normal(k_shot, (T, N_CLS, N_SHOT, C, H, W), jnp.float32)
    x_query = jax.random.normal(k_query, (T, N_CLS, N_QUERY, C, H, W), jnp.float32)

    # Dummy box / ROI inputs (interface parity with the PyTorch kwargs).
    shot_boxes = jnp.zeros((T, N_CLS, N_SHOT, 4), jnp.float32)
    query_boxes = jnp.zeros((T, N_CLS, N_QUERY, 4), jnp.float32)
    shot_human_roi = jnp.zeros((T, N_CLS, N_SHOT, 4), jnp.float32)
    query_human_roi = jnp.zeros((T, N_CLS, N_QUERY, 4), jnp.float32)
    roi_position = jnp.zeros((4,), jnp.float32)

    fwd = jax.jit(functools.partial(
        my_model_forward,
        shot_boxes=shot_boxes, query_boxes=query_boxes,
        shot_human_roi=shot_human_roi, query_human_roi=query_human_roi,
        roi_position=roi_position, cts_loss_weight=1.0))

    logits, dist_loss, cts_loss = fwd(params, x_shot, x_query)
    jax.block_until_ready((logits, dist_loss, cts_loss))

    assert logits.shape == (2 * T, 2)
    assert dist_loss.shape == () and cts_loss.shape == ()
    print("KERNEL_OK")
</pallas_src>

<mosaic_0001>
module attributes {stable_mosaic.version = 11 : i64} {
  func.func @kernel(%arg0: i32, %arg1: memref<12x768xf32, #tpu.memory_space<vmem>>, %arg2: memref<2x768xf32, #tpu.memory_space<vmem>>, %arg3: memref<768x128xf32, #tpu.memory_space<vmem>>, %arg4: memref<1x128xf32, #tpu.memory_space<vmem>>, %arg5: memref<16x128xf32, #tpu.memory_space<vmem>>, %arg6: memref<2x6x6xf32, #tpu.memory_space<vmem>>) attributes {dimension_semantics = [#tpu.dimension_semantics<arbitrary>], iteration_bounds = array<i64: 1>, scalar_prefetch = 0 : i64, scratch_operands = 0 : i64, tpu.core_type = #tpu.core_type<tc>, window_params = [{pipeline_mode = #tpu.pipeline_mode<synchronous>, transform_indices = @transform_0, window_bounds = array<i64: 12, 768>}, {pipeline_mode = #tpu.pipeline_mode<synchronous>, transform_indices = @transform_1, window_bounds = array<i64: 2, 768>}, {pipeline_mode = #tpu.pipeline_mode<synchronous>, transform_indices = @transform_2, window_bounds = array<i64: 768, 128>}, {pipeline_mode = #tpu.pipeline_mode<synchronous>, transform_indices = @transform_3, window_bounds = array<i64: 1, 128>}, {pipeline_mode = #tpu.pipeline_mode<synchronous>, transform_indices = @transform_4, window_bounds = array<i64: 16, 128>}, {pipeline_mode = #tpu.pipeline_mode<synchronous>, transform_indices = @transform_5, window_bounds = array<i64: 2, 6, 6>}]} {
    %c0 = arith.constant 0 : index
    %c0_0 = arith.constant 0 : index
    %0 = vector.load %arg3[%c0, %c0_0] : memref<768x128xf32, #tpu.memory_space<vmem>>, vector<768x128xf32>
    %1 = arith.truncf %0 : vector<768x128xf32> to vector<768x128xbf16>
    %c0_1 = arith.constant 0 : index
    %c0_2 = arith.constant 0 : index
    %2 = vector.load %arg4[%c0_1, %c0_2] : memref<1x128xf32, #tpu.memory_space<vmem>>, vector<1x128xf32>
    %c0_3 = arith.constant 0 : index
    %c0_4 = arith.constant 0 : index
    %3 = vector.load %arg1[%c0_3, %c0_4] : memref<12x768xf32, #tpu.memory_space<vmem>>, vector<12x768xf32>
    %4 = arith.truncf %3 : vector<12x768xf32> to vector<12x768xbf16>
    %cst = arith.constant dense<0.000000e+00> : vector<12x128xf32>
    %5 = tpu.matmul %4, %1, %cst {dimension_numbers = #tpu.dot_dimension_numbers<[1], [0], [0], [1], [0, 0, 1, 1], [], []>} : vector<12x768xbf16>, vector<768x128xbf16>, vector<12x128xf32> -> vector<12x128xf32>
    %6 = vector.broadcast %2 : vector<1x128xf32> to vector<12x128xf32>
    %7 = arith.addf %5, %6 : vector<12x128xf32>
    %cst_5 = arith.constant 0.000000e+00 : f32
    %8 = vector.broadcast %cst_5 : f32 to vector<12x128xf32>
    %9 = arith.maximumf %7, %8 : vector<12x128xf32>
    %c0_6 = arith.constant 0 : index
    %c0_7 = arith.constant 0 : index
    %10 = vector.load %arg2[%c0_6, %c0_7] : memref<2x768xf32, #tpu.memory_space<vmem>>, vector<2x768xf32>
    %11 = arith.truncf %10 : vector<2x768xf32> to vector<2x768xbf16>
    %cst_8 = arith.constant dense<0.000000e+00> : vector<2x128xf32>
    %12 = tpu.matmul %11, %1, %cst_8 {dimension_numbers = #tpu.dot_dimension_numbers<[1], [0], [0], [1], [0, 0, 1, 1], [], []>} : vector<2x768xbf16>, vector<768x128xbf16>, vector<2x128xf32> -> vector<2x128xf32>
    %13 = vector.broadcast %2 : vector<1x128xf32> to vector<2x128xf32>
    %14 = arith.addf %12, %13 : vector<2x128xf32>
    %cst_9 = arith.constant 0.000000e+00 : f32
    %15 = vector.broadcast %cst_9 : f32 to vector<2x128xf32>
    %16 = arith.maximumf %14, %15 : vector<2x128xf32>
    %c0_10 = arith.constant 0 : index
    %c0_11 = arith.constant 0 : index
    %17 = vector.load %arg5[%c0_10, %c0_11] : memref<16x128xf32, #tpu.memory_space<vmem>>, vector<12x128xf32>
    tpu.vector_store %arg5[%c0_10, %c0_11], %9 {strides = array<i32>} : memref<16x128xf32, #tpu.memory_space<vmem>>, vector<12x128xf32>,
    %c12 = arith.constant 12 : index
    %c0_12 = arith.constant 0 : index
    %18 = vector.load %arg5[%c12, %c0_12] : memref<16x128xf32, #tpu.memory_space<vmem>>, vector<2x128xf32>
    tpu.vector_store %arg5[%c12, %c0_12], %16 {strides = array<i32>} : memref<16x128xf32, #tpu.memory_space<vmem>>, vector<2x128xf32>,
    %cst_13 = arith.constant 0.000000e+00 : f32
    %19 = vector.broadcast %cst_13 : f32 to vector<2x128xf32>
    %c14 = arith.constant 14 : index
    %c0_14 = arith.constant 0 : index
    %20 = vector.load %arg5[%c14, %c0_14] : memref<16x128xf32, #tpu.memory_space<vmem>>, vector<2x128xf32>
    tpu.vector_store %arg5[%c14, %c0_14], %19 {strides = array<i32>} : memref<16x128xf32, #tpu.memory_space<vmem>>, vector<2x128xf32>,
    %21 = vector.extract_strided_slice %9 {offsets = [0, 0], sizes = [6, 128], strides = [1, 1]} : vector<12x128xf32> to vector<6x128xf32>
    %cst_15 = arith.constant dense<0.000000e+00> : vector<128xf32>
    %22 = vector.multi_reduction <add>, %21, %cst_15 [0] : vector<6x128xf32> to vector<128xf32>
    %23 = vector.shape_cast %22 : vector<128xf32> to vector<1x128xf32>
    %cst_16 = arith.constant 6.000000e+00 : f32
    %24 = vector.broadcast %cst_16 : f32 to vector<1x128xf32>
    %25 = arith.divf %23, %24 : vector<1x128xf32>
    %26 = vector.broadcast %25 : vector<1x128xf32> to vector<6x128xf32>
    %27 = arith.subf %21, %26 : vector<6x128xf32>
    %cst_17 = arith.constant dense<0.000000e+00> : vector<6x6xf32>
    %28 = tpu.matmul %27, %27, %cst_17 {dimension_numbers = #tpu.dot_dimension_numbers<[1], [1], [0], [0], [0, 0, 1, 0], [], []>} : vector<6x128xf32>, vector<6x128xf32>, vector<6x6xf32> -> vector<6x6xf32>
    %c0_18 = arith.constant 0 : index
    %c0_19 = arith.constant 0 : index
    %c0_20 = arith.constant 0 : index
    %29 = vector.load %arg6[%c0_18, %c0_19, %c0_20] : memref<2x6x6xf32, #tpu.memory_space<vmem>>, vector<1x6x6xf32>
    %30 = vector.shape_cast %29 : vector<1x6x6xf32> to vector<6x6xf32>
    %31 = vector.shape_cast %28 : vector<6x6xf32> to vector<1x6x6xf32>
    tpu.vector_store %arg6[%c0_18, %c0_19, %c0_20], %31 {strides = array<i32>} : memref<2x6x6xf32, #tpu.memory_space<vmem>>, vector<1x6x6xf32>,
    %32 = vector.extract_strided_slice %9 {offsets = [6, 0], sizes = [6, 128], strides = [1, 1]} : vector<12x128xf32> to vector<6x128xf32>
    %cst_21 = arith.constant dense<0.000000e+00> : vector<128xf32>
    %33 = vector.multi_reduction <add>, %32, %cst_21 [0] : vector<6x128xf32> to vector<128xf32>
    %34 = vector.shape_cast %33 : vector<128xf32> to vector<1x128xf32>
    %cst_22 = arith.constant 6.000000e+00 : f32
    %35 = vector.broadcast %cst_22 : f32 to vector<1x128xf32>
    %36 = arith.divf %34, %35 : vector<1x128xf32>
    %37 = vector.broadcast %36 : vector<1x128xf32> to vector<6x128xf32>
    %38 = arith.subf %32, %37 : vector<6x128xf32>
    %cst_23 = arith.constant dense<0.000000e+00> : vector<6x6xf32>
    %39 = tpu.matmul %38, %38, %cst_23 {dimension_numbers = #tpu.dot_dimension_numbers<[1], [1], [0], [0], [0, 0, 1, 0], [], []>} : vector<6x128xf32>, vector<6x128xf32>, vector<6x6xf32> -> vector<6x6xf32>
    %c1 = arith.constant 1 : index
    %c0_24 = arith.constant 0 : index
    %c0_25 = arith.constant 0 : index
    %40 = vector.load %arg6[%c1, %c0_24, %c0_25] : memref<2x6x6xf32, #tpu.memory_space<vmem>>, vector<1x6x6xf32>
    %41 = vector.shape_cast %40 : vector<1x6x6xf32> to vector<6x6xf32>
    %42 = vector.shape_cast %39 : vector<6x6xf32> to vector<1x6x6xf32>
    tpu.vector_store %arg6[%c1, %c0_24, %c0_25], %42 {strides = array<i32>} : memref<2x6x6xf32, #tpu.memory_space<vmem>>, vector<1x6x6xf32>,
    return
  }
  func.func @transform_0(%arg0: i32) -> (i32, i32) {
    %c0_i32 = arith.constant 0 : i32
    %c0_i32_0 = arith.constant 0 : i32
    %c0_i32_1 = arith.constant 0 : i32
    return %c0_i32, %c0_i32_0 : i32, i32
  }
  func.func @transform_1(%arg0: i32) -> (i32, i32) {
    %c0_i32 = arith.constant 0 : i32
    %c0_i32_0 = arith.constant 0 : i32
    %c0_i32_1 = arith.constant 0 : i32
    return %c0_i32, %c0_i32_0 : i32, i32
  }
  func.func @transform_2(%arg0: i32) -> (i32, i32) {
    %c0_i32 = arith.constant 0 : i32
    %c0_i32_0 = arith.constant 0 : i32
    %c0_i32_1 = arith.constant 0 : i32
    return %c0_i32, %c0_i32_0 : i32, i32
  }
  func.func @transform_3(%arg0: i32) -> (i32, i32) {
    %c0_i32 = arith.constant 0 : i32
    %c0_i32_0 = arith.constant 0 : i32
    %c0_i32_1 = arith.constant 0 : i32
    return %c0_i32, %c0_i32_0 : i32, i32
  }
  func.func @transform_4(%arg0: i32) -> (i32, i32) {
    %c0_i32 = arith.constant 0 : i32
    %c0_i32_0 = arith.constant 0 : i32
    %c0_i32_1 = arith.constant 0 : i32
    return %c0_i32, %c0_i32_0 : i32, i32
  }
  func.func @transform_5(%arg0: i32) -> (i32, i32, i32) {
    %c0_i32 = arith.constant 0 : i32
    %c0_i32_0 = arith.constant 0 : i32
    %c0_i32_1 = arith.constant 0 : i32
    %c0_i32_2 = arith.constant 0 : i32
    return %c0_i32, %c0_i32_0, %c0_i32_1 : i32, i32, i32
  }
}

module attributes {stable_mosaic.version = 11 : i64} {
  func.func @kernel(%arg0: i32, %arg1: memref<16x128xf32, #tpu.memory_space<vmem>>, %arg2: memref<2x6xf32, #tpu.memory_space<vmem>>, %arg3: memref<2x6x6xf32, #tpu.memory_space<vmem>>, %arg4: memref<8x128xf32, #tpu.memory_space<vmem>>) attributes {dimension_semantics = [#tpu.dimension_semantics<arbitrary>], iteration_bounds = array<i64: 1>, scalar_prefetch = 0 : i64, scratch_operands = 0 : i64, tpu.core_type = #tpu.core_type<tc>, window_params = [{pipeline_mode = #tpu.pipeline_mode<synchronous>, transform_indices = @transform_0, window_bounds = array<i64: 16, 128>}, {pipeline_mode = #tpu.pipeline_mode<synchronous>, transform_indices = @transform_1, window_bounds = array<i64: 2, 6>}, {pipeline_mode = #tpu.pipeline_mode<synchronous>, transform_indices = @transform_2, window_bounds = array<i64: 2, 6, 6>}, {pipeline_mode = #tpu.pipeline_mode<synchronous>, transform_indices = @transform_3, window_bounds = array<i64: 8, 128>}]} {
    %c0 = arith.constant 0 : index
    %c0_0 = arith.constant 0 : index
    %0 = vector.load %arg1[%c0, %c0_0] : memref<16x128xf32, #tpu.memory_space<vmem>>, vector<16x128xf32>
    %1 = vector.extract_strided_slice %0 {offsets = [12, 0], sizes = [2, 128], strides = [1, 1]} : vector<16x128xf32> to vector<2x128xf32>
    %c0_1 = arith.constant 0 : index
    %c0_2 = arith.constant 0 : index
    %2 = vector.load %arg2[%c0_1, %c0_2] : memref<2x6xf32, #tpu.memory_space<vmem>>, vector<2x6xf32>
    %3 = tpu.iota {dimensions = array<i32: 1>} : vector<1x6xi32>
    %c1_i32 = arith.constant 1 : i32
    %4 = vector.broadcast %c1_i32 : i32 to vector<1x6xi32>
    %5 = arith.cmpi sge, %3, %4 : vector<1x6xi32>
    %6 = vector.extract_strided_slice %0 {offsets = [0, 0], sizes = [6, 128], strides = [1, 1]} : vector<16x128xf32> to vector<6x128xf32>
    %cst = arith.constant dense<0.000000e+00> : vector<128xf32>
    %7 = vector.multi_reduction <add>, %6, %cst [0] : vector<6x128xf32> to vector<128xf32>
    %8 = vector.shape_cast %7 : vector<128xf32> to vector<1x128xf32>
    %cst_3 = arith.constant 6.000000e+00 : f32
    %9 = vector.broadcast %cst_3 : f32 to vector<1x128xf32>
    %10 = arith.divf %8, %9 : vector<1x128xf32>
    %11 = vector.broadcast %10 : vector<1x128xf32> to vector<6x128xf32>
    %12 = arith.subf %6, %11 : vector<6x128xf32>
    %13 = vector.extract_strided_slice %2 {offsets = [0, 0], sizes = [1, 6], strides = [1, 1]} : vector<2x6xf32> to vector<1x6xf32>
    %cst_4 = arith.constant 9.99999996E-13 : f32
    %14 = vector.broadcast %cst_4 : f32 to vector<1x6xf32>
    %15 = arith.maximumf %13, %14 : vector<1x6xf32>
    %cst_5 = arith.constant 1.000000e+00 : f32
    %16 = vector.broadcast %cst_5 : f32 to vector<1x6xf32>
    %17 = arith.divf %16, %15 : vector<1x6xf32>
    %cst_6 = arith.constant 0.000000e+00 : f32
    %18 = vector.broadcast %cst_6 : f32 to vector<1x6xf32>
    %19 = arith.select %5, %17, %18 : vector<1x6xi1>, vector<1x6xf32>
    %c0_7 = arith.constant 0 : index
    %c0_8 = arith.constant 0 : index
    %c0_9 = arith.constant 0 : index
    %20 = vector.load %arg3[%c0_7, %c0_8, %c0_9] : memref<2x6x6xf32, #tpu.memory_space<vmem>>, vector<1x6x6xf32>
    %21 = vector.shape_cast %20 : vector<1x6x6xf32> to vector<6x6xf32>
    %22 = vector.broadcast %19 : vector<1x6xf32> to vector<6x6xf32>
    %23 = arith.mulf %21, %22 : vector<6x6xf32>
    %cst_10 = arith.constant dense<0.000000e+00> : vector<6x6xf32>
    %24 = tpu.matmul %23, %21, %cst_10 {dimension_numbers = #tpu.dot_dimension_numbers<[1], [1], [0], [0], [0, 0, 1, 0], [], []>} : vector<6x6xf32>, vector<6x6xf32>, vector<6x6xf32> -> vector<6x6xf32>
    %25 = vector.broadcast %10 : vector<1x128xf32> to vector<2x128xf32>
    %26 = arith.subf %1, %25 : vector<2x128xf32>
    %cst_11 = arith.constant dense<0.000000e+00> : vector<2x6xf32>
    %27 = tpu.matmul %26, %12, %cst_11 {dimension_numbers = #tpu.dot_dimension_numbers<[1], [1], [0], [0], [0, 0, 1, 0], [], []>} : vector<2x128xf32>, vector<6x128xf32>, vector<2x6xf32> -> vector<2x6xf32>
    %cst_12 = arith.constant dense<0.000000e+00> : vector<2x6xf32>
    %28 = tpu.matmul %27, %24, %cst_12 {dimension_numbers = #tpu.dot_dimension_numbers<[1], [0], [0], [1], [0, 0, 1, 1], [], []>} : vector<2x6xf32>, vector<6x6xf32>, vector<2x6xf32> -> vector<2x6xf32>
    %cst_13 = arith.constant dense<0.000000e+00> : vector<2x128xf32>
    %29 = tpu.matmul %28, %12, %cst_13 {dimension_numbers = #tpu.dot_dimension_numbers<[1], [0], [0], [1], [0, 0, 1, 1], [], []>} : vector<2x6xf32>, vector<6x128xf32>, vector<2x128xf32> -> vector<2x128xf32>
    %30 = vector.broadcast %10 : vector<1x128xf32> to vector<2x128xf32>
    %31 = arith.addf %29, %30 : vector<2x128xf32>
    %32 = arith.mulf %1, %31 : vector<2x128xf32>
    %cst_14 = arith.constant dense<0.000000e+00> : vector<2xf32>
    %33 = vector.multi_reduction <add>, %32, %cst_14 [1] : vector<2x128xf32> to vector<2xf32>
    %34 = vector.shape_cast %33 : vector<2xf32> to vector<2x1xf32>
    %35 = arith.mulf %1, %1 : vector<2x128xf32>
    %cst_15 = arith.constant dense<0.000000e+00> : vector<2xf32>
    %36 = vector.multi_reduction <add>, %35, %cst_15 [1] : vector<2x128xf32> to vector<2xf32>
    %37 = vector.shape_cast %36 : vector<2xf32> to vector<2x1xf32>
    %cst_16 = arith.constant 9.99999996E-13 : f32
    %38 = vector.broadcast %cst_16 : f32 to vector<2x1xf32>
    %39 = arith.addf %37, %38 : vector<2x1xf32>
    %40 = math.sqrt %39 : vector<2x1xf32>
    %41 = arith.mulf %31, %31 : vector<2x128xf32>
    %cst_17 = arith.constant dense<0.000000e+00> : vector<2xf32>
    %42 = vector.multi_reduction <add>, %41, %cst_17 [1] : vector<2x128xf32> to vector<2xf32>
    %43 = vector.shape_cast %42 : vector<2xf32> to vector<2x1xf32>
    %cst_18 = arith.constant 9.99999996E-13 : f32
    %44 = vector.broadcast %cst_18 : f32 to vector<2x1xf32>
    %45 = arith.addf %43, %44 : vector<2x1xf32>
    %46 = math.sqrt %45 : vector<2x1xf32>
    %47 = arith.mulf %40, %46 : vector<2x1xf32>
    %48 = arith.divf %34, %47 : vector<2x1xf32>
    %49 = vector.extract_strided_slice %0 {offsets = [6, 0], sizes = [6, 128], strides = [1, 1]} : vector<16x128xf32> to vector<6x128xf32>
    %cst_19 = arith.constant dense<0.000000e+00> : vector<128xf32>
    %50 = vector.multi_reduction <add>, %49, %cst_19 [0] : vector<6x128xf32> to vector<128xf32>
    %51 = vector.shape_cast %50 : vector<128xf32> to vector<1x128xf32>
    %cst_20 = arith.constant 6.000000e+00 : f32
    %52 = vector.broadcast %cst_20 : f32 to vector<1x128xf32>
    %53 = arith.divf %51, %52 : vector<1x128xf32>
    %54 = vector.broadcast %53 : vector<1x128xf32> to vector<6x128xf32>
    %55 = arith.subf %49, %54 : vector<6x128xf32>
    %56 = vector.extract_strided_slice %2 {offsets = [1, 0], sizes = [1, 6], strides = [1, 1]} : vector<2x6xf32> to vector<1x6xf32>
    %cst_21 = arith.constant 9.99999996E-13 : f32
    %57 = vector.broadcast %cst_21 : f32 to vector<1x6xf32>
    %58 = arith.maximumf %56, %57 : vector<1x6xf32>
    %cst_22 = arith.constant 1.000000e+00 : f32
    %59 = vector.broadcast %cst_22 : f32 to vector<1x6xf32>
    %60 = arith.divf %59, %58 : vector<1x6xf32>
    %cst_23 = arith.constant 0.000000e+00 : f32
    %61 = vector.broadcast %cst_23 : f32 to vector<1x6xf32>
    %62 = arith.select %5, %60, %61 : vector<1x6xi1>, vector<1x6xf32>
    %c1 = arith.constant 1 : index
    %c0_24 = arith.constant 0 : index
    %c0_25 = arith.constant 0 : index
    %63 = vector.load %arg3[%c1, %c0_24, %c0_25] : memref<2x6x6xf32, #tpu.memory_space<vmem>>, vector<1x6x6xf32>
    %64 = vector.shape_cast %63 : vector<1x6x6xf32> to vector<6x6xf32>
    %65 = vector.broadcast %62 : vector<1x6xf32> to vector<6x6xf32>
    %66 = arith.mulf %64, %65 : vector<6x6xf32>
    %cst_26 = arith.constant dense<0.000000e+00> : vector<6x6xf32>
    %67 = tpu.matmul %66, %64, %cst_26 {dimension_numbers = #tpu.dot_dimension_numbers<[1], [1], [0], [0], [0, 0, 1, 0], [], []>} : vector<6x6xf32>, vector<6x6xf32>, vector<6x6xf32> -> vector<6x6xf32>
    %68 = vector.broadcast %53 : vector<1x128xf32> to vector<2x128xf32>
    %69 = arith.subf %1, %68 : vector<2x128xf32>
    %cst_27 = arith.constant dense<0.000000e+00> : vector<2x6xf32>
    %70 = tpu.matmul %69, %55, %cst_27 {dimension_numbers = #tpu.dot_dimension_numbers<[1], [1], [0], [0], [0, 0, 1, 0], [], []>} : vector<2x128xf32>, vector<6x128xf32>, vector<2x6xf32> -> vector<2x6xf32>
    %cst_28 = arith.constant dense<0.000000e+00> : vector<2x6xf32>
    %71 = tpu.matmul %70, %67, %cst_28 {dimension_numbers = #tpu.dot_dimension_numbers<[1], [0], [0], [1], [0, 0, 1, 1], [], []>} : vector<2x6xf32>, vector<6x6xf32>, vector<2x6xf32> -> vector<2x6xf32>
    %cst_29 = arith.constant dense<0.000000e+00> : vector<2x128xf32>
    %72 = tpu.matmul %71, %55, %cst_29 {dimension_numbers = #tpu.dot_dimension_numbers<[1], [0], [0], [1], [0, 0, 1, 1], [], []>} : vector<2x6xf32>, vector<6x128xf32>, vector<2x128xf32> -> vector<2x128xf32>
    %73 = vector.broadcast %53 : vector<1x128xf32> to vector<2x128xf32>
    %74 = arith.addf %72, %73 : vector<2x128xf32>
    %75 = arith.mulf %1, %74 : vector<2x128xf32>
    %cst_30 = arith.constant dense<0.000000e+00> : vector<2xf32>
    %76 = vector.multi_reduction <add>, %75, %cst_30 [1] : vector<2x128xf32> to vector<2xf32>
    %77 = vector.shape_cast %76 : vector<2xf32> to vector<2x1xf32>
    %78 = arith.mulf %1, %1 : vector<2x128xf32>
    %cst_31 = arith.constant dense<0.000000e+00> : vector<2xf32>
    %79 = vector.multi_reduction <add>, %78, %cst_31 [1] : vector<2x128xf32> to vector<2xf32>
    %80 = vector.shape_cast %79 : vector<2xf32> to vector<2x1xf32>
    %cst_32 = arith.constant 9.99999996E-13 : f32
    %81 = vector.broadcast %cst_32 : f32 to vector<2x1xf32>
    %82 = arith.addf %80, %81 : vector<2x1xf32>
    %83 = math.sqrt %82 : vector<2x1xf32>
    %84 = arith.mulf %74, %74 : vector<2x128xf32>
    %cst_33 = arith.constant dense<0.000000e+00> : vector<2xf32>
    %85 = vector.multi_reduction <add>, %84, %cst_33 [1] : vector<2x128xf32> to vector<2xf32>
    %86 = vector.shape_cast %85 : vector<2xf32> to vector<2x1xf32>
    %cst_34 = arith.constant 9.99999996E-13 : f32
    %87 = vector.broadcast %cst_34 : f32 to vector<2x1xf32>
    %88 = arith.addf %86, %87 : vector<2x1xf32>
    %89 = math.sqrt %88 : vector<2x1xf32>
    %90 = arith.mulf %83, %89 : vector<2x1xf32>
    %91 = arith.divf %77, %90 : vector<2x1xf32>
    %cst_35 = arith.constant dense<0.000000e+00> : vector<6x6xf32>
    %92 = tpu.matmul %12, %55, %cst_35 {dimension_numbers = #tpu.dot_dimension_numbers<[1], [1], [0], [0], [0, 0, 1, 0], [], []>} : vector<6x128xf32>, vector<6x128xf32>, vector<6x6xf32> -> vector<6x6xf32>
    %cst_36 = arith.constant dense<0.000000e+00> : vector<6x6xf32>
    %93 = tpu.matmul %92, %67, %cst_36 {dimension_numbers = #tpu.dot_dimension_numbers<[1], [0], [0], [1], [0, 0, 1, 1], [], []>} : vector<6x6xf32>, vector<6x6xf32>, vector<6x6xf32> -> vector<6x6xf32>
    %cst_37 = arith.constant dense<0.000000e+00> : vector<6x6xf32>
    %94 = tpu.matmul %93, %92, %cst_37 {dimension_numbers = #tpu.dot_dimension_numbers<[1], [1], [0], [0], [0, 0, 1, 0], [], []>} : vector<6x6xf32>, vector<6x6xf32>, vector<6x6xf32> -> vector<6x6xf32>
    %95 = arith.mulf %94, %24 : vector<6x6xf32>
    %96 = vector.shape_cast %95 : vector<6x6xf32> to vector<1x6x6xf32>
    %cst_38 = arith.constant dense<0.000000e+00> : vector<1xf32>
    %97 = vector.multi_reduction <add>, %96, %cst_38 [1, 2] : vector<1x6x6xf32> to vector<1xf32>
    %98 = vector.shape_cast %97 : vector<1xf32> to vector<1x1x1xf32>
    %99 = vector.extract %98[0, 0, 0] : f32 from vector<1x1x1xf32>
    %cst_39 = arith.constant 2.000000e+00 : f32
    %100 = arith.mulf %cst_39, %99 : f32
    %101 = vector.extract_strided_slice %0 {offsets = [0, 0], sizes = [14, 128], strides = [1, 1]} : vector<16x128xf32> to vector<14x128xf32>
    %102 = arith.mulf %101, %101 : vector<14x128xf32>
    %cst_40 = arith.constant dense<0.000000e+00> : vector<14xf32>
    %103 = vector.multi_reduction <add>, %102, %cst_40 [1] : vector<14x128xf32> to vector<14xf32>
    %104 = vector.shape_cast %103 : vector<14xf32> to vector<14x1xf32>
    %cst_41 = arith.constant 9.99999996E-13 : f32
    %105 = vector.broadcast %cst_41 : f32 to vector<14x1xf32>
    %106 = arith.addf %104, %105 : vector<14x1xf32>
    %107 = math.sqrt %106 : vector<14x1xf32>
    %108 = vector.broadcast %107 : vector<14x1xf32> to vector<14x128xf32>
    %109 = arith.divf %101, %108 : vector<14x128xf32>
    %cst_42 = arith.constant dense<0.000000e+00> : vector<14x14xf32>
    %110 = tpu.matmul %109, %109, %cst_42 {dimension_numbers = #tpu.dot_dimension_numbers<[1], [1], [0], [0], [0, 0, 1, 0], [], []>} : vector<14x128xf32>, vector<14x128xf32>, vector<14x14xf32> -> vector<14x14xf32>
    %cst_43 = arith.constant 7.000000e-02 : f32
    %111 = vector.broadcast %cst_43 : f32 to vector<14x14xf32>
    %112 = arith.divf %110, %111 : vector<14x14xf32>
    %113 = tpu.iota {dimensions = array<i32: 0>} : vector<14x14xi32>
    %114 = tpu.iota {dimensions = array<i32: 1>} : vector<14x14xi32>
    %115 = arith.cmpi ne, %113, %114 : vector<14x14xi32>
    %116 = arith.extui %115 : vector<14x14xi1> to vector<14x14xi32>
    %117 = arith.sitofp %116 : vector<14x14xi32> to vector<14x14xf32>
    %c6_i32 = arith.constant 6 : i32
    %118 = vector.broadcast %c6_i32 : i32 to vector<14x14xi32>
    %119 = arith.cmpi sge, %113, %118 : vector<14x14xi32>
    %c12_i32 = arith.constant 12 : i32
    %120 = vector.broadcast %c12_i32 : i32 to vector<14x14xi32>
    %121 = arith.cmpi slt, %113, %120 : vector<14x14xi32>
    %122 = arith.andi %119, %121 : vector<14x14xi1>
    %c13_i32 = arith.constant 13 : i32
    %123 = vector.broadcast %c13_i32 : i32 to vector<14x14xi32>
    %124 = arith.cmpi sge, %113, %123 : vector<14x14xi32>
    %125 = arith.ori %122, %124 : vector<14x14xi1>
    %c6_i32_44 = arith.constant 6 : i32
    %126 = vector.broadcast %c6_i32_44 : i32 to vector<14x14xi32>
    %127 = arith.cmpi sge, %114, %126 : vector<14x14xi32>
    %c12_i32_45 = arith.constant 12 : i32
    %128 = vector.broadcast %c12_i32_45 : i32 to vector<14x14xi32>
    %129 = arith.cmpi slt, %114, %128 : vector<14x14xi32>
    %130 = arith.andi %127, %129 : vector<14x14xi1>
    %c13_i32_46 = arith.constant 13 : i32
    %131 = vector.broadcast %c13_i32_46 : i32 to vector<14x14xi32>
    %132 = arith.cmpi sge, %114, %131 : vector<14x14xi32>
    %133 = arith.ori %130, %132 : vector<14x14xi1>
    %134 = arith.xori %125, %133 : vector<14x14xi1>
    %cst_47 = arith.constant dense<true> : vector<14x14xi1>
    %135 = arith.xori %134, %cst_47 : vector<14x14xi1>
    %136 = arith.andi %135, %115 : vector<14x14xi1>
    %137 = arith.extui %136 : vector<14x14xi1> to vector<14x14xi32>
    %138 = arith.sitofp %137 : vector<14x14xi32> to vector<14x14xf32>
    %cst_48 = arith.constant dense<0xFF800000> : vector<14xf32>
    %139 = vector.multi_reduction <maximumf>, %112, %cst_48 [1] : vector<14x14xf32> to vector<14xf32>
    %140 = vector.shape_cast %139 : vector<14xf32> to vector<14x1xf32>
    %141 = vector.broadcast %140 : vector<14x1xf32> to vector<14x14xf32>
    %142 = arith.subf %112, %141 : vector<14x14xf32>
    %143 = math.exp %142 : vector<14x14xf32>
    %144 = arith.mulf %143, %117 : vector<14x14xf32>
    %cst_49 = arith.constant dense<0.000000e+00> : vector<14xf32>
    %145 = vector.multi_reduction <add>, %144, %cst_49 [1] : vector<14x14xf32> to vector<14xf32>
    %146 = vector.shape_cast %145 : vector<14xf32> to vector<14x1xf32>
    %cst_50 = arith.constant 9.99999996E-13 : f32
    %147 = vector.broadcast %cst_50 : f32 to vector<14x1xf32>
    %148 = arith.addf %146, %147 : vector<14x1xf32>
    %149 = math.log %148 : vector<14x1xf32>
    %150 = vector.broadcast %149 : vector<14x1xf32> to vector<14x14xf32>
    %151 = arith.subf %142, %150 : vector<14x14xf32>
    %152 = arith.mulf %138, %151 : vector<14x14xf32>
    %cst_51 = arith.constant dense<0.000000e+00> : vector<14xf32>
    %153 = vector.multi_reduction <add>, %152, %cst_51 [1] : vector<14x14xf32> to vector<14xf32>
    %154 = vector.shape_cast %153 : vector<14xf32> to vector<14x1xf32>
    %cst_52 = arith.constant dense<0.000000e+00> : vector<14xf32>
    %155 = vector.multi_reduction <add>, %138, %cst_52 [1] : vector<14x14xf32> to vector<14xf32>
    %156 = vector.shape_cast %155 : vector<14xf32> to vector<14x1xf32>
    %cst_53 = arith.constant 9.99999996E-13 : f32
    %157 = vector.broadcast %cst_53 : f32 to vector<14x1xf32>
    %158 = arith.addf %156, %157 : vector<14x1xf32>
    %159 = arith.divf %154, %158 : vector<14x1xf32>
    %160 = vector.shape_cast %159 : vector<14x1xf32> to vector<1x14x1xf32>
    %cst_54 = arith.constant dense<0.000000e+00> : vector<1xf32>
    %161 = vector.multi_reduction <add>, %160, %cst_54 [1, 2] : vector<1x14x1xf32> to vector<1xf32>
    %162 = vector.shape_cast %161 : vector<1xf32> to vector<1x1x1xf32>
    %163 = vector.extract %162[0, 0, 0] : f32 from vector<1x1x1xf32>
    %cst_55 = arith.constant 1.400000e+01 : f32
    %164 = arith.divf %163, %cst_55 : f32
    %cst_56 = arith.constant -1.000000e+00 : f32
    %165 = arith.mulf %cst_56, %164 : f32
    %cst_57 = arith.constant 0.000000e+00 : f32
    %166 = vector.broadcast %cst_57 : f32 to vector<8x128xf32>
    %c0_58 = arith.constant 0 : index
    %c0_59 = arith.constant 0 : index
    %167 = vector.load %arg4[%c0_58, %c0_59] : memref<8x128xf32, #tpu.memory_space<vmem>>, vector<8x128xf32>
    tpu.vector_store %arg4[%c0_58, %c0_59], %166 {strides = array<i32>} : memref<8x128xf32, #tpu.memory_space<vmem>>, vector<8x128xf32>,
    %168 = vector.extract_strided_slice %48 {offsets = [0, 0], sizes = [1, 1], strides = [1, 1]} : vector<2x1xf32> to vector<1x1xf32>
    %169 = vector.shape_cast %168 : vector<1x1xf32> to vector<1x1xf32>
    %170 = vector.broadcast %169 : vector<1x1xf32> to vector<1x128xf32>
    %c0_60 = arith.constant 0 : index
    %c0_61 = arith.constant 0 : index
    %171 = vector.load %arg4[%c0_60, %c0_61] : memref<8x128xf32, #tpu.memory_space<vmem>>, vector<1x128xf32>
    tpu.vector_store %arg4[%c0_60, %c0_61], %170 {strides = array<i32>} : memref<8x128xf32, #tpu.memory_space<vmem>>, vector<1x128xf32>,
    %172 = vector.extract_strided_slice %91 {offsets = [0, 0], sizes = [1, 1], strides = [1, 1]} : vector<2x1xf32> to vector<1x1xf32>
    %173 = vector.shape_cast %172 : vector<1x1xf32> to vector<1x1xf32>
    %174 = vector.broadcast %173 : vector<1x1xf32> to vector<1x128xf32>
    %c1_62 = arith.constant 1 : index
    %c0_63 = arith.constant 0 : index
    %175 = vector.load %arg4[%c1_62, %c0_63] : memref<8x128xf32, #tpu.memory_space<vmem>>, vector<1x128xf32>
    tpu.vector_store %arg4[%c1_62, %c0_63], %174 {strides = array<i32>} : memref<8x128xf32, #tpu.memory_space<vmem>>, vector<1x128xf32>,
    %176 = vector.extract_strided_slice %48 {offsets = [1, 0], sizes = [1, 1], strides = [1, 1]} : vector<2x1xf32> to vector<1x1xf32>
    %177 = vector.shape_cast %176 : vector<1x1xf32> to vector<1x1xf32>
    %178 = vector.broadcast %177 : vector<1x1xf32> to vector<1x128xf32>
    %c2 = arith.constant 2 : index
    %c0_64 = arith.constant 0 : index
    %179 = vector.load %arg4[%c2, %c0_64] : memref<8x128xf32, #tpu.memory_space<vmem>>, vector<1x128xf32>
    tpu.vector_store %arg4[%c2, %c0_64], %178 {strides = array<i32>} : memref<8x128xf32, #tpu.memory_space<vmem>>, vector<1x128xf32>,
    %180 = vector.extract_strided_slice %91 {offsets = [1, 0], sizes = [1, 1], strides = [1, 1]} : vector<2x1xf32> to vector<1x1xf32>
    %181 = vector.shape_cast %180 : vector<1x1xf32> to vector<1x1xf32>
    %182 = vector.broadcast %181 : vector<1x1xf32> to vector<1x128xf32>
    %c3 = arith.constant 3 : index
    %c0_65 = arith.constant 0 : index
    %183 = vector.load %arg4[%c3, %c0_65] : memref<8x128xf32, #tpu.memory_space<vmem>>, vector<1x128xf32>
    tpu.vector_store %arg4[%c3, %c0_65], %182 {strides = array<i32>} : memref<8x128xf32, #tpu.memory_space<vmem>>, vector<1x128xf32>,
    %184 = vector.broadcast %100 : f32 to vector<1x128xf32>
    %c4 = arith.constant 4 : index
    %c0_66 = arith.constant 0 : index
    %185 = vector.load %arg4[%c4, %c0_66] : memref<8x128xf32, #tpu.memory_space<vmem>>, vector<1x128xf32>
    tpu.vector_store %arg4[%c4, %c0_66], %184 {strides = array<i32>} : memref<8x128xf32, #tpu.memory_space<vmem>>, vector<1x128xf32>,
    %186 = vector.broadcast %165 : f32 to vector<1x128xf32>
    %c5 = arith.constant 5 : index
    %c0_67 = arith.constant 0 : index
    %187 = vector.load %arg4[%c5, %c0_67] : memref<8x128xf32, #tpu.memory_space<vmem>>, vector<1x128xf32>
    tpu.vector_store %arg4[%c5, %c0_67], %186 {strides = array<i32>} : memref<8x128xf32, #tpu.memory_space<vmem>>, vector<1x128xf32>,
    return
  }
  func.func @transform_0(%arg0: i32) -> (i32, i32) {
    %c0_i32 = arith.constant 0 : i32
    %c0_i32_0 = arith.constant 0 : i32
    %c0_i32_1 = arith.constant 0 : i32
    return %c0_i32, %c0_i32_0 : i32, i32
  }
  func.func @transform_1(%arg0: i32) -> (i32, i32) {
    %c0_i32 = arith.constant 0 : i32
    %c0_i32_0 = arith.constant 0 : i32
    %c0_i32_1 = arith.constant 0 : i32
    return %c0_i32, %c0_i32_0 : i32, i32
  }
  func.func @transform_2(%arg0: i32) -> (i32, i32, i32) {
    %c0_i32 = arith.constant 0 : i32
    %c0_i32_0 = arith.constant 0 : i32
    %c0_i32_1 = arith.constant 0 : i32
    %c0_i32_2 = arith.constant 0 : i32
    return %c0_i32, %c0_i32_0, %c0_i32_1 : i32, i32, i32
  }
  func.func @transform_3(%arg0: i32) -> (i32, i32) {
    %c0_i32 = arith.constant 0 : i32
    %c0_i32_0 = arith.constant 0 : i32
    %c0_i32_1 = arith.constant 0 : i32
    return %c0_i32, %c0_i32_0 : i32, i32
  }
}

</mosaic_0001>

<llo_original>
// kernel: custom-call.2
$region0: #{custom-call.2}
  %s0 = inlined_call_operand.vmem [shape: f32[2,3,3], index: 0, kind: input, shape index: {}]
  %s1 = inlined_call_operand.vmem [shape: f32[2,3,3], index: 1, kind: input, shape index: {}]
  %s2 = inlined_call_operand.vmem [shape: f32[2,3,3], index: 2, kind: input, shape index: {}]
  %s3 = inlined_call_operand.vmem [shape: f32[2,3,3], index: 3, kind: input, shape index: {}]
  %s4 = inlined_call_operand.vmem [shape: f32[2,3], index: 4, kind: output, shape index: {0}]
  %s5 = inlined_call_operand.vmem [shape: f32[2,3], index: 5, kind: output, shape index: {1}]
  %s6 = inlined_call_operand.vmem [shape: f32[2,3,3], index: 6, kind: output, shape index: {2}]
  %s7 = inlined_call_operand.vmem [shape: f32[2,3,3], index: 7, kind: output, shape index: {3}]
  %s8 = inlined_call_operand.vmem [shape: f32[2,3,3], index: 8, kind: output, shape index: {4}]
  %s9 = inlined_call_operand.vmem [shape: f32[2,3,3], index: 9, kind: output, shape index: {5}]
  %10 = xla_tuple %s4, %s5, %s6, %s7, %s8, %s9
  $region1: #{custom-call.2} parent=0
    #allocation0 [shape = 'u8[4096]{0}', space=vmem, size = 0x1000, scoped, tag = 'operand span for operand 0']
    #allocation1 [shape = 'u8[4096]{0}', space=vmem, size = 0x1000, scoped, tag = 'packed  for operand 0']
    #allocation2 [shape = 'u8[4096]{0}', space=vmem, size = 0x1000, scoped, tag = 'operand span for operand 1']
    #allocation3 [shape = 'u8[4096]{0}', space=vmem, size = 0x1000, scoped, tag = 'packed  for operand 1']
    #allocation4 [shape = 'u8[4096]{0}', space=vmem, size = 0x1000, scoped, tag = 'operand span for operand 2']
    #allocation5 [shape = 'u8[4096]{0}', space=vmem, size = 0x1000, scoped, tag = 'packed  for operand 2']
    #allocation6 [shape = 'u8[4096]{0}', space=vmem, size = 0x1000, scoped, tag = 'operand span for operand 3']
    #allocation7 [shape = 'u8[4096]{0}', space=vmem, size = 0x1000, scoped, tag = 'packed  for operand 3']
    #allocation8 [shape = 'u8[4096]{0}', space=vmem, size = 0x1000, scoped, tag = 'operand span for operand 4']
    #allocation9 [shape = 'u8[2048]{0}', space=vmem, size = 0x800, scoped, tag = 'packed  for operand 4']
    #allocation10 [shape = 'u8[4096]{0}', space=vmem, size = 0x1000, scoped, tag = 'operand span for operand 5']
    #allocation11 [shape = 'u8[2048]{0}', space=vmem, size = 0x800, scoped, tag = 'packed  for operand 5']
    #allocation12 [shape = 'u8[4096]{0}', space=vmem, size = 0x1000, scoped, tag = 'operand span for operand 6']
    #allocation13 [shape = 'u8[4096]{0}', space=vmem, size = 0x1000, scoped, tag = 'packed  for operand 6']
    #allocation14 [shape = 'u8[4096]{0}', space=vmem, size = 0x1000, scoped, tag = 'operand span for operand 7']
    #allocation15 [shape = 'u8[4096]{0}', space=vmem, size = 0x1000, scoped, tag = 'packed  for operand 7']
    #allocation16 [shape = 'u8[4096]{0}', space=vmem, size = 0x1000, scoped, tag = 'operand span for operand 8']
    #allocation17 [shape = 'u8[4096]{0}', space=vmem, size = 0x1000, scoped, tag = 'packed  for operand 8']
    #allocation18 [shape = 'u8[4096]{0}', space=vmem, size = 0x1000, scoped, tag = 'operand span for operand 9']
    #allocation19 [shape = 'u8[4096]{0}', space=vmem, size = 0x1000, scoped, tag = 'packed  for operand 9']
    loop: start=0, step=1, limit=4
    $region2: #{custom-call.2} parent=1 // loop_pre_header
      _
    $region3: #{custom-call.2} parent=1 // loop_header
      %s12 = sphi 0, %s16
      %p13 = scmp.ge.s32.totalorder %s12, 4
      %s24 = sphi 0, %s26
      %s27 = sphi 0, %s24
      %s28 = sphi 0, %s27
      %s44 = sphi 0, %s28
      %s52 = sphi 0, %s54
      %s55 = sphi 0, %s52
      %s56 = sphi 0, %s55
      %s72 = sphi 0, %s56
    $region4: #{custom-call.2} parent=1 // loop_header_branch
      %15 = sbr.rel (%p13) target = $region8
    $region5: #{custom-call.2} parent=1 // loop_body
      %s17 = ssub.s32 %s12, 1
      %s18 = ssub.s32 %s12, 2
      %s19 = sadd.s32 %s12, 1
      %s20 = sshrl.u32 %s12, 3
      %s21 = sshrl.u32 %s19, 3
      %s22 = ssub.s32 %s20, %s21
      %p23 = scmp.eq.s32.totalorder %s22, 0
      %s25 = sadd.s32 %s24, 1
      %s26 = scalar_select %p23, %s24, %s25
      %p29 = pneg %p23
      %p30 = scmp.eq.s32.totalorder %s12, 1
      %p31 = por %p29, %p30
      %p32 = scmp.ne.s32.totalorder %s24, %s27
      %p33 = scmp.eq.s32.totalorder %s12, 0
      %p34 = por %p32, %p33
      %p35 = scmp.ne.s32.totalorder %s24, %s27
      %p36 = scmp.eq.s32.totalorder %s17, 1
      %p37 = por %p35, %p36
      %p38 = scmp.ne.s32.totalorder %s27, %s28
      %p39 = scmp.eq.s32.totalorder %s17, 0
      %p40 = por %p38, %p39
      %p41 = scmp.ne.s32.totalorder %s27, %s28
      %p42 = scmp.eq.s32.totalorder %s18, 1
      %p43 = por %p41, %p42
      %p45 = scmp.ne.s32.totalorder %s28, %s44
      %p46 = scmp.eq.s32.totalorder %s18, 0
      %p47 = por %p45, %p46
      %s48 = sshrl.u32 %s12, 3
      %s49 = sshrl.u32 %s19, 3
      %s50 = ssub.s32 %s48, %s49
      %p51 = scmp.eq.s32.totalorder %s50, 0
      %s53 = sadd.s32 %s52, 1
      %s54 = scalar_select %p51, %s52, %s53
      %p57 = pneg %p51
      %p58 = scmp.eq.s32.totalorder %s12, 1
      %p59 = por %p57, %p58
      %p60 = scmp.ne.s32.totalorder %s52, %s55
      %p61 = scmp.eq.s32.totalorder %s12, 0
      %p62 = por %p60, %p61
      %p63 = scmp.ne.s32.totalorder %s52, %s55
      %p64 = scmp.eq.s32.totalorder %s17, 1
      %p65 = por %p63, %p64
      %p66 = scmp.ne.s32.totalorder %s55, %s56
      %p67 = scmp.eq.s32.totalorder %s17, 0
      %p68 = por %p66, %p67
      %p69 = scmp.ne.s32.totalorder %s55, %s56
      %p70 = scmp.eq.s32.totalorder %s18, 1
      %p71 = por %p69, %p70
      %p73 = scmp.ne.s32.totalorder %s56, %s72
      %p74 = scmp.eq.s32.totalorder %s18, 0
      %p75 = por %p73, %p74
      %p76 = scmp.le.s32.totalorder 1, %s12
      %p77 = scmp.lt.s32.totalorder %s12, 3
      %p78 = pnand %p76, %p77
      %p79 = pneg %p78
      // Predicated region
      $region9: #{custom-call.2} parent=5 // pred_check
        _
      $region10: #{custom-call.2} parent=5 // pred_check_branch
        %81 = sbr.rel (%p78) target = $region12
      $region11: #{custom-call.2} parent=5 // pred_region
        %s82 = ssub.s32 %s12, 1
      $region12: #{custom-call.2} parent=5 // pred_fallthru
        _
      %p83 = scmp.lt.s32.totalorder %s12, 2
      // Predicated region
      $region13: #{custom-call.2} parent=5 // pred_check
        %p84 = pneg %p83
      $region14: #{custom-call.2} parent=5 // pred_check_branch
        %86 = sbr.rel (%p84) target = $region16
      $region15: #{custom-call.2} parent=5 // pred_region
        %s87 = sand.u32 %s12, 1
        %s88 = sand.u32 %s12, 1
        %s89 = smul.addr %s88, 4
        %s90 = scalar_lea.vmem [#allocation1], %s89
        %s91 = smul.addr %s12, 4
        %s92 = scalar_lea.vmem %s0, %s91
        // Predicated region
        $region17: #{custom-call.2} parent=15 // pred_check
          _
        $region18: #{custom-call.2} parent=15 // pred_check_branch
          %94 = sbr.rel (0) target = $region20
        $region19: #{custom-call.2} parent=15 // pred_region
          // Predicated region
          $region21: #{custom-call.2} parent=19 // pred_check
            _
          $region22: #{custom-call.2} parent=19 // pred_check_branch
            %96 = sbr.rel target = $region24
          $region23: #{custom-call.2} parent=19 // pred_region
            // Predicated region
            $region36: #{custom-call.2} parent=23 // pred_check
              _
            $region37: #{custom-call.2} parent=23 // pred_check_branch
              %111 = sbr.rel (0) target = $region39
            $region38: #{custom-call.2} parent=23 // pred_region
              loop: start=0, step=1, limit=1
              $region40: #{custom-call.2} parent=38 // loop_pre_header
                _
              $region41: #{custom-call.2} parent=38 // loop_header
                %s114 = sphi 0, %s118
                %p115 = scmp.ge.s32.totalorder %s114, 1
                %s119 = sphi %s92, %s92
                %s120 = sphi %s90, %s90
              $region42: #{custom-call.2} parent=38 // loop_header_branch
                %117 = sbr.rel (%p115) target = $region46
              $region43: #{custom-call.2} parent=38 // loop_body
                %v121 = vld [vmem:[%s119] sm:$0xf]
                %122 = vst [vmem:[%s120] sm:$0xf] %v121
              $region44: #{custom-call.2} parent=38 // loop_footer
                %s118 = sadd.s32 1, %s114
              $region45: #{custom-call.2} parent=38 // loop_footer_branch
                %113 = sbr.rel target = $region41
              $region46: #{custom-call.2} parent=38 // loop_exit
                _
            $region39: #{custom-call.2} parent=23 // pred_fallthru
              _
          $region24: #{custom-call.2} parent=19 // pred_fallthru
            _
          // Predicated region
          $region25: #{custom-call.2} parent=19 // pred_check
            _
          $region26: #{custom-call.2} parent=19 // pred_check_branch
            %98 = sbr.rel (0) target = $region28
          $region27: #{custom-call.2} parent=19 // pred_region
            loop: start=0, step=1, limit=1
            $region29: #{custom-call.2} parent=27 // loop_pre_header
              _
            $region30: #{custom-call.2} parent=27 // loop_header
              %s101 = sphi 0, %s105
              %p102 = scmp.ge.s32.totalorder %s101, 1
              %s106 = sphi %s92, %s92
              %s107 = sphi %s90, %s90
            $region31: #{custom-call.2} parent=27 // loop_header_branch
              %104 = sbr.rel (%p102) target = $region35
            $region32: #{custom-call.2} parent=27 // loop_body
              %v108 = vld [vmem:[%s106] sm:$0xf]
              %109 = vst [vmem:[%s107] sm:$0xf] %v108
            $region33: #{custom-call.2} parent=27 // loop_footer
              %s105 = sadd.s32 1, %s101
            $region34: #{custom-call.2} parent=27 // loop_footer_branch
              %100 = sbr.rel target = $region30
            $region35: #{custom-call.2} parent=27 // loop_exit
              _
          $region28: #{custom-call.2} parent=19 // pred_fallthru
            _
        $region20: #{custom-call.2} parent=15 // pred_fallthru
          _
        %123 = vnop
        %s124 = sand.u32 %s12, 1
        %s125 = sand.u32 %s12, 1
        %s126 = smul.addr %s125, 4
        %s127 = scalar_lea.vmem [#allocation3], %s126
        %s128 = smul.addr %s12, 4
        %s129 = scalar_lea.vmem %s1, %s128
        // Predicated region
        $region47: #{custom-call.2} parent=15 // pred_check
          _
        $region48: #{custom-call.2} parent=15 // pred_check_branch
          %131 = sbr.rel (0) target = $region50
        $region49: #{custom-call.2} parent=15 // pred_region
          // Predicated region
          $region51: #{custom-call.2} parent=49 // pred_check
            _
          $region52: #{custom-call.2} parent=49 // pred_check_branch
            %133 = sbr.rel target = $region54
          $region53: #{custom-call.2} parent=49 // pred_region
            // Predicated region
            $region66: #{custom-call.2} parent=53 // pred_check
              _
            $region67: #{custom-call.2} parent=53 // pred_check_branch
              %148 = sbr.rel (0) target = $region69
            $region68: #{custom-call.2} parent=53 // pred_region
              loop: start=0, step=1, limit=1
              $region70: #{custom-call.2} parent=68 // loop_pre_header
                _
              $region71: #{custom-call.2} parent=68 // loop_header
                %s151 = sphi 0, %s155
                %p152 = scmp.ge.s32.totalorder %s151, 1
                %s156 = sphi %s129, %s129
                %s157 = sphi %s127, %s127
              $region72: #{custom-call.2} parent=68 // loop_header_branch
                %154 = sbr.rel (%p152) target = $region76
              $region73: #{custom-call.2} parent=68 // loop_body
                %v158 = vld [vmem:[%s156] sm:$0xf]
                %159 = vst [vmem:[%s157] sm:$0xf] %v158
              $region74: #{custom-call.2} parent=68 // loop_footer
                %s155 = sadd.s32 1, %s151
              $region75: #{custom-call.2} parent=68 // loop_footer_branch
                %150 = sbr.rel target = $region71
              $region76: #{custom-call.2} parent=68 // loop_exit
                _
            $region69: #{custom-call.2} parent=53 // pred_fallthru
              _
          $region54: #{custom-call.2} parent=49 // pred_fallthru
            _
          // Predicated region
          $region55: #{custom-call.2} parent=49 // pred_check
            _
          $region56: #{custom-call.2} parent=49 // pred_check_branch
            %135 = sbr.rel (0) target = $region58
          $region57: #{custom-call.2} parent=49 // pred_region
            loop: start=0, step=1, limit=1
            $region59: #{custom-call.2} parent=57 // loop_pre_header
              _
            $region60: #{custom-call.2} parent=57 // loop_header
              %s138 = sphi 0, %s142
              %p139 = scmp.ge.s32.totalorder %s138, 1
              %s143 = sphi %s129, %s129
              %s144 = sphi %s127, %s127
            $region61: #{custom-call.2} parent=57 // loop_header_branch
              %141 = sbr.rel (%p139) target = $region65
            $region62: #{custom-call.2} parent=57 // loop_body
              %v145 = vld [vmem:[%s143] sm:$0xf]
              %146 = vst [vmem:[%s144] sm:$0xf] %v145
            $region63: #{custom-call.2} parent=57 // loop_footer
              %s142 = sadd.s32 1, %s138
            $region64: #{custom-call.2} parent=57 // loop_footer_branch
              %137 = sbr.rel target = $region60
            $region65: #{custom-call.2} parent=57 // loop_exit
              _
          $region58: #{custom-call.2} parent=49 // pred_fallthru
            _
        $region50: #{custom-call.2} parent=15 // pred_fallthru
          _
        %160 = vnop
        %s161 = sand.u32 %s12, 1
        %s162 = sand.u32 %s12, 1
        %s163 = smul.addr %s162, 4
        %s164 = scalar_lea.vmem [#allocation5], %s163
        %s165 = smul.addr %s12, 4
        %s166 = scalar_lea.vmem %s2, %s165
        // Predicated region
        $region77: #{custom-call.2} parent=15 // pred_check
          _
        $region78: #{custom-call.2} parent=15 // pred_check_branch
          %168 = sbr.rel (0) target = $region80
        $region79: #{custom-call.2} parent=15 // pred_region
          // Predicated region
          $region81: #{custom-call.2} parent=79 // pred_check
            _
          $region82: #{custom-call.2} parent=79 // pred_check_branch
            %170 = sbr.rel target = $region84
          $region83: #{custom-call.2} parent=79 // pred_region
            // Predicated region
            $region96: #{custom-call.2} parent=83 // pred_check
              _
            $region97: #{custom-call.2} parent=83 // pred_check_branch
              %185 = sbr.rel (0) target = $region99
            $region98: #{custom-call.2} parent=83 // pred_region
              loop: start=0, step=1, limit=1
              $region100: #{custom-call.2} parent=98 // loop_pre_header
                _
              $region101: #{custom-call.2} parent=98 // loop_header
                %s188 = sphi 0, %s192
                %p189 = scmp.ge.s32.totalorder %s188, 1
                %s193 = sphi %s166, %s166
                %s194 = sphi %s164, %s164
              $region102: #{custom-call.2} parent=98 // loop_header_branch
                %191 = sbr.rel (%p189) target = $region106
              $region103: #{custom-call.2} parent=98 // loop_body
                %v195 = vld [vmem:[%s193] sm:$0xf]
                %196 = vst [vmem:[%s194] sm:$0xf] %v195
              $region104: #{custom-call.2} parent=98 // loop_footer
                %s192 = sadd.s32 1, %s188
              $region105: #{custom-call.2} parent=98 // loop_footer_branch
                %187 = sbr.rel target = $region101
              $region106: #{custom-call.2} parent=98 // loop_exit
                _
            $region99: #{custom-call.2} parent=83 // pred_fallthru
              _
          $region84: #{custom-call.2} parent=79 // pred_fallthru
            _
          // Predicated region
          $region85: #{custom-call.2} parent=79 // pred_check
            _
          $region86: #{custom-call.2} parent=79 // pred_check_branch
            %172 = sbr.rel (0) target = $region88
          $region87: #{custom-call.2} parent=79 // pred_region
            loop: start=0, step=1, limit=1
            $region89: #{custom-call.2} parent=87 // loop_pre_header
              _
            $region90: #{custom-call.2} parent=87 // loop_header
              %s175 = sphi 0, %s179
              %p176 = scmp.ge.s32.totalorder %s175, 1
              %s180 = sphi %s166, %s166
              %s181 = sphi %s164, %s164
            $region91: #{custom-call.2} parent=87 // loop_header_branch
              %178 = sbr.rel (%p176) target = $region95
            $region92: #{custom-call.2} parent=87 // loop_body
              %v182 = vld [vmem:[%s180] sm:$0xf]
              %183 = vst [vmem:[%s181] sm:$0xf] %v182
            $region93: #{custom-call.2} parent=87 // loop_footer
              %s179 = sadd.s32 1, %s175
            $region94: #{custom-call.2} parent=87 // loop_footer_branch
              %174 = sbr.rel target = $region90
            $region95: #{custom-call.2} parent=87 // loop_exit
              _
          $region88: #{custom-call.2} parent=79 // pred_fallthru
            _
        $region80: #{custom-call.2} parent=15 // pred_fallthru
          _
        %197 = vnop
        %s198 = sand.u32 %s12, 1
        %s199 = sand.u32 %s12, 1
        %s200 = smul.addr %s199, 4
        %s201 = scalar_lea.vmem [#allocation7], %s200
        %s202 = smul.addr %s12, 4
        %s203 = scalar_lea.vmem %s3, %s202
        // Predicated region
        $region107: #{custom-call.2} parent=15 // pred_check
          _
        $region108: #{custom-call.2} parent=15 // pred_check_branch
          %205 = sbr.rel (0) target = $region110
        $region109: #{custom-call.2} parent=15 // pred_region
          // Predicated region
          $region111: #{custom-call.2} parent=109 // pred_check
            _
          $region112: #{custom-call.2} parent=109 // pred_check_branch
            %207 = sbr.rel target = $region114
          $region113: #{custom-call.2} parent=109 // pred_region
            // Predicated region
            $region126: #{custom-call.2} parent=113 // pred_check
              _
            $region127: #{custom-call.2} parent=113 // pred_check_branch
              %222 = sbr.rel (0) target = $region129
            $region128: #{custom-call.2} parent=113 // pred_region
              loop: start=0, step=1, limit=1
              $region130: #{custom-call.2} parent=128 // loop_pre_header
                _
              $region131: #{custom-call.2} parent=128 // loop_header
                %s225 = sphi 0, %s229
                %p226 = scmp.ge.s32.totalorder %s225, 1
                %s230 = sphi %s203, %s203
                %s231 = sphi %s201, %s201
              $region132: #{custom-call.2} parent=128 // loop_header_branch
                %228 = sbr.rel (%p226) target = $region136
              $region133: #{custom-call.2} parent=128 // loop_body
                %v232 = vld [vmem:[%s230] sm:$0xf]
                %233 = vst [vmem:[%s231] sm:$0xf] %v232
              $region134: #{custom-call.2} parent=128 // loop_footer
                %s229 = sadd.s32 1, %s225
              $region135: #{custom-call.2} parent=128 // loop_footer_branch
                %224 = sbr.rel target = $region131
              $region136: #{custom-call.2} parent=128 // loop_exit
                _
            $region129: #{custom-call.2} parent=113 // pred_fallthru
              _
          $region114: #{custom-call.2} parent=109 // pred_fallthru
            _
          // Predicated region
          $region115: #{custom-call.2} parent=109 // pred_check
            _
          $region116: #{custom-call.2} parent=109 // pred_check_branch
            %209 = sbr.rel (0) target = $region118
          $region117: #{custom-call.2} parent=109 // pred_region
            loop: start=0, step=1, limit=1
            $region119: #{custom-call.2} parent=117 // loop_pre_header
              _
            $region120: #{custom-call.2} parent=117 // loop_header
              %s212 = sphi 0, %s216
              %p213 = scmp.ge.s32.totalorder %s212, 1
              %s217 = sphi %s203, %s203
              %s218 = sphi %s201, %s201
            $region121: #{custom-call.2} parent=117 // loop_header_branch
              %215 = sbr.rel (%p213) target = $region125
            $region122: #{custom-call.2} parent=117 // loop_body
              %v219 = vld [vmem:[%s217] sm:$0xf]
              %220 = vst [vmem:[%s218] sm:$0xf] %v219
            $region123: #{custom-call.2} parent=117 // loop_footer
              %s216 = sadd.s32 1, %s212
            $region124: #{custom-call.2} parent=117 // loop_footer_branch
              %211 = sbr.rel target = $region120
            $region125: #{custom-call.2} parent=117 // loop_exit
              _
          $region118: #{custom-call.2} parent=109 // pred_fallthru
            _
        $region110: #{custom-call.2} parent=15 // pred_fallthru
          _
        %234 = vnop
      $region16: #{custom-call.2} parent=5 // pred_fallthru
        _
      %p235 = scmp.le.s32.totalorder 1, %s12
      %p236 = scmp.lt.s32.totalorder %s12, 3
      %p237 = pnand %p235, %p236
      %p238 = pneg %p237
      // Predicated region
      $region137: #{custom-call.2} parent=5 // pred_check
        _
      $region138: #{custom-call.2} parent=5 // pred_check_branch
        %240 = sbr.rel (%p237) target = $region140
      $region139: #{custom-call.2} parent=5 // pred_region
        #allocation20 [shape = 'f32[3,3]{1,0}', space=vmem, size = 0x1000, scoped, tag = 'a top-left matrix']
        #allocation21 [shape = 'f32[3,3]{1,0}', space=vmem, size = 0x1000, scoped, tag = 'a top-right matrix']
        #allocation22 [shape = 'f32[3,3]{1,0}', space=vmem, size = 0x1000, scoped, tag = 'a bottom-left matrix']
        #allocation23 [shape = 'f32[3,3]{1,0}', space=vmem, size = 0x1000, scoped, tag = 'a bottom-right matrix']
        %s241 = ssub.s32 %s12, 1
        %s242 = sand.u32 %s17, 1
        %s243 = sand.u32 %s17, 1
        %s244 = smul.addr %s243, 4
        %s245 = scalar_lea.vmem [#allocation1], %s244
        %s246 = sand.u32 %s17, 1
        %s247 = sand.u32 %s17, 1
        %s248 = smul.addr %s247, 4
        %s249 = scalar_lea.vmem [#allocation3], %s248
        %s250 = sand.u32 %s17, 1
        %s251 = sand.u32 %s17, 1
        %s252 = smul.addr %s251, 4
        %s253 = scalar_lea.vmem [#allocation5], %s252
        %s254 = sand.u32 %s17, 1
        %s255 = sand.u32 %s17, 1
        %s256 = smul.addr %s255, 4
        %s257 = scalar_lea.vmem [#allocation7], %s256
        %s258 = sand.u32 %s17, 1
        %s259 = sand.u32 %s17, 1
        %s260 = smul.addr %s259, 4
        %s261 = scalar_lea.vmem [#allocation1], %s260
        %s262 = sand.u32 %s17, 1
        %s263 = sand.u32 %s17, 1
        %s264 = smul.addr %s263, 4
        %s265 = scalar_lea.vmem [#allocation3], %s264
        %s266 = sand.u32 %s17, 1
        %s267 = sand.u32 %s17, 1
        %s268 = smul.addr %s267, 4
        %s269 = scalar_lea.vmem [#allocation5], %s268
        %s270 = sand.u32 %s17, 1
        %s271 = sand.u32 %s17, 1
        %s272 = smul.addr %s271, 4
        %s273 = scalar_lea.vmem [#allocation7], %s272
        %p274 = pneg %p40
        %p275 = pneg %p37
        %s276 = sand.u32 %s27, 1
        %s277 = sand.u32 %s27, 1
        %s278 = smul.addr %s277, 2
        %s279 = scalar_lea.vmem [#allocation9], %s278
        %p280 = pneg %p68
        %p281 = pneg %p65
        %s282 = sand.u32 %s55, 1
        %s283 = sand.u32 %s55, 1
        %s284 = smul.addr %s283, 2
        %s285 = scalar_lea.vmem [#allocation11], %s284
        %s286 = sand.u32 %s17, 1
        %s287 = sand.u32 %s17, 1
        %s288 = smul.addr %s287, 4
        %s289 = scalar_lea.vmem [#allocation13], %s288
        %s290 = sand.u32 %s17, 1
        %s291 = sand.u32 %s17, 1
        %s292 = smul.addr %s291, 4
        %s293 = scalar_lea.vmem [#allocation15], %s292
        %s294 = sand.u32 %s17, 1
        %s295 = sand.u32 %s17, 1
        %s296 = smul.addr %s295, 4
        %s297 = scalar_lea.vmem [#allocation17], %s296
        %s298 = sand.u32 %s17, 1
        %s299 = sand.u32 %s17, 1
        %s300 = smul.addr %s299, 4
        %s301 = scalar_lea.vmem [#allocation19], %s300
        %s303 = sshllo.u32 0, 4
        %v304 = vld [vmem:[%s261] sm:%s303]
        %305 = vst [vmem:[#allocation0] sm:%s303] %v304
        %s307 = sshllo.u32 0, 4
        %v308 = vld [vmem:[%s265] sm:%s307]
        %309 = vst [vmem:[#allocation2] sm:%s307] %v308
        %s311 = sshllo.u32 0, 4
        %v312 = vld [vmem:[%s269] sm:%s311]
        %313 = vst [vmem:[#allocation4] sm:%s311] %v312
        %s315 = sshllo.u32 0, 4
        %v316 = vld [vmem:[%s273] sm:%s315]
        %317 = vst [vmem:[#allocation6] sm:%s315] %v316
        %s318 = sshrl.u32 %s17, 3
        %s319 = sshrl.u32 %s17, 3
        %s320 = smov [#allocation20]
        %v321 = vld [vmem:[#allocation0] sm:$0xff]
        %322 = vst [vmem:[%s320] sm:$0xff] %v321
        %s323 = smov [#allocation21]
        %v324 = vld [vmem:[#allocation2] sm:$0xff]
        %325 = vst [vmem:[%s323] sm:$0xff] %v324
        %s326 = smov [#allocation22]
        %v327 = vld [vmem:[#allocation4] sm:$0xff]
        %328 = vst [vmem:[%s326] sm:$0xff] %v327
        %s329 = smov [#allocation23]
        %v330 = vld [vmem:[#allocation6] sm:$0xff]
        %331 = vst [vmem:[%s329] sm:$0xff] %v330
        %332 = vst [vmem:[#allocation12] sm:$0xff] 0.0
        %333 = vst [vmem:[#allocation14] sm:$0xff] 0.0
        %334 = vst [vmem:[#allocation16] sm:$0xff] 0.0
        %335 = vst [vmem:[#allocation18] sm:$0xff] 0.0
        %s336 = smov [#allocation12]
        %v337 = vlaneseq
        %v338 = vand.u32 %v337, 127
        %v339 = vmov %v338
        %v340 = vlaneseq
        %v341 = vshrl.u32 %v340, 7
        %v342 = vmov %v341
        %v343 = vld [vmem:[%s336] sm:$0x7]
        %vm346 = vcmp.eq.s32.totalorder %v342, %v339
        %v347 = vsel %vm346, 1.0, %v343
        %348 = vst [vmem:[%s336] sm:$0x7] %v347
        %s349 = smov [#allocation18]
        %v350 = vlaneseq
        %v351 = vand.u32 %v350, 127
        %v352 = vmov %v351
        %v353 = vlaneseq
        %v354 = vshrl.u32 %v353, 7
        %v355 = vmov %v354
        %v356 = vld [vmem:[%s349] sm:$0x7]
        %vm359 = vcmp.eq.s32.totalorder %v355, %v352
        %v360 = vsel %vm359, 1.0, %v356
        %361 = vst [vmem:[%s349] sm:$0x7] %v360
        // While loop
        $region141: #{custom-call.2} parent=139 // loop_pre_header
          _
        $region142: #{custom-call.2} parent=139 // loop_header
          %s363 = sphi 0, %s905
          %v364 = vlaneseq
          %v365 = vand.u32 %v364, 127
          %v366 = vmov %v365
          %v367 = vlaneseq
          %v368 = vshrl.u32 %v367, 7
          %v369 = vmov %v368
          %s370 = smov [#allocation20]
          %v371 = vlaneseq
          %v372 = vand.u32 %v371, 127
          %vm373 = vcmp.ge.s32.totalorder %v372, 0
          %vm374 = vcmp.lt.s32.totalorder %v372, 3
          %vm375 = vmand %vm373, %vm374
          %v376 = vld [vmem:[%s370] sm:$0x7]
          %v377 = vsel %vm375, %v376, 0.0
          %v378 = vmul.f32 %v377, %v377
          %vm381 = vcmp.eq.s32.totalorder %v369, %v366
          %v382 = vsel %vm381, 0.0, %v378
          %v383 = vlaneseq
          %v384 = vand.u32 %v383, 127
          %v385 = vmov %v384
          %v386 = vlaneseq
          %v387 = vshrl.u32 %v386, 7
          %v388 = vmov %v387
          %s389 = smov [#allocation21]
          %v390 = vlaneseq
          %v391 = vand.u32 %v390, 127
          %vm392 = vcmp.ge.s32.totalorder %v391, 0
          %vm393 = vcmp.lt.s32.totalorder %v391, 3
          %vm394 = vmand %vm392, %vm393
          %v395 = vld [vmem:[%s389] sm:$0x7]
          %v396 = vsel %vm394, %v395, 0.0
          %v397 = vmul.f32 %v396, %v396
          %v398 = vadd.f32 %v382, %v397
          %v399 = vadd.f32 %v378, %v397
          %v400 = vlaneseq
          %v401 = vand.u32 %v400, 127
          %v402 = vmov %v401
          %v403 = vlaneseq
          %v404 = vshrl.u32 %v403, 7
          %v405 = vmov %v404
          %s406 = smov [#allocation22]
          %v407 = vlaneseq
          %v408 = vand.u32 %v407, 127
          %vm409 = vcmp.ge.s32.totalorder %v408, 0
          %vm410 = vcmp.lt.s32.totalorder %v408, 3
          %vm411 = vmand %vm409, %vm410
          %v412 = vld [vmem:[%s406] sm:$0x7]
          %v413 = vsel %vm411, %v412, 0.0
          %v414 = vmul.f32 %v413, %v413
          %v415 = vadd.f32 %v398, %v414
          %v416 = vadd.f32 %v399, %v414
          %v417 = vlaneseq
          %v418 = vand.u32 %v417, 127
          %v419 = vmov %v418
          %v420 = vlaneseq
          %v421 = vshrl.u32 %v420, 7
          %v422 = vmov %v421
          %s423 = smov [#allocation23]
          %v424 = vlaneseq
          %v425 = vand.u32 %v424, 127
          %vm426 = vcmp.ge.s32.totalorder %v425, 0
          %vm427 = vcmp.lt.s32.totalorder %v425, 3
          %vm428 = vmand %vm426, %vm427
          %v429 = vld [vmem:[%s423] sm:$0x7]
          %v430 = vsel %vm428, %v429, 0.0
          %v431 = vmul.f32 %v430, %v430
          %vm434 = vcmp.eq.s32.totalorder %v422, %v419
          %v435 = vsel %vm434, 0.0, %v431
          %v436 = vadd.f32 %v415, %v435
          %v437 = vadd.f32 %v416, %v431
          %438 = vadd.xlane.f32.xlu0 %v437
          %v439 = vpop.xlane.xlu0 %438
          %v440 = vrot.slane %v439, 4
          %v441 = vadd.f32 %v439, %v440
          %v442 = vrot.slane %v441, 2
          %v443 = vadd.f32 %v441, %v442
          %v444 = vrot.slane %v443, 1
          %v445 = vadd.f32 %v443, %v444
          %446 = vadd.xlane.f32.xlu0 %v436
          %v447 = vpop.xlane.xlu0 %446
          %v448 = vrot.slane %v447, 4
          %v449 = vadd.f32 %v447, %v448
          %v450 = vrot.slane %v449, 2
          %v451 = vadd.f32 %v449, %v450
          %v452 = vrot.slane %v451, 1
          %v453 = vadd.f32 %v451, %v452
          %s454 = vtos %v453
          %s455 = vtos %v445
          %s456 = smul.f32 1e-10, %s455
          %p457 = scmp.le.f32.partialorder %s454, %s456
          %p458 = scmp.ge.s32.totalorder %s363, 15
          %p459 = por %p457, %p458
        $region143: #{custom-call.2} parent=139 // loop_header_branch
          %907 = sbr.rel (%p459) target = $region147
        $region144: #{custom-call.2} parent=139 // loop_body
          loop: start=0, step=1, limit=5
          $region148: #{custom-call.2} parent=144 // loop_pre_header
            _
          $region149: #{custom-call.2} parent=144 // loop_header
            %s461 = sphi 0, %s465
            %p462 = scmp.ge.s32.totalorder %s461, 5
          $region150: #{custom-call.2} parent=144 // loop_header_branch
            %464 = sbr.rel (%p462) target = $region154
          $region151: #{custom-call.2} parent=144 // loop_body
            #allocation24 [shape = 'f32[1024]{0}', space=vmem, size = 0x1000, scoped, tag = 'a_tl_diag vmem']
            #allocation25 [shape = 'f32[1024]{0}', space=vmem, size = 0x1000, scoped, tag = 'a_tr_diag vmem']
            #allocation26 [shape = 'f32[1024]{0}', space=vmem, size = 0x1000, scoped, tag = 'a_br_diag vmem']
            #allocation27 [shape = 'f32[1024]{0}', space=vmem, size = 0x1000, scoped, tag = 'rt1 vmem']
            #allocation28 [shape = 'f32[1024]{0}', space=vmem, size = 0x1000, scoped, tag = 'rt2 vmem']
            #allocation29 [shape = 'f32[1024]{0}', space=vmem, size = 0x1000, scoped, tag = 'c vmem']
            #allocation30 [shape = 'f32[1024]{0}', space=vmem, size = 0x1000, scoped, tag = 's vmem']
            #allocation31 [shape = 'f32[4096]{0}', space=vmem, size = 0x4000, scoped, tag = 'c broadcast']
            #allocation32 [shape = 'f32[4096]{0}', space=vmem, size = 0x4000, scoped, tag = 's broadcast']
            %s466 = smov [#allocation20]
            %s467 = smov [#allocation24]
            %v468 = vlaneseq
            %v469 = vand.u32 %v468, 127
            %v470 = vmov %v469
            %v471 = vlaneseq
            %v472 = vshrl.u32 %v471, 7
            %v473 = vmov %v472
            %v474 = vld [vmem:[%s466] sm:$0x7]
            %vm477 = vcmp.eq.s32.totalorder %v473, %v470
            %v478 = vsel %vm477, %v474, 0.0
            %v479 = vrot.slane %v478, 4
            %v480 = vadd.f32 %v478, %v479
            %v481 = vrot.slane %v480, 2
            %v482 = vadd.f32 %v480, %v481
            %v483 = vrot.slane %v482, 1
            %v484 = vadd.f32 %v482, %v483
            %485 = vst [vmem:[%s467] sm:$0x1] %v484
            %s486 = smov [#allocation21]
            %s487 = smov [#allocation25]
            %v488 = vlaneseq
            %v489 = vand.u32 %v488, 127
            %v490 = vmov %v489
            %v491 = vlaneseq
            %v492 = vshrl.u32 %v491, 7
            %v493 = vmov %v492
            %v494 = vld [vmem:[%s486] sm:$0x7]
            %vm497 = vcmp.eq.s32.totalorder %v493, %v490
            %v498 = vsel %vm497, %v494, 0.0
            %v499 = vrot.slane %v498, 4
            %v500 = vadd.f32 %v498, %v499
            %v501 = vrot.slane %v500, 2
            %v502 = vadd.f32 %v500, %v501
            %v503 = vrot.slane %v502, 1
            %v504 = vadd.f32 %v502, %v503
            %505 = vst [vmem:[%s487] sm:$0x1] %v504
            %s506 = smov [#allocation23]
            %s507 = smov [#allocation26]
            %v508 = vlaneseq
            %v509 = vand.u32 %v508, 127
            %v510 = vmov %v509
            %v511 = vlaneseq
            %v512 = vshrl.u32 %v511, 7
            %v513 = vmov %v512
            %v514 = vld [vmem:[%s506] sm:$0x7]
            %vm517 = vcmp.eq.s32.totalorder %v513, %v510
            %v518 = vsel %vm517, %v514, 0.0
            %v519 = vrot.slane %v518, 4
            %v520 = vadd.f32 %v518, %v519
            %v521 = vrot.slane %v520, 2
            %v522 = vadd.f32 %v520, %v521
            %v523 = vrot.slane %v522, 1
            %v524 = vadd.f32 %v522, %v523
            %525 = vst [vmem:[%s507] sm:$0x1] %v524
            %s526 = smov [#allocation29]
            %s527 = smov [#allocation30]
            %s528 = smov [#allocation24]
            %v529 = vld [vmem:[%s528] sm:$0xff]
            %s530 = smov [#allocation25]
            %v531 = vld [vmem:[%s530] sm:$0xff]
            %s532 = smov [#allocation26]
            %v533 = vld [vmem:[%s532] sm:$0xff]
            %v534 = vsub.f32 %v533, %v529
            %v535 = vmul.f32 2.0, %v531
            %v536 = vrcp.pop %v535
            %v537 = vmul.f32 %v534, %v536
            %vm538 = vcmp.ge.f32.partialorder %v537, 0.0
            %v539 = vmul.f32 %v537, %v537
            %v540 = vadd.f32 1.0, %v539
            %v541 = vrsqrt.pop %v540
            %v542 = vmul.f32 %v540, %v541
            %vm543 = vcmp.eq.f32.partialorder %v540, inf
            %v544 = vsel %vm543, %v540, %v542
            %vm545 = vcmp.eq.f32.partialorder %v540, 0.0
            %v546 = vand.u32 %v540, 2147483648
            %v547 = vsel %vm545, %v546, %v544
            %v548 = vxor.u32 %v547, 2147483648
            %v549 = vsel %vm538, %v547, %v548
            %v550 = vadd.f32 %v537, %v549
            %v551 = vrcp.pop %v550
            %v552 = vand.u32 2147483647, %v529
            %v553 = vand.u32 2147483647, %v531
            %v554 = vand.u32 2147483647, %v533
            %v555 = vmin.f32 %v552, %v554
            %v556 = vmul.f32 1.1920929e-08, %v555
            %vm557 = vcmp.le.f32.partialorder %v553, %v556
            %v558 = vsel %vm557, 0.0, %v551
            %v559 = vmul.f32 %v558, %v558
            %v560 = vadd.f32 1.0, %v559
            %v561 = vrsqrt.pop %v560
            %v562 = vmul.f32 %v558, %v561
            %v563 = vmul.f32 %v558, %v531
            %v564 = vsub.f32 %v529, %v563
            %v565 = vmul.f32 %v558, %v531
            %v566 = vadd.f32 %v533, %v565
            %s567 = smov [#allocation27]
            %568 = vst [vmem:[%s567] sm:$0xff] %v564
            %s569 = smov [#allocation28]
            %570 = vst [vmem:[%s569] sm:$0xff] %v566
            %s571 = smov %s526
            %572 = vst [vmem:[%s571] sm:$0xff] %v561
            %s573 = smov %s527
            %574 = vst [vmem:[%s573] sm:$0xff] %v562
            %s575 = smov [#allocation29]
            %v576 = vld [vmem:[%s575] ss:$0 sm:$0xff]
            %v577 = vlaneseq
            %v578 = vand.u32 %v577, 127
            %v579 = vmov %v578
            %v580 = vlaneseq
            %v581 = vshrl.u32 %v580, 7
            %v582 = vmov %v581
            %vm584 = vcmp.eq.s32.totalorder %v582, %v579
            %v585 = vsel %vm584, %v576, 0.0
            %586 = vadd.xlane.f32.xlu0 %v585
            %v587 = vpop.xlane.xlu0 %586
            %s588 = smov [#allocation31]
            %589 = vst [vmem:[%s588] sm:$0xff] %v587
            %s590 = smov [#allocation30]
            %v591 = vld [vmem:[%s590] ss:$0 sm:$0xff]
            %v592 = vlaneseq
            %v593 = vand.u32 %v592, 127
            %v594 = vmov %v593
            %v595 = vlaneseq
            %v596 = vshrl.u32 %v595, 7
            %v597 = vmov %v596
            %vm599 = vcmp.eq.s32.totalorder %v597, %v594
            %v600 = vsel %vm599, %v591, 0.0
            %601 = vadd.xlane.f32.xlu0 %v600
            %v602 = vpop.xlane.xlu0 %601
            %s603 = smov [#allocation32]
            %604 = vst [vmem:[%s603] sm:$0xff] %v602
            %s605 = smov [#allocation31]
            %v606 = vld [vmem:[%s605] sm:$0xff]
            %s607 = smov [#allocation32]
            %v608 = vld [vmem:[%s607] sm:$0xff]
            %s609 = smov [#allocation20]
            %s610 = smov [#allocation21]
            %s611 = smov [#allocation22]
            %s612 = smov [#allocation23]
            %v613 = vld [vmem:[%s609] sm:$0x7]
            %v614 = vld [vmem:[%s610] sm:$0x7]
            %v615 = vld [vmem:[%s611] sm:$0x7]
            %v616 = vld [vmem:[%s612] sm:$0x7]
            %v617 = vmul.f32 %v606, %v613
            %v618 = vmul.f32 %v608, %v615
            %v619 = vsub.f32 %v617, %v618
            %v620 = vmul.f32 %v606, %v614
            %v621 = vmul.f32 %v608, %v616
            %v622 = vsub.f32 %v620, %v621
            %v623 = vmul.f32 %v608, %v613
            %v624 = vmul.f32 %v606, %v615
            %v625 = vadd.f32 %v623, %v624
            %v626 = vmul.f32 %v608, %v614
            %v627 = vmul.f32 %v606, %v616
            %v628 = vadd.f32 %v626, %v627
            %629 = vst [vmem:[%s609] sm:$0x7] %v619
            %630 = vst [vmem:[%s610] sm:$0x7] %v622
            %631 = vst [vmem:[%s611] sm:$0x7] %v625
            %632 = vst [vmem:[%s612] sm:$0x7] %v628
            %s633 = smov [#allocation29]
            %v634 = vld [vmem:[%s633] ss:$0 sm:$0xff]
            %s635 = smov [#allocation30]
            %v636 = vld [vmem:[%s635] ss:$0 sm:$0xff]
            %s637 = smov [#allocation20]
            %s638 = smov [#allocation21]
            %s639 = smov [#allocation22]
            %s640 = smov [#allocation23]
            %v641 = vld [vmem:[%s637] sm:$0x7]
            %v642 = vld [vmem:[%s638] sm:$0x7]
            %v643 = vld [vmem:[%s639] sm:$0x7]
            %v644 = vld [vmem:[%s640] sm:$0x7]
            %v645 = vmul.f32 %v634, %v641
            %v646 = vmul.f32 %v636, %v642
            %v647 = vsub.f32 %v645, %v646
            %v648 = vmul.f32 %v636, %v641
            %v649 = vmul.f32 %v634, %v642
            %v650 = vadd.f32 %v648, %v649
            %v651 = vmul.f32 %v634, %v643
            %v652 = vmul.f32 %v636, %v644
            %v653 = vsub.f32 %v651, %v652
            %v654 = vmul.f32 %v636, %v643
            %v655 = vmul.f32 %v634, %v644
            %v656 = vadd.f32 %v654, %v655
            %657 = vst [vmem:[%s637] sm:$0x7] %v647
            %658 = vst [vmem:[%s638] sm:$0x7] %v650
            %659 = vst [vmem:[%s639] sm:$0x7] %v653
            %660 = vst [vmem:[%s640] sm:$0x7] %v656
            %s661 = smov [#allocation20]
            %s662 = smov [#allocation27]
            %v663 = vlaneseq
            %v664 = vand.u32 %v663, 127
            %v665 = vmov %v664
            %v666 = vlaneseq
            %v667 = vshrl.u32 %v666, 7
            %v668 = vmov %v667
            %v669 = vld [vmem:[%s662] ss:$0 sm:$0xff]
            %v670 = vld [vmem:[%s661] sm:$0x7]
            %vm673 = vcmp.eq.s32.totalorder %v668, %v665
            %v674 = vsel %vm673, %v669, %v670
            %675 = vst [vmem:[%s661] sm:$0x7] %v674
            %s676 = smov [#allocation21]
            %v677 = vlaneseq
            %v678 = vand.u32 %v677, 127
            %v679 = vmov %v678
            %v680 = vlaneseq
            %v681 = vshrl.u32 %v680, 7
            %v682 = vmov %v681
            %v683 = vld [vmem:[%s676] sm:$0x7]
            %vm686 = vcmp.eq.s32.totalorder %v682, %v679
            %v687 = vsel %vm686, 0.0, %v683
            %688 = vst [vmem:[%s676] sm:$0x7] %v687
            %s689 = smov [#allocation22]
            %v690 = vlaneseq
            %v691 = vand.u32 %v690, 127
            %v692 = vmov %v691
            %v693 = vlaneseq
            %v694 = vshrl.u32 %v693, 7
            %v695 = vmov %v694
            %v696 = vld [vmem:[%s689] sm:$0x7]
            %vm699 = vcmp.eq.s32.totalorder %v695, %v692
            %v700 = vsel %vm699, 0.0, %v696
            %701 = vst [vmem:[%s689] sm:$0x7] %v700
            %s702 = smov [#allocation23]
            %s703 = smov [#allocation28]
            %v704 = vlaneseq
            %v705 = vand.u32 %v704, 127
            %v706 = vmov %v705
            %v707 = vlaneseq
            %v708 = vshrl.u32 %v707, 7
            %v709 = vmov %v708
            %v710 = vld [vmem:[%s703] ss:$0 sm:$0xff]
            %v711 = vld [vmem:[%s702] sm:$0x7]
            %vm714 = vcmp.eq.s32.totalorder %v709, %v706
            %v715 = vsel %vm714, %v710, %v711
            %716 = vst [vmem:[%s702] sm:$0x7] %v715
            %s717 = smov [#allocation20]
            %s718 = smov [#allocation21]
            %v719 = vld [vmem:[%s718] sm:$0x7]
            %720 = vrot.lane.b32.xlu0 %v719, 1
            %v721 = vpop.permute.xlu0 %720
            %v722 = vld [vmem:[%s717] sm:$0x7]
            %v723 = vld [vmem:[%s717] sm:$0x7]
            %724 = vrot.lane.b32.xlu0 %v723, 1
            %v725 = vpop.permute.xlu0 %724
            %v726 = vlaneseq
            %v727 = vand.u32 %v726, 127
            %vm728 = vcmp.eq.s32.totalorder %v727, 0
            %v729 = vsel %vm728, %v723, %v725
            %v730 = vlaneseq
            %v731 = vand.u32 %v730, 127
            %vm732 = vcmp.eq.s32.totalorder %v731, 1
            %v733 = vsel %vm732, %v721, %v729
            %v734 = vlaneseq
            %v735 = vand.u32 %v734, 127
            %vm736 = vcmp.ge.s32.totalorder %v735, 0
            %vm737 = vcmp.lt.s32.totalorder %v735, 3
            %vm738 = vmand %vm736, %vm737
            %v739 = vsel %vm738, %v733, 0.0
            %v740 = vld [vmem:[%s718] sm:$0x7]
            %741 = vrot.lane.b32.xlu0 %v740, 127
            %v742 = vpop.permute.xlu0 %741
            %v743 = vlaneseq
            %v744 = vand.u32 %v743, 127
            %vm745 = vcmp.eq.s32.totalorder %v744, 2
            %v746 = vsel %vm745, %v722, %v742
            %747 = vst [vmem:[%s717] sm:$0x7] %v739
            %748 = vst [vmem:[%s718] sm:$0x7] %v746
            %s749 = smov [#allocation22]
            %s750 = smov [#allocation23]
            %v751 = vld [vmem:[%s750] sm:$0x7]
            %752 = vrot.lane.b32.xlu0 %v751, 1
            %v753 = vpop.permute.xlu0 %752
            %v754 = vld [vmem:[%s749] sm:$0x7]
            %v755 = vld [vmem:[%s749] sm:$0x7]
            %756 = vrot.lane.b32.xlu0 %v755, 1
            %v757 = vpop.permute.xlu0 %756
            %v758 = vlaneseq
            %v759 = vand.u32 %v758, 127
            %vm760 = vcmp.eq.s32.totalorder %v759, 0
            %v761 = vsel %vm760, %v755, %v757
            %v762 = vlaneseq
            %v763 = vand.u32 %v762, 127
            %vm764 = vcmp.eq.s32.totalorder %v763, 1
            %v765 = vsel %vm764, %v753, %v761
            %v766 = vlaneseq
            %v767 = vand.u32 %v766, 127
            %vm768 = vcmp.ge.s32.totalorder %v767, 0
            %vm769 = vcmp.lt.s32.totalorder %v767, 3
            %vm770 = vmand %vm768, %vm769
            %v771 = vsel %vm770, %v765, 0.0
            %v772 = vld [vmem:[%s750] sm:$0x7]
            %773 = vrot.lane.b32.xlu0 %v772, 127
            %v774 = vpop.permute.xlu0 %773
            %v775 = vlaneseq
            %v776 = vand.u32 %v775, 127
            %vm777 = vcmp.eq.s32.totalorder %v776, 2
            %v778 = vsel %vm777, %v754, %v774
            %779 = vst [vmem:[%s749] sm:$0x7] %v771
            %780 = vst [vmem:[%s750] sm:$0x7] %v778
            %s781 = smov [#allocation20]
            %s782 = smov [#allocation22]
            %v783 = vld [vmem:[%s781] ss:$0 sm:$0xff]
            %s785 = scalar_lea.vmem %s781, 4294967295
            %v786 = vld [vmem:[%s785] sm:$0x6]
            %v787 = vlaneseq
            %v788 = vshrl.u32 %v787, 7
            %vm789 = vcmp.eq.s32.totalorder %v788, 0
            %v790 = vsel %vm789, %v783, %v786
            %s791 = scalar_lea.vmem %s781, 2
            %v792 = vld [vmem:[%s791] ss:$0 sm:$0xff]
            %793 = vst [vmem:[%s781] sm:$0x7] %v790
            %v794 = vld [vmem:[%s782] ss:$0 sm:$0xff]
            %s795 = scalar_lea.vmem %s781, 1
            %796 = vst [vmem:[%s795] sm:$0x1] %v794
            %s797 = scalar_lea.vmem %s782, 1
            %v798 = vld [vmem:[%s797] sm:$0x3]
            %v799 = vlaneseq
            %v800 = vshrl.u32 %v799, 7
            %vm801 = vcmp.eq.s32.totalorder %v800, 2
            %v802 = vsel %vm801, %v792, %v798
            %v803 = vld [vmem:[%s782] ss:$0 sm:$0xff]
            %804 = vst [vmem:[%s782] sm:$0x7] %v802
            %s805 = smov [#allocation21]
            %s806 = smov [#allocation23]
            %v807 = vld [vmem:[%s805] ss:$0 sm:$0xff]
            %s809 = scalar_lea.vmem %s805, 4294967295
            %v810 = vld [vmem:[%s809] sm:$0x6]
            %v811 = vlaneseq
            %v812 = vshrl.u32 %v811, 7
            %vm813 = vcmp.eq.s32.totalorder %v812, 0
            %v814 = vsel %vm813, %v807, %v810
            %s815 = scalar_lea.vmem %s805, 2
            %v816 = vld [vmem:[%s815] ss:$0 sm:$0xff]
            %817 = vst [vmem:[%s805] sm:$0x7] %v814
            %v818 = vld [vmem:[%s806] ss:$0 sm:$0xff]
            %s819 = scalar_lea.vmem %s805, 1
            %820 = vst [vmem:[%s819] sm:$0x1] %v818
            %s821 = scalar_lea.vmem %s806, 1
            %v822 = vld [vmem:[%s821] sm:$0x3]
            %v823 = vlaneseq
            %v824 = vshrl.u32 %v823, 7
            %vm825 = vcmp.eq.s32.totalorder %v824, 2
            %v826 = vsel %vm825, %v816, %v822
            %v827 = vld [vmem:[%s806] ss:$0 sm:$0xff]
            %828 = vst [vmem:[%s806] sm:$0x7] %v826
            %s829 = smov [#allocation31]
            %v830 = vld [vmem:[%s829] sm:$0xff]
            %s831 = smov [#allocation32]
            %v832 = vld [vmem:[%s831] sm:$0xff]
            %s833 = smov [#allocation12]
            %s834 = smov [#allocation14]
            %s835 = smov [#allocation16]
            %s836 = smov [#allocation18]
            %v837 = vld [vmem:[%s833] sm:$0x7]
            %v838 = vld [vmem:[%s834] sm:$0x7]
            %v839 = vld [vmem:[%s835] sm:$0x7]
            %v840 = vld [vmem:[%s836] sm:$0x7]
            %v841 = vmul.f32 %v830, %v837
            %v842 = vmul.f32 %v832, %v839
            %v843 = vsub.f32 %v841, %v842
            %v844 = vmul.f32 %v830, %v838
            %v845 = vmul.f32 %v832, %v840
            %v846 = vsub.f32 %v844, %v845
            %v847 = vmul.f32 %v832, %v837
            %v848 = vmul.f32 %v830, %v839
            %v849 = vadd.f32 %v847, %v848
            %v850 = vmul.f32 %v832, %v838
            %v851 = vmul.f32 %v830, %v840
            %v852 = vadd.f32 %v850, %v851
            %853 = vst [vmem:[%s833] sm:$0x7] %v843
            %854 = vst [vmem:[%s834] sm:$0x7] %v846
            %855 = vst [vmem:[%s835] sm:$0x7] %v849
            %856 = vst [vmem:[%s836] sm:$0x7] %v852
            %s857 = smov [#allocation12]
            %s858 = smov [#allocation16]
            %v859 = vld [vmem:[%s857] ss:$0 sm:$0xff]
            %s861 = scalar_lea.vmem %s857, 4294967295
            %v862 = vld [vmem:[%s861] sm:$0x6]
            %v863 = vlaneseq
            %v864 = vshrl.u32 %v863, 7
            %vm865 = vcmp.eq.s32.totalorder %v864, 0
            %v866 = vsel %vm865, %v859, %v862
            %s867 = scalar_lea.vmem %s857, 2
            %v868 = vld [vmem:[%s867] ss:$0 sm:$0xff]
            %869 = vst [vmem:[%s857] sm:$0x7] %v866
            %v870 = vld [vmem:[%s858] ss:$0 sm:$0xff]
            %s871 = scalar_lea.vmem %s857, 1
            %872 = vst [vmem:[%s871] sm:$0x1] %v870
            %s873 = scalar_lea.vmem %s858, 1
            %v874 = vld [vmem:[%s873] sm:$0x3]
            %v875 = vlaneseq
            %v876 = vshrl.u32 %v875, 7
            %vm877 = vcmp.eq.s32.totalorder %v876, 2
            %v878 = vsel %vm877, %v868, %v874
            %v879 = vld [vmem:[%s858] ss:$0 sm:$0xff]
            %880 = vst [vmem:[%s858] sm:$0x7] %v878
            %s881 = smov [#allocation14]
            %s882 = smov [#allocation18]
            %v883 = vld [vmem:[%s881] ss:$0 sm:$0xff]
            %s885 = scalar_lea.vmem %s881, 4294967295
            %v886 = vld [vmem:[%s885] sm:$0x6]
            %v887 = vlaneseq
            %v888 = vshrl.u32 %v887, 7
            %vm889 = vcmp.eq.s32.totalorder %v888, 0
            %v890 = vsel %vm889, %v883, %v886
            %s891 = scalar_lea.vmem %s881, 2
            %v892 = vld [vmem:[%s891] ss:$0 sm:$0xff]
            %893 = vst [vmem:[%s881] sm:$0x7] %v890
            %v894 = vld [vmem:[%s882] ss:$0 sm:$0xff]
            %s895 = scalar_lea.vmem %s881, 1
            %896 = vst [vmem:[%s895] sm:$0x1] %v894
            %s897 = scalar_lea.vmem %s882, 1
            %v898 = vld [vmem:[%s897] sm:$0x3]
            %v899 = vlaneseq
            %v900 = vshrl.u32 %v899, 7
            %vm901 = vcmp.eq.s32.totalorder %v900, 2
            %v902 = vsel %vm901, %v892, %v898
            %v903 = vld [vmem:[%s882] ss:$0 sm:$0xff]
            %904 = vst [vmem:[%s882] sm:$0x7] %v902
          $region152: #{custom-call.2} parent=144 // loop_footer
            %s465 = sadd.s32 1, %s461
          $region153: #{custom-call.2} parent=144 // loop_footer_branch
            %460 = sbr.rel target = $region149
          $region154: #{custom-call.2} parent=144 // loop_exit
            _
          %s905 = sadd.s32 %s363, 1
        $region145: #{custom-call.2} parent=139 // loop_footer
          _
        $region146: #{custom-call.2} parent=139 // loop_footer_branch
          %362 = sbr.rel target = $region142
        $region147: #{custom-call.2} parent=139 // loop_exit
          _
        %s908 = sand.u32 %s17, 7
        %s909 = scalar_lea.vmem [#allocation8], %s908
        %s910 = sand.u32 %s17, 7
        %s911 = scalar_lea.vmem [#allocation10], %s910
        %s912 = smov [#allocation20]
        %s913 = smov %s909
        %v914 = vlaneseq
        %v915 = vand.u32 %v914, 127
        %v916 = vmov %v915
        %v917 = vlaneseq
        %v918 = vshrl.u32 %v917, 7
        %v919 = vmov %v918
        %v920 = vld [vmem:[%s912] sm:$0x7]
        %vm923 = vcmp.eq.s32.totalorder %v919, %v916
        %v924 = vsel %vm923, %v920, 0.0
        %v925 = vrot.slane %v924, 4
        %v926 = vadd.f32 %v924, %v925
        %v927 = vrot.slane %v926, 2
        %v928 = vadd.f32 %v926, %v927
        %v929 = vrot.slane %v928, 1
        %v930 = vadd.f32 %v928, %v929
        %931 = vst [vmem:[%s913] sm:$0x1] %v930
        %s932 = smov [#allocation23]
        %s933 = smov %s911
        %v934 = vlaneseq
        %v935 = vand.u32 %v934, 127
        %v936 = vmov %v935
        %v937 = vlaneseq
        %v938 = vshrl.u32 %v937, 7
        %v939 = vmov %v938
        %v940 = vld [vmem:[%s932] sm:$0x7]
        %vm943 = vcmp.eq.s32.totalorder %v939, %v936
        %v944 = vsel %vm943, %v940, 0.0
        %v945 = vrot.slane %v944, 4
        %v946 = vadd.f32 %v944, %v945
        %v947 = vrot.slane %v946, 2
        %v948 = vadd.f32 %v946, %v947
        %v949 = vrot.slane %v948, 1
        %v950 = vadd.f32 %v948, %v949
        %951 = vst [vmem:[%s933] sm:$0x1] %v950
        %s953 = sshllo.u32 0, 2
        %v955 = vld [vmem:[#allocation8] sm:%s953]
        %s956 = sshllo.u32 0, 2
        %957 = vst [vmem:[%s279] sm:%s956] %v955
        %s959 = sshllo.u32 0, 2
        %v961 = vld [vmem:[#allocation10] sm:%s959]
        %s962 = sshllo.u32 0, 2
        %963 = vst [vmem:[%s285] sm:%s962] %v961
        %s965 = sshllo.u32 0, 4
        %v967 = vld [vmem:[#allocation12] sm:%s965]
        %s968 = sshllo.u32 0, 4
        %969 = vst [vmem:[%s289] sm:%s968] %v967
        %s971 = sshllo.u32 0, 4
        %v973 = vld [vmem:[#allocation14] sm:%s971]
        %s974 = sshllo.u32 0, 4
        %975 = vst [vmem:[%s293] sm:%s974] %v973
        %s977 = sshllo.u32 0, 4
        %v979 = vld [vmem:[#allocation16] sm:%s977]
        %s980 = sshllo.u32 0, 4
        %981 = vst [vmem:[%s297] sm:%s980] %v979
        %s983 = sshllo.u32 0, 4
        %v985 = vld [vmem:[#allocation18] sm:%s983]
        %s986 = sshllo.u32 0, 4
        %987 = vst [vmem:[%s301] sm:%s986] %v985
        %s988 = sand.u32 %s27, 1
        %s989 = sand.u32 %s27, 1
        %s990 = smul.addr %s989, 2
        %s991 = scalar_lea.vmem [#allocation9], %s990
        %s992 = sand.u32 %s55, 1
        %s993 = sand.u32 %s55, 1
        %s994 = smul.addr %s993, 2
        %s995 = scalar_lea.vmem [#allocation11], %s994
        %s996 = sand.u32 %s17, 1
        %s997 = sand.u32 %s17, 1
        %s998 = smul.addr %s997, 4
        %s999 = scalar_lea.vmem [#allocation13], %s998
        %s1000 = sand.u32 %s17, 1
        %s1001 = sand.u32 %s17, 1
        %s1002 = smul.addr %s1001, 4
        %s1003 = scalar_lea.vmem [#allocation15], %s1002
        %s1004 = sand.u32 %s17, 1
        %s1005 = sand.u32 %s17, 1
        %s1006 = smul.addr %s1005, 4
        %s1007 = scalar_lea.vmem [#allocation17], %s1006
        %s1008 = sand.u32 %s17, 1
        %s1009 = sand.u32 %s17, 1
        %s1010 = smul.addr %s1009, 4
        %s1011 = scalar_lea.vmem [#allocation19], %s1010
        // Predicated region
        $region155: #{custom-call.2} parent=139 // pred_check
          %p1012 = pneg %p37
        $region156: #{custom-call.2} parent=139 // pred_check_branch
          %1014 = sbr.rel (%p1012) target = $region158
        $region157: #{custom-call.2} parent=139 // pred_region
          %s1015 = sshrl.u32 %s17, 3
          %s1016 = smul.addr %s1015, 2
          %s1017 = scalar_lea.vmem %s4, %s1016
          // Predicated region
          $region159: #{custom-call.2} parent=157 // pred_check
            _
          $region160: #{custom-call.2} parent=157 // pred_check_branch
            %1019 = sbr.rel (0) target = $region162
          $region161: #{custom-call.2} parent=157 // pred_region
            // Predicated region
            $region163: #{custom-call.2} parent=161 // pred_check
              _
            $region164: #{custom-call.2} parent=161 // pred_check_branch
              %1021 = sbr.rel target = $region166
            $region165: #{custom-call.2} parent=161 // pred_region
              // Predicated region
              $region178: #{custom-call.2} parent=165 // pred_check
                _
              $region179: #{custom-call.2} parent=165 // pred_check_branch
                %1036 = sbr.rel (0) target = $region181
              $region180: #{custom-call.2} parent=165 // pred_region
                loop: start=0, step=1, limit=1
                $region182: #{custom-call.2} parent=180 // loop_pre_header
                  _
                $region183: #{custom-call.2} parent=180 // loop_header
                  %s1039 = sphi 0, %s1043
                  %p1040 = scmp.ge.s32.totalorder %s1039, 1
                  %s1044 = sphi %s991, %s991
                  %s1045 = sphi %s1017, %s1017
                $region184: #{custom-call.2} parent=180 // loop_header_branch
                  %1042 = sbr.rel (%p1040) target = $region188
                $region185: #{custom-call.2} parent=180 // loop_body
                  %v1046 = vld [vmem:[%s1044] sm:$0x3]
                  %1047 = vst [vmem:[%s1045] sm:$0x3] %v1046
                $region186: #{custom-call.2} parent=180 // loop_footer
                  %s1043 = sadd.s32 1, %s1039
                $region187: #{custom-call.2} parent=180 // loop_footer_branch
                  %1038 = sbr.rel target = $region183
                $region188: #{custom-call.2} parent=180 // loop_exit
                  _
              $region181: #{custom-call.2} parent=165 // pred_fallthru
                _
            $region166: #{custom-call.2} parent=161 // pred_fallthru
              _
            // Predicated region
            $region167: #{custom-call.2} parent=161 // pred_check
              _
            $region168: #{custom-call.2} parent=161 // pred_check_branch
              %1023 = sbr.rel (0) target = $region170
            $region169: #{custom-call.2} parent=161 // pred_region
              loop: start=0, step=1, limit=1
              $region171: #{custom-call.2} parent=169 // loop_pre_header
                _
              $region172: #{custom-call.2} parent=169 // loop_header
                %s1026 = sphi 0, %s1030
                %p1027 = scmp.ge.s32.totalorder %s1026, 1
                %s1031 = sphi %s991, %s991
                %s1032 = sphi %s1017, %s1017
              $region173: #{custom-call.2} parent=169 // loop_header_branch
                %1029 = sbr.rel (%p1027) target = $region177
              $region174: #{custom-call.2} parent=169 // loop_body
                %v1033 = vld [vmem:[%s1031] sm:$0x3]
                %1034 = vst [vmem:[%s1032] sm:$0x3] %v1033
              $region175: #{custom-call.2} parent=169 // loop_footer
                %s1030 = sadd.s32 1, %s1026
              $region176: #{custom-call.2} parent=169 // loop_footer_branch
                %1025 = sbr.rel target = $region172
              $region177: #{custom-call.2} parent=169 // loop_exit
                _
            $region170: #{custom-call.2} parent=161 // pred_fallthru
              _
          $region162: #{custom-call.2} parent=157 // pred_fallthru
            _
          %1048 = vnop
        $region158: #{custom-call.2} parent=139 // pred_fallthru
          _
        // Predicated region
        $region189: #{custom-call.2} parent=139 // pred_check
          %p1049 = pneg %p65
        $region190: #{custom-call.2} parent=139 // pred_check_branch
          %1051 = sbr.rel (%p1049) target = $region192
        $region191: #{custom-call.2} parent=139 // pred_region
          %s1052 = sshrl.u32 %s17, 3
          %s1053 = smul.addr %s1052, 2
          %s1054 = scalar_lea.vmem %s5, %s1053
          // Predicated region
          $region193: #{custom-call.2} parent=191 // pred_check
            _
          $region194: #{custom-call.2} parent=191 // pred_check_branch
            %1056 = sbr.rel (0) target = $region196
          $region195: #{custom-call.2} parent=191 // pred_region
            // Predicated region
            $region197: #{custom-call.2} parent=195 // pred_check
              _
            $region198: #{custom-call.2} parent=195 // pred_check_branch
              %1058 = sbr.rel target = $region200
            $region199: #{custom-call.2} parent=195 // pred_region
              // Predicated region
              $region212: #{custom-call.2} parent=199 // pred_check
                _
              $region213: #{custom-call.2} parent=199 // pred_check_branch
                %1073 = sbr.rel (0) target = $region215
              $region214: #{custom-call.2} parent=199 // pred_region
                loop: start=0, step=1, limit=1
                $region216: #{custom-call.2} parent=214 // loop_pre_header
                  _
                $region217: #{custom-call.2} parent=214 // loop_header
                  %s1076 = sphi 0, %s1080
                  %p1077 = scmp.ge.s32.totalorder %s1076, 1
                  %s1081 = sphi %s995, %s995
                  %s1082 = sphi %s1054, %s1054
                $region218: #{custom-call.2} parent=214 // loop_header_branch
                  %1079 = sbr.rel (%p1077) target = $region222
                $region219: #{custom-call.2} parent=214 // loop_body
                  %v1083 = vld [vmem:[%s1081] sm:$0x3]
                  %1084 = vst [vmem:[%s1082] sm:$0x3] %v1083
                $region220: #{custom-call.2} parent=214 // loop_footer
                  %s1080 = sadd.s32 1, %s1076
                $region221: #{custom-call.2} parent=214 // loop_footer_branch
                  %1075 = sbr.rel target = $region217
                $region222: #{custom-call.2} parent=214 // loop_exit
                  _
              $region215: #{custom-call.2} parent=199 // pred_fallthru
                _
            $region200: #{custom-call.2} parent=195 // pred_fallthru
              _
            // Predicated region
            $region201: #{custom-call.2} parent=195 // pred_check
              _
            $region202: #{custom-call.2} parent=195 // pred_check_branch
              %1060 = sbr.rel (0) target = $region204
            $region203: #{custom-call.2} parent=195 // pred_region
              loop: start=0, step=1, limit=1
              $region205: #{custom-call.2} parent=203 // loop_pre_header
                _
              $region206: #{custom-call.2} parent=203 // loop_header
                %s1063 = sphi 0, %s1067
                %p1064 = scmp.ge.s32.totalorder %s1063, 1
                %s1068 = sphi %s995, %s995
                %s1069 = sphi %s1054, %s1054
              $region207: #{custom-call.2} parent=203 // loop_header_branch
                %1066 = sbr.rel (%p1064) target = $region211
              $region208: #{custom-call.2} parent=203 // loop_body
                %v1070 = vld [vmem:[%s1068] sm:$0x3]
                %1071 = vst [vmem:[%s1069] sm:$0x3] %v1070
              $region209: #{custom-call.2} parent=203 // loop_footer
                %s1067 = sadd.s32 1, %s1063
              $region210: #{custom-call.2} parent=203 // loop_footer_branch
                %1062 = sbr.rel target = $region206
              $region211: #{custom-call.2} parent=203 // loop_exit
                _
            $region204: #{custom-call.2} parent=195 // pred_fallthru
              _
          $region196: #{custom-call.2} parent=191 // pred_fallthru
            _
          %1085 = vnop
        $region192: #{custom-call.2} parent=139 // pred_fallthru
          _
        %s1086 = smul.addr %s17, 4
        %s1087 = scalar_lea.vmem %s6, %s1086
        // Predicated region
        $region223: #{custom-call.2} parent=139 // pred_check
          _
        $region224: #{custom-call.2} parent=139 // pred_check_branch
          %1089 = sbr.rel (0) target = $region226
        $region225: #{custom-call.2} parent=139 // pred_region
          // Predicated region
          $region227: #{custom-call.2} parent=225 // pred_check
            _
          $region228: #{custom-call.2} parent=225 // pred_check_branch
            %1091 = sbr.rel target = $region230
          $region229: #{custom-call.2} parent=225 // pred_region
            // Predicated region
            $region242: #{custom-call.2} parent=229 // pred_check
              _
            $region243: #{custom-call.2} parent=229 // pred_check_branch
              %1106 = sbr.rel (0) target = $region245
            $region244: #{custom-call.2} parent=229 // pred_region
              loop: start=0, step=1, limit=1
              $region246: #{custom-call.2} parent=244 // loop_pre_header
                _
              $region247: #{custom-call.2} parent=244 // loop_header
                %s1109 = sphi 0, %s1113
                %p1110 = scmp.ge.s32.totalorder %s1109, 1
                %s1114 = sphi %s999, %s999
                %s1115 = sphi %s1087, %s1087
              $region248: #{custom-call.2} parent=244 // loop_header_branch
                %1112 = sbr.rel (%p1110) target = $region252
              $region249: #{custom-call.2} parent=244 // loop_body
                %v1116 = vld [vmem:[%s1114] sm:$0xf]
                %1117 = vst [vmem:[%s1115] sm:$0xf] %v1116
              $region250: #{custom-call.2} parent=244 // loop_footer
                %s1113 = sadd.s32 1, %s1109
              $region251: #{custom-call.2} parent=244 // loop_footer_branch
                %1108 = sbr.rel target = $region247
              $region252: #{custom-call.2} parent=244 // loop_exit
                _
            $region245: #{custom-call.2} parent=229 // pred_fallthru
              _
          $region230: #{custom-call.2} parent=225 // pred_fallthru
            _
          // Predicated region
          $region231: #{custom-call.2} parent=225 // pred_check
            _
          $region232: #{custom-call.2} parent=225 // pred_check_branch
            %1093 = sbr.rel (0) target = $region234
          $region233: #{custom-call.2} parent=225 // pred_region
            loop: start=0, step=1, limit=1
            $region235: #{custom-call.2} parent=233 // loop_pre_header
              _
            $region236: #{custom-call.2} parent=233 // loop_header
              %s1096 = sphi 0, %s1100
              %p1097 = scmp.ge.s32.totalorder %s1096, 1
              %s1101 = sphi %s999, %s999
              %s1102 = sphi %s1087, %s1087
            $region237: #{custom-call.2} parent=233 // loop_header_branch
              %1099 = sbr.rel (%p1097) target = $region241
            $region238: #{custom-call.2} parent=233 // loop_body
              %v1103 = vld [vmem:[%s1101] sm:$0xf]
              %1104 = vst [vmem:[%s1102] sm:$0xf] %v1103
            $region239: #{custom-call.2} parent=233 // loop_footer
              %s1100 = sadd.s32 1, %s1096
            $region240: #{custom-call.2} parent=233 // loop_footer_branch
              %1095 = sbr.rel target = $region236
            $region241: #{custom-call.2} parent=233 // loop_exit
              _
          $region234: #{custom-call.2} parent=225 // pred_fallthru
            _
        $region226: #{custom-call.2} parent=139 // pred_fallthru
          _
        %1118 = vnop
        %s1119 = smul.addr %s17, 4
        %s1120 = scalar_lea.vmem %s7, %s1119
        // Predicated region
        $region253: #{custom-call.2} parent=139 // pred_check
          _
        $region254: #{custom-call.2} parent=139 // pred_check_branch
          %1122 = sbr.rel (0) target = $region256
        $region255: #{custom-call.2} parent=139 // pred_region
          // Predicated region
          $region257: #{custom-call.2} parent=255 // pred_check
            _
          $region258: #{custom-call.2} parent=255 // pred_check_branch
            %1124 = sbr.rel target = $region260
          $region259: #{custom-call.2} parent=255 // pred_region
            // Predicated region
            $region272: #{custom-call.2} parent=259 // pred_check
              _
            $region273: #{custom-call.2} parent=259 // pred_check_branch
              %1139 = sbr.rel (0) target = $region275
            $region274: #{custom-call.2} parent=259 // pred_region
              loop: start=0, step=1, limit=1
              $region276: #{custom-call.2} parent=274 // loop_pre_header
                _
              $region277: #{custom-call.2} parent=274 // loop_header
                %s1142 = sphi 0, %s1146
                %p1143 = scmp.ge.s32.totalorder %s1142, 1
                %s1147 = sphi %s1003, %s1003
                %s1148 = sphi %s1120, %s1120
              $region278: #{custom-call.2} parent=274 // loop_header_branch
                %1145 = sbr.rel (%p1143) target = $region282
              $region279: #{custom-call.2} parent=274 // loop_body
                %v1149 = vld [vmem:[%s1147] sm:$0xf]
                %1150 = vst [vmem:[%s1148] sm:$0xf] %v1149
              $region280: #{custom-call.2} parent=274 // loop_footer
                %s1146 = sadd.s32 1, %s1142
              $region281: #{custom-call.2} parent=274 // loop_footer_branch
                %1141 = sbr.rel target = $region277
              $region282: #{custom-call.2} parent=274 // loop_exit
                _
            $region275: #{custom-call.2} parent=259 // pred_fallthru
              _
          $region260: #{custom-call.2} parent=255 // pred_fallthru
            _
          // Predicated region
          $region261: #{custom-call.2} parent=255 // pred_check
            _
          $region262: #{custom-call.2} parent=255 // pred_check_branch
            %1126 = sbr.rel (0) target = $region264
          $region263: #{custom-call.2} parent=255 // pred_region
            loop: start=0, step=1, limit=1
            $region265: #{custom-call.2} parent=263 // loop_pre_header
              _
            $region266: #{custom-call.2} parent=263 // loop_header
              %s1129 = sphi 0, %s1133
              %p1130 = scmp.ge.s32.totalorder %s1129, 1
              %s1134 = sphi %s1003, %s1003
              %s1135 = sphi %s1120, %s1120
            $region267: #{custom-call.2} parent=263 // loop_header_branch
              %1132 = sbr.rel (%p1130) target = $region271
            $region268: #{custom-call.2} parent=263 // loop_body
              %v1136 = vld [vmem:[%s1134] sm:$0xf]
              %1137 = vst [vmem:[%s1135] sm:$0xf] %v1136
            $region269: #{custom-call.2} parent=263 // loop_footer
              %s1133 = sadd.s32 1, %s1129
            $region270: #{custom-call.2} parent=263 // loop_footer_branch
              %1128 = sbr.rel target = $region266
            $region271: #{custom-call.2} parent=263 // loop_exit
              _
          $region264: #{custom-call.2} parent=255 // pred_fallthru
            _
        $region256: #{custom-call.2} parent=139 // pred_fallthru
          _
        %1151 = vnop
        %s1152 = smul.addr %s17, 4
        %s1153 = scalar_lea.vmem %s8, %s1152
        // Predicated region
        $region283: #{custom-call.2} parent=139 // pred_check
          _
        $region284: #{custom-call.2} parent=139 // pred_check_branch
          %1155 = sbr.rel (0) target = $region286
        $region285: #{custom-call.2} parent=139 // pred_region
          // Predicated region
          $region287: #{custom-call.2} parent=285 // pred_check
            _
          $region288: #{custom-call.2} parent=285 // pred_check_branch
            %1157 = sbr.rel target = $region290
          $region289: #{custom-call.2} parent=285 // pred_region
            // Predicated region
            $region302: #{custom-call.2} parent=289 // pred_check
              _
            $region303: #{custom-call.2} parent=289 // pred_check_branch
              %1172 = sbr.rel (0) target = $region305
            $region304: #{custom-call.2} parent=289 // pred_region
              loop: start=0, step=1, limit=1
              $region306: #{custom-call.2} parent=304 // loop_pre_header
                _
              $region307: #{custom-call.2} parent=304 // loop_header
                %s1175 = sphi 0, %s1179
                %p1176 = scmp.ge.s32.totalorder %s1175, 1
                %s1180 = sphi %s1007, %s1007
                %s1181 = sphi %s1153, %s1153
              $region308: #{custom-call.2} parent=304 // loop_header_branch
                %1178 = sbr.rel (%p1176) target = $region312
              $region309: #{custom-call.2} parent=304 // loop_body
                %v1182 = vld [vmem:[%s1180] sm:$0xf]
                %1183 = vst [vmem:[%s1181] sm:$0xf] %v1182
              $region310: #{custom-call.2} parent=304 // loop_footer
                %s1179 = sadd.s32 1, %s1175
              $region311: #{custom-call.2} parent=304 // loop_footer_branch
                %1174 = sbr.rel target = $region307
              $region312: #{custom-call.2} parent=304 // loop_exit
                _
            $region305: #{custom-call.2} parent=289 // pred_fallthru
              _
          $region290: #{custom-call.2} parent=285 // pred_fallthru
            _
          // Predicated region
          $region291: #{custom-call.2} parent=285 // pred_check
            _
          $region292: #{custom-call.2} parent=285 // pred_check_branch
            %1159 = sbr.rel (0) target = $region294
          $region293: #{custom-call.2} parent=285 // pred_region
            loop: start=0, step=1, limit=1
            $region295: #{custom-call.2} parent=293 // loop_pre_header
              _
            $region296: #{custom-call.2} parent=293 // loop_header
              %s1162 = sphi 0, %s1166
              %p1163 = scmp.ge.s32.totalorder %s1162, 1
              %s1167 = sphi %s1007, %s1007
              %s1168 = sphi %s1153, %s1153
            $region297: #{custom-call.2} parent=293 // loop_header_branch
              %1165 = sbr.rel (%p1163) target = $region301
            $region298: #{custom-call.2} parent=293 // loop_body
              %v1169 = vld [vmem:[%s1167] sm:$0xf]
              %1170 = vst [vmem:[%s1168] sm:$0xf] %v1169
            $region299: #{custom-call.2} parent=293 // loop_footer
              %s1166 = sadd.s32 1, %s1162
            $region300: #{custom-call.2} parent=293 // loop_footer_branch
              %1161 = sbr.rel target = $region296
            $region301: #{custom-call.2} parent=293 // loop_exit
              _
          $region294: #{custom-call.2} parent=285 // pred_fallthru
            _
        $region286: #{custom-call.2} parent=139 // pred_fallthru
          _
        %1184 = vnop
        %s1185 = smul.addr %s17, 4
        %s1186 = scalar_lea.vmem %s9, %s1185
        // Predicated region
        $region313: #{custom-call.2} parent=139 // pred_check
          _
        $region314: #{custom-call.2} parent=139 // pred_check_branch
          %1188 = sbr.rel (0) target = $region316
        $region315: #{custom-call.2} parent=139 // pred_region
          // Predicated region
          $region317: #{custom-call.2} parent=315 // pred_check
            _
          $region318: #{custom-call.2} parent=315 // pred_check_branch
            %1190 = sbr.rel target = $region320
          $region319: #{custom-call.2} parent=315 // pred_region
            // Predicated region
            $region332: #{custom-call.2} parent=319 // pred_check
              _
            $region333: #{custom-call.2} parent=319 // pred_check_branch
              %1205 = sbr.rel (0) target = $region335
            $region334: #{custom-call.2} parent=319 // pred_region
              loop: start=0, step=1, limit=1
              $region336: #{custom-call.2} parent=334 // loop_pre_header
                _
              $region337: #{custom-call.2} parent=334 // loop_header
                %s1208 = sphi 0, %s1212
                %p1209 = scmp.ge.s32.totalorder %s1208, 1
                %s1213 = sphi %s1011, %s1011
                %s1214 = sphi %s1186, %s1186
              $region338: #{custom-call.2} parent=334 // loop_header_branch
                %1211 = sbr.rel (%p1209) target = $region342
              $region339: #{custom-call.2} parent=334 // loop_body
                %v1215 = vld [vmem:[%s1213] sm:$0xf]
                %1216 = vst [vmem:[%s1214] sm:$0xf] %v1215
              $region340: #{custom-call.2} parent=334 // loop_footer
                %s1212 = sadd.s32 1, %s1208
              $region341: #{custom-call.2} parent=334 // loop_footer_branch
                %1207 = sbr.rel target = $region337
              $region342: #{custom-call.2} parent=334 // loop_exit
                _
            $region335: #{custom-call.2} parent=319 // pred_fallthru
              _
          $region320: #{custom-call.2} parent=315 // pred_fallthru
            _
          // Predicated region
          $region321: #{custom-call.2} parent=315 // pred_check
            _
          $region322: #{custom-call.2} parent=315 // pred_check_branch
            %1192 = sbr.rel (0) target = $region324
          $region323: #{custom-call.2} parent=315 // pred_region
            loop: start=0, step=1, limit=1
            $region325: #{custom-call.2} parent=323 // loop_pre_header
              _
            $region326: #{custom-call.2} parent=323 // loop_header
              %s1195 = sphi 0, %s1199
              %p1196 = scmp.ge.s32.totalorder %s1195, 1
              %s1200 = sphi %s1011, %s1011
              %s1201 = sphi %s1186, %s1186
            $region327: #{custom-call.2} parent=323 // loop_header_branch
              %1198 = sbr.rel (%p1196) target = $region331
            $region328: #{custom-call.2} parent=323 // loop_body
              %v1202 = vld [vmem:[%s1200] sm:$0xf]
              %1203 = vst [vmem:[%s1201] sm:$0xf] %v1202
            $region329: #{custom-call.2} parent=323 // loop_footer
              %s1199 = sadd.s32 1, %s1195
            $region330: #{custom-call.2} parent=323 // loop_footer_branch
              %1194 = sbr.rel target = $region326
            $region331: #{custom-call.2} parent=323 // loop_exit
              _
          $region324: #{custom-call.2} parent=315 // pred_fallthru
            _
        $region316: #{custom-call.2} parent=139 // pred_fallthru
          _
        %1217 = vnop
      $region140: #{custom-call.2} parent=5 // pred_fallthru
        _
      %p1218 = scmp.le.s32.totalorder 2, %s12
      // Predicated region
      $region343: #{custom-call.2} parent=5 // pred_check
        %p1219 = pneg %p1218
      $region344: #{custom-call.2} parent=5 // pred_check_branch
        %1221 = sbr.rel (%p1219) target = $region346
      $region345: #{custom-call.2} parent=5 // pred_region
        %s1222 = ssub.s32 %s12, 2
        // Predicated region
        $region347: #{custom-call.2} parent=345 // pred_check
          %p1223 = pneg %p43
        $region348: #{custom-call.2} parent=345 // pred_check_branch
          %1225 = sbr.rel (%p1223) target = $region350
        $region349: #{custom-call.2} parent=345 // pred_region
          %s1226 = sand.u32 %s28, 1
          %s1227 = sand.u32 %s28, 1
          %s1228 = smul.addr %s1227, 2
          %s1229 = scalar_lea.vmem [#allocation9], %s1228
        $region350: #{custom-call.2} parent=345 // pred_fallthru
          _
        // Predicated region
        $region351: #{custom-call.2} parent=345 // pred_check
          %p1230 = pneg %p71
        $region352: #{custom-call.2} parent=345 // pred_check_branch
          %1232 = sbr.rel (%p1230) target = $region354
        $region353: #{custom-call.2} parent=345 // pred_region
          %s1233 = sand.u32 %s56, 1
          %s1234 = sand.u32 %s56, 1
          %s1235 = smul.addr %s1234, 2
          %s1236 = scalar_lea.vmem [#allocation11], %s1235
        $region354: #{custom-call.2} parent=345 // pred_fallthru
          _
        %s1237 = sand.u32 %s18, 1
        %s1238 = sand.u32 %s18, 1
        %s1239 = smul.addr %s1238, 4
        %s1240 = scalar_lea.vmem [#allocation13], %s1239
        %s1241 = sand.u32 %s18, 1
        %s1242 = sand.u32 %s18, 1
        %s1243 = smul.addr %s1242, 4
        %s1244 = scalar_lea.vmem [#allocation15], %s1243
        %s1245 = sand.u32 %s18, 1
        %s1246 = sand.u32 %s18, 1
        %s1247 = smul.addr %s1246, 4
        %s1248 = scalar_lea.vmem [#allocation17], %s1247
        %s1249 = sand.u32 %s18, 1
        %s1250 = sand.u32 %s18, 1
        %s1251 = smul.addr %s1250, 4
        %s1252 = scalar_lea.vmem [#allocation19], %s1251
      $region346: #{custom-call.2} parent=5 // pred_fallthru
        _
    $region6: #{custom-call.2} parent=1 // loop_footer
      %s16 = sadd.s32 1, %s12
    $region7: #{custom-call.2} parent=1 // loop_footer_branch
      %11 = sbr.rel target = $region3
    $region8: #{custom-call.2} parent=1 // loop_exit
      _

// kernel: my_model_forward.2
$region0: #{my_model_forward.2}
  #allocation0 [shape = 'u32[]', space=smem, size = 0x4, offset = 0x4, fixed_abs, tag = 'smem constant byte address 0x4 - core index']
  #allocation1 [shape = 'u32[144,128]{1,0:T(1,128)}', space=vmem, size = 0x12000, scoped, tag = 'internal scratch']
  %s0 = inlined_call_operand.vmem [shape: f32[12,768], index: 0, kind: input, shape index: {}]
  %s1 = inlined_call_operand.vmem [shape: f32[2,768], index: 1, kind: input, shape index: {}]
  %s2 = inlined_call_operand.vmem [shape: f32[768,128], index: 2, kind: input, shape index: {}]
  %s3 = inlined_call_operand.vmem [shape: f32[1,128], index: 3, kind: input, shape index: {}]
  %s4 = inlined_call_operand.vmem [shape: f32[16,128], index: 4, kind: output, shape index: {0}]
  %s5 = inlined_call_operand.vmem [shape: f32[2,6,6], index: 5, kind: output, shape index: {1}]
  %6 = xla_tuple %s4, %s5
  %s7 = sld [smem:[#allocation0]]
  $region34: #{my_model_forward.2} parent=0
    _
  %s9 = ssub.s32 1, %s7
  %s10 = scalar_select 0, %s9, %s7
  // Predicated region
  $region2: #{my_model_forward.2} parent=0 // pred_check
    _
  $region3: #{my_model_forward.2} parent=0 // pred_check_branch
    %12 = sbr.rel (0) target = $region5
  $region4: #{my_model_forward.2} parent=0 // pred_region
    _
  $region5: #{my_model_forward.2} parent=0 // pred_fallthru
    _
  // Predicated region
  $region6: #{my_model_forward.2} parent=0 // pred_check
    _
  $region7: #{my_model_forward.2} parent=0 // pred_check_branch
    %14 = sbr.rel (0) target = $region9
  $region8: #{my_model_forward.2} parent=0 // pred_region
    _
  $region9: #{my_model_forward.2} parent=0 // pred_fallthru
    _
  // Predicated region
  $region10: #{my_model_forward.2} parent=0 // pred_check
    _
  $region11: #{my_model_forward.2} parent=0 // pred_check_branch
    %16 = sbr.rel (0) target = $region13
  $region12: #{my_model_forward.2} parent=0 // pred_region
    _
  $region13: #{my_model_forward.2} parent=0 // pred_fallthru
    _
  // Predicated region
  $region14: #{my_model_forward.2} parent=0 // pred_check
    _
  $region15: #{my_model_forward.2} parent=0 // pred_check_branch
    %18 = sbr.rel (0) target = $region17
  $region16: #{my_model_forward.2} parent=0 // pred_region
    _
  $region17: #{my_model_forward.2} parent=0 // pred_fallthru
    _
  %v20 = vld [vmem:[%s2] sm:$0xff]
  %v21 = vld [vmem:[%s2 + $0x8] sm:$0xff]
  %v22 = vld [vmem:[%s2 + $0x10] sm:$0xff]
  %v23 = vld [vmem:[%s2 + $0x18] sm:$0xff]
  %v24 = vld [vmem:[%s2 + $0x20] sm:$0xff]
  %v25 = vld [vmem:[%s2 + $0x28] sm:$0xff]
  %v26 = vld [vmem:[%s2 + $0x30] sm:$0xff]
  %v27 = vld [vmem:[%s2 + $0x38] sm:$0xff]
  %v28 = vld [vmem:[%s2 + $0x40] sm:$0xff]
  %v29 = vld [vmem:[%s2 + $0x48] sm:$0xff]
  %v30 = vld [vmem:[%s2 + $0x50] sm:$0xff]
  %v31 = vld [vmem:[%s2 + $0x58] sm:$0xff]
  %v32 = vld [vmem:[%s2 + $0x60] sm:$0xff]
  %v33 = vld [vmem:[%s2 + $0x68] sm:$0xff]
  %v34 = vld [vmem:[%s2 + $0x70] sm:$0xff]
  %v35 = vld [vmem:[%s2 + $0x78] sm:$0xff]
  %v36 = vld [vmem:[%s2 + $0x80] sm:$0xff]
  %v37 = vld [vmem:[%s2 + $0x88] sm:$0xff]
  %v38 = vld [vmem:[%s2 + $0x90] sm:$0xff]
  %v39 = vld [vmem:[%s2 + $0x98] sm:$0xff]
  %v40 = vld [vmem:[%s2 + $0xa0] sm:$0xff]
  %v41 = vld [vmem:[%s2 + $0xa8] sm:$0xff]
  %v42 = vld [vmem:[%s2 + $0xb0] sm:$0xff]
  %v43 = vld [vmem:[%s2 + $0xb8] sm:$0xff]
  %v44 = vld [vmem:[%s2 + $0xc0] sm:$0xff]
  %v45 = vld [vmem:[%s2 + $0xc8] sm:$0xff]
  %v46 = vld [vmem:[%s2 + $0xd0] sm:$0xff]
  %v47 = vld [vmem:[%s2 + $0xd8] sm:$0xff]
  %v48 = vld [vmem:[%s2 + $0xe0] sm:$0xff]
  %v49 = vld [vmem:[%s2 + $0xe8] sm:$0xff]
  %v50 = vld [vmem:[%s2 + $0xf0] sm:$0xff]
  %v51 = vld [vmem:[%s2 + $0xf8] sm:$0xff]
  %v52 = vld [vmem:[%s2 + $0x100] sm:$0xff]
  %v53 = vld [vmem:[%s2 + $0x108] sm:$0xff]
  %v54 = vld [vmem:[%s2 + $0x110] sm:$0xff]
  %v55 = vld [vmem:[%s2 + $0x118] sm:$0xff]
  %v56 = vld [vmem:[%s2 + $0x120] sm:$0xff]
  %v57 = vld [vmem:[%s2 + $0x128] sm:$0xff]
  %v58 = vld [vmem:[%s2 + $0x130] sm:$0xff]
  %v59 = vld [vmem:[%s2 + $0x138] sm:$0xff]
  %v60 = vld [vmem:[%s2 + $0x140] sm:$0xff]
  %v61 = vld [vmem:[%s2 + $0x148] sm:$0xff]
  %v62 = vld [vmem:[%s2 + $0x150] sm:$0xff]
  %v63 = vld [vmem:[%s2 + $0x158] sm:$0xff]
  %v64 = vld [vmem:[%s2 + $0x160] sm:$0xff]
  %v65 = vld [vmem:[%s2 + $0x168] sm:$0xff]
  %v66 = vld [vmem:[%s2 + $0x170] sm:$0xff]
  %v67 = vld [vmem:[%s2 + $0x178] sm:$0xff]
  %v68 = vld [vmem:[%s2 + $0x180] sm:$0xff]
  %v69 = vld [vmem:[%s2 + $0x188] sm:$0xff]
  %v70 = vld [vmem:[%s2 + $0x190] sm:$0xff]
  %v71 = vld [vmem:[%s2 + $0x198] sm:$0xff]
  %v72 = vld [vmem:[%s2 + $0x1a0] sm:$0xff]
  %v73 = vld [vmem:[%s2 + $0x1a8] sm:$0xff]
  %v74 = vld [vmem:[%s2 + $0x1b0] sm:$0xff]
  %v75 = vld [vmem:[%s2 + $0x1b8] sm:$0xff]
  %v76 = vld [vmem:[%s2 + $0x1c0] sm:$0xff]
  %v77 = vld [vmem:[%s2 + $0x1c8] sm:$0xff]
  %v78 = vld [vmem:[%s2 + $0x1d0] sm:$0xff]
  %v79 = vld [vmem:[%s2 + $0x1d8] sm:$0xff]
  %v80 = vld [vmem:[%s2 + $0x1e0] sm:$0xff]
  %v81 = vld [vmem:[%s2 + $0x1e8] sm:$0xff]
  %v82 = vld [vmem:[%s2 + $0x1f0] sm:$0xff]
  %v83 = vld [vmem:[%s2 + $0x1f8] sm:$0xff]
  %v84 = vld [vmem:[%s2 + $0x200] sm:$0xff]
  %v85 = vld [vmem:[%s2 + $0x208] sm:$0xff]
  %v86 = vld [vmem:[%s2 + $0x210] sm:$0xff]
  %v87 = vld [vmem:[%s2 + $0x218] sm:$0xff]
  %v88 = vld [vmem:[%s2 + $0x220] sm:$0xff]
  %v89 = vld [vmem:[%s2 + $0x228] sm:$0xff]
  %v90 = vld [vmem:[%s2 + $0x230] sm:$0xff]
  %v91 = vld [vmem:[%s2 + $0x238] sm:$0xff]
  %v92 = vld [vmem:[%s2 + $0x240] sm:$0xff]
  %v93 = vld [vmem:[%s2 + $0x248] sm:$0xff]
  %v94 = vld [vmem:[%s2 + $0x250] sm:$0xff]
  %v95 = vld [vmem:[%s2 + $0x258] sm:$0xff]
  %v96 = vld [vmem:[%s2 + $0x260] sm:$0xff]
  %v97 = vld [vmem:[%s2 + $0x268] sm:$0xff]
  %v98 = vld [vmem:[%s2 + $0x270] sm:$0xff]
  %v99 = vld [vmem:[%s2 + $0x278] sm:$0xff]
  %v100 = vld [vmem:[%s2 + $0x280] sm:$0xff]
  %v101 = vld [vmem:[%s2 + $0x288] sm:$0xff]
  %v102 = vld [vmem:[%s2 + $0x290] sm:$0xff]
  %v103 = vld [vmem:[%s2 + $0x298] sm:$0xff]
  %v104 = vld [vmem:[%s2 + $0x2a0] sm:$0xff]
  %v105 = vld [vmem:[%s2 + $0x2a8] sm:$0xff]
  %v106 = vld [vmem:[%s2 + $0x2b0] sm:$0xff]
  %v107 = vld [vmem:[%s2 + $0x2b8] sm:$0xff]
  %v108 = vld [vmem:[%s2 + $0x2c0] sm:$0xff]
  %v109 = vld [vmem:[%s2 + $0x2c8] sm:$0xff]
  %v110 = vld [vmem:[%s2 + $0x2d0] sm:$0xff]
  %v111 = vld [vmem:[%s2 + $0x2d8] sm:$0xff]
  %v112 = vld [vmem:[%s2 + $0x2e0] sm:$0xff]
  %v113 = vld [vmem:[%s2 + $0x2e8] sm:$0xff]
  %v114 = vld [vmem:[%s2 + $0x2f0] sm:$0xff]
  %v115 = vld [vmem:[%s2 + $0x2f8] sm:$0xff]
  %v116 = vpack.c.bf16 %v21, %v20
  %v117 = vpack.c.bf16 %v23, %v22
  %v118 = vpack.c.bf16 %v25, %v24
  %v119 = vpack.c.bf16 %v27, %v26
  %v120 = vpack.c.bf16 %v29, %v28
  %v121 = vpack.c.bf16 %v31, %v30
  %v122 = vpack.c.bf16 %v33, %v32
  %v123 = vpack.c.bf16 %v35, %v34
  %v124 = vpack.c.bf16 %v37, %v36
  %v125 = vpack.c.bf16 %v39, %v38
  %v126 = vpack.c.bf16 %v41, %v40
  %v127 = vpack.c.bf16 %v43, %v42
  %v128 = vpack.c.bf16 %v45, %v44
  %v129 = vpack.c.bf16 %v47, %v46
  %v130 = vpack.c.bf16 %v49, %v48
  %v131 = vpack.c.bf16 %v51, %v50
  %v132 = vpack.c.bf16 %v53, %v52
  %v133 = vpack.c.bf16 %v55, %v54
  %v134 = vpack.c.bf16 %v57, %v56
  %v135 = vpack.c.bf16 %v59, %v58
  %v136 = vpack.c.bf16 %v61, %v60
  %v137 = vpack.c.bf16 %v63, %v62
  %v138 = vpack.c.bf16 %v65, %v64
  %v139 = vpack.c.bf16 %v67, %v66
  %v140 = vpack.c.bf16 %v69, %v68
  %v141 = vpack.c.bf16 %v71, %v70
  %v142 = vpack.c.bf16 %v73, %v72
  %v143 = vpack.c.bf16 %v75, %v74
  %v144 = vpack.c.bf16 %v77, %v76
  %v145 = vpack.c.bf16 %v79, %v78
  %v146 = vpack.c.bf16 %v81, %v80
  %v147 = vpack.c.bf16 %v83, %v82
  %v148 = vpack.c.bf16 %v85, %v84
  %v149 = vpack.c.bf16 %v87, %v86
  %v150 = vpack.c.bf16 %v89, %v88
  %v151 = vpack.c.bf16 %v91, %v90
  %v152 = vpack.c.bf16 %v93, %v92
  %v153 = vpack.c.bf16 %v95, %v94
  %v154 = vpack.c.bf16 %v97, %v96
  %v155 = vpack.c.bf16 %v99, %v98
  %v156 = vpack.c.bf16 %v101, %v100
  %v157 = vpack.c.bf16 %v103, %v102
  %v158 = vpack.c.bf16 %v105, %v104
  %v159 = vpack.c.bf16 %v107, %v106
  %v160 = vpack.c.bf16 %v109, %v108
  %v161 = vpack.c.bf16 %v111, %v110
  %v162 = vpack.c.bf16 %v113, %v112
  %v163 = vpack.c.bf16 %v115, %v114
  %v164 = vld [vmem:[%s3] sm:$0x1]
  %v165 = vld [vmem:[%s0] sm:$0xff]
  %v166 = vld [vmem:[%s0 + $0x8] sm:$0xff]
  %v167 = vld [vmem:[%s0 + $0x10] sm:$0xff]
  %v168 = vld [vmem:[%s0 + $0x18] sm:$0xff]
  %v169 = vld [vmem:[%s0 + $0x20] sm:$0xff]
  %v170 = vld [vmem:[%s0 + $0x28] sm:$0xff]
  %v171 = vld [vmem:[%s0 + $0x30] sm:$0xf]
  %v172 = vld [vmem:[%s0 + $0x38] sm:$0xf]
  %v173 = vld [vmem:[%s0 + $0x40] sm:$0xf]
  %v174 = vld [vmem:[%s0 + $0x48] sm:$0xf]
  %v175 = vld [vmem:[%s0 + $0x50] sm:$0xf]
  %v176 = vld [vmem:[%s0 + $0x58] sm:$0xf]
  %v177 = vpack.c.bf16 %v171, %v165
  %v178 = vpack.c.bf16 %v172, %v166
  %v179 = vpack.c.bf16 %v173, %v167
  %v180 = vpack.c.bf16 %v174, %v168
  %v181 = vpack.c.bf16 %v175, %v169
  %v182 = vpack.c.bf16 %v176, %v170
  %v184 = vlaneseq
  %v185 = vshrl.u32 %v184, 7
  %v186 = vsub.s32 0, %v185
  %v187 = vrot.slane %v164, %v186
  %189 = vmatprep.subr.bf16.mxu0 0
  %190 = vmatpush1.bf16.msra.mxu0 %v116
  %191 = vmatprep.subr.bf16.mxu0 0
  %192 = vmatpush1.bf16.msra.mxu0 %v117
  %193 = vmatprep.subr.bf16.mxu0 0
  %194 = vmatpush1.bf16.msra.mxu0 %v118
  %195 = vmatprep.subr.bf16.mxu0 0
  %196 = vmatpush1.bf16.msra.mxu0 %v119
  %197 = vmatprep.subr.bf16.mxu0 0
  %198 = vmatpush1.bf16.msra.mxu0 %v120
  %199 = vmatprep.subr.bf16.mxu0 0
  %200 = vmatpush1.bf16.msra.mxu0 %v121
  %201 = vmatprep.subr.bf16.mxu0 0
  %202 = vmatpush1.bf16.msra.mxu0 %v122
  %203 = vmatprep.subr.bf16.mxu0 0
  %204 = vmatpush1.bf16.msra.mxu0 %v123
  %205 = vmatprep.subr.bf16.mxu0 0
  %206 = vmatpush1.bf16.msra.mxu0 %v124
  %207 = vmatprep.subr.bf16.mxu0 0
  %208 = vmatpush1.bf16.msra.mxu0 %v125
  %209 = vmatprep.subr.bf16.mxu0 0
  %210 = vmatpush1.bf16.msra.mxu0 %v126
  %211 = vmatprep.subr.bf16.mxu0 0
  %212 = vmatpush1.bf16.msra.mxu0 %v127
  %213 = vmatprep.subr.bf16.mxu0 0
  %214 = vmatpush1.bf16.msra.mxu0 %v128
  %215 = vmatprep.subr.bf16.mxu0 0
  %216 = vmatpush1.bf16.msra.mxu0 %v129
  %217 = vmatprep.subr.bf16.mxu0 0
  %218 = vmatpush1.bf16.msra.mxu0 %v130
  %219 = vmatprep.subr.bf16.mxu0 0
  %220 = vmatpush1.bf16.msra.mxu0 %v131
  %221 = vmatprep.mubr.bf16.mxu0 %v178
  %222 = vmatmul.mubr.bf16.gmra.mrb[0].mxu0 %v177
  %v223 = vpop.f32.mrb[0].mxu0
  %v224 = vadd.f32 %v187, %v223
  %v225 = vpop.f32.mrb[0].mxu0
  %v226 = vpop.f32.mrb[0].mxu0
  %v227 = vadd.f32 %v187, %v226
  %v228 = vpop.f32.mrb[0].mxu0
  %229 = vdwg.mxu0
  %230 = vmatprep.subr.bf16.mxu0 0
  %231 = vmatpush1.bf16.msra.mxu0 %v132
  %232 = vmatprep.subr.bf16.mxu0 0
  %233 = vmatpush1.bf16.msra.mxu0 %v133
  %234 = vmatprep.subr.bf16.mxu0 0
  %235 = vmatpush1.bf16.msra.mxu0 %v134
  %236 = vmatprep.subr.bf16.mxu0 0
  %237 = vmatpush1.bf16.msra.mxu0 %v135
  %238 = vmatprep.subr.bf16.mxu0 0
  %239 = vmatpush1.bf16.msra.mxu0 %v136
  %240 = vmatprep.subr.bf16.mxu0 0
  %241 = vmatpush1.bf16.msra.mxu0 %v137
  %242 = vmatprep.subr.bf16.mxu0 0
  %243 = vmatpush1.bf16.msra.mxu0 %v138
  %244 = vmatprep.subr.bf16.mxu0 0
  %245 = vmatpush1.bf16.msra.mxu0 %v139
  %246 = vmatprep.subr.bf16.mxu0 0
  %247 = vmatpush1.bf16.msra.mxu0 %v140
  %248 = vmatprep.subr.bf16.mxu0 0
  %249 = vmatpush1.bf16.msra.mxu0 %v141
  %250 = vmatprep.subr.bf16.mxu0 0
  %251 = vmatpush1.bf16.msra.mxu0 %v142
  %252 = vmatprep.subr.bf16.mxu0 0
  %253 = vmatpush1.bf16.msra.mxu0 %v143
  %254 = vmatprep.subr.bf16.mxu0 0
  %255 = vmatpush1.bf16.msra.mxu0 %v144
  %256 = vmatprep.subr.bf16.mxu0 0
  %257 = vmatpush1.bf16.msra.mxu0 %v145
  %258 = vmatprep.subr.bf16.mxu0 0
  %259 = vmatpush1.bf16.msra.mxu0 %v146
  %260 = vmatprep.subr.bf16.mxu0 0
  %261 = vmatpush1.bf16.msra.mxu0 %v147
  %262 = vmatprep.mubr.bf16.mxu0 %v180
  %263 = vmatmul.mubr.bf16.gmra.mrb[0].mxu0 %v179
  %v264 = vpop.f32.mrb[0].mxu0
  %v265 = vadd.f32 %v224, %v264
  %v266 = vpop.f32.mrb[0].mxu0
  %v267 = vpop.f32.mrb[0].mxu0
  %v268 = vadd.f32 %v227, %v267
  %v269 = vpop.f32.mrb[0].mxu0
  %270 = vdwg.mxu0
  %271 = vmatprep.subr.bf16.mxu0 0
  %272 = vmatpush1.bf16.msra.mxu0 %v148
  %273 = vmatprep.subr.bf16.mxu0 0
  %274 = vmatpush1.bf16.msra.mxu0 %v149
  %275 = vmatprep.subr.bf16.mxu0 0
  %276 = vmatpush1.bf16.msra.mxu0 %v150
  %277 = vmatprep.subr.bf16.mxu0 0
  %278 = vmatpush1.bf16.msra.mxu0 %v151
  %279 = vmatprep.subr.bf16.mxu0 0
  %280 = vmatpush1.bf16.msra.mxu0 %v152
  %281 = vmatprep.subr.bf16.mxu0 0
  %282 = vmatpush1.bf16.msra.mxu0 %v153
  %283 = vmatprep.subr.bf16.mxu0 0
  %284 = vmatpush1.bf16.msra.mxu0 %v154
  %285 = vmatprep.subr.bf16.mxu0 0
  %286 = vmatpush1.bf16.msra.mxu0 %v155
  %287 = vmatprep.subr.bf16.mxu0 0
  %288 = vmatpush1.bf16.msra.mxu0 %v156
  %289 = vmatprep.subr.bf16.mxu0 0
  %290 = vmatpush1.bf16.msra.mxu0 %v157
  %291 = vmatprep.subr.bf16.mxu0 0
  %292 = vmatpush1.bf16.msra.mxu0 %v158
  %293 = vmatprep.subr.bf16.mxu0 0
  %294 = vmatpush1.bf16.msra.mxu0 %v159
  %295 = vmatprep.subr.bf16.mxu0 0
  %296 = vmatpush1.bf16.msra.mxu0 %v160
  %297 = vmatprep.subr.bf16.mxu0 0
  %298 = vmatpush1.bf16.msra.mxu0 %v161
  %299 = vmatprep.subr.bf16.mxu0 0
  %300 = vmatpush1.bf16.msra.mxu0 %v162
  %301 = vmatprep.subr.bf16.mxu0 0
  %302 = vmatpush1.bf16.msra.mxu0 %v163
  %303 = vmatprep.mubr.bf16.mxu0 %v182
  %304 = vmatmul.mubr.bf16.gmra.mrb[0].mxu0 %v181
  %v305 = vpop.f32.mrb[0].mxu0
  %v306 = vadd.f32 %v265, %v305
  %v307 = vpop.f32.mrb[0].mxu0
  %v308 = vpop.f32.mrb[0].mxu0
  %v309 = vadd.f32 %v268, %v308
  %v310 = vpop.f32.mrb[0].mxu0
  %311 = vdwg.mxu0
  %v312 = vmax.f32 %v306, 0.0
  %v313 = vmax.f32 %v309, 0.0
  %v314 = vld [vmem:[%s1] sm:$0xff]
  %v315 = vld [vmem:[%s1 + $0x8] sm:$0xf]
  %v318 = vcombine.high %v314, %v314
  %v320 = vunpack.c.l.s4 1983009808
  %v321 = vunpack.c.0.s8 %v320
  %v322 = vlaneseq
  %v323 = vshrl.u32 %v322, 7
  %v324 = vsub.s32 %v321, %v323
  %v325 = vrot.slane %v314, %v324
  %v327 = vunpack.c.l.s4 1983009808
  %v328 = vunpack.c.0.s8 %v327
  %v329 = vlaneseq
  %v330 = vshrl.u32 %v329, 7
  %v331 = vsub.s32 %v328, %v330
  %v332 = vrot.slane %v318, %v331
  %v333 = vcombine.high %v325, %v325
  %v334 = vcombine.high %v332, %v332
  %v336 = vunpack.c.l.s4 1983009808
  %v337 = vunpack.c.0.s8 %v336
  %v338 = vlaneseq
  %v339 = vshrl.u32 %v338, 7
  %v340 = vsub.s32 %v337, %v339
  %v341 = vrot.slane %v315, %v340
  %v342 = vcombine.high %v341, %v341
  %v349 = vpack.c.bf16 %v325, %v325
  %v350 = vpack.c.bf16 %v333, %v333
  %v351 = vpack.c.bf16 %v332, %v332
  %v352 = vpack.c.bf16 %v334, %v334
  %v353 = vpack.c.bf16 %v341, %v341
  %v354 = vpack.c.bf16 %v342, %v342
  %355 = vmatprep.subr.bf16.mxu0 0
  %356 = vmatpush1.bf16.msra.mxu0 %v116
  %357 = vmatprep.subr.bf16.mxu0 0
  %358 = vmatpush1.bf16.msra.mxu0 %v117
  %359 = vmatprep.subr.bf16.mxu0 0
  %360 = vmatpush1.bf16.msra.mxu0 %v118
  %361 = vmatprep.subr.bf16.mxu0 0
  %362 = vmatpush1.bf16.msra.mxu0 %v119
  %363 = vmatprep.subr.bf16.mxu0 0
  %364 = vmatpush1.bf16.msra.mxu0 %v120
  %365 = vmatprep.subr.bf16.mxu0 0
  %366 = vmatpush1.bf16.msra.mxu0 %v121
  %367 = vmatprep.subr.bf16.mxu0 0
  %368 = vmatpush1.bf16.msra.mxu0 %v122
  %369 = vmatprep.subr.bf16.mxu0 0
  %370 = vmatpush1.bf16.msra.mxu0 %v123
  %371 = vmatprep.subr.bf16.mxu0 0
  %372 = vmatpush1.bf16.msra.mxu0 %v124
  %373 = vmatprep.subr.bf16.mxu0 0
  %374 = vmatpush1.bf16.msra.mxu0 %v125
  %375 = vmatprep.subr.bf16.mxu0 0
  %376 = vmatpush1.bf16.msra.mxu0 %v126
  %377 = vmatprep.subr.bf16.mxu0 0
  %378 = vmatpush1.bf16.msra.mxu0 %v127
  %379 = vmatprep.subr.bf16.mxu0 0
  %380 = vmatpush1.bf16.msra.mxu0 %v128
  %381 = vmatprep.subr.bf16.mxu0 0
  %382 = vmatpush1.bf16.msra.mxu0 %v129
  %383 = vmatprep.subr.bf16.mxu0 0
  %384 = vmatpush1.bf16.msra.mxu0 %v130
  %385 = vmatprep.subr.bf16.mxu0 0
  %386 = vmatpush1.bf16.msra.mxu0 %v131
  %387 = vmatprep.mubr.bf16.mxu0 %v350
  %388 = vmatmul.mubr.bf16.gmra.mrb[0].mxu0 %v349
  %v389 = vpop.f32.mrb[0].mxu0
  %v390 = vadd.f32 %v187, %v389
  %v391 = vpop.f32.mrb[0].mxu0
  %v392 = vpop.f32.mrb[0].mxu0
  %v393 = vpop.f32.mrb[0].mxu0
  %394 = vdwg.mxu0
  %395 = vmatprep.subr.bf16.mxu0 0
  %396 = vmatpush1.bf16.msra.mxu0 %v132
  %397 = vmatprep.subr.bf16.mxu0 0
  %398 = vmatpush1.bf16.msra.mxu0 %v133
  %399 = vmatprep.subr.bf16.mxu0 0
  %400 = vmatpush1.bf16.msra.mxu0 %v134
  %401 = vmatprep.subr.bf16.mxu0 0
  %402 = vmatpush1.bf16.msra.mxu0 %v135
  %403 = vmatprep.subr.bf16.mxu0 0
  %404 = vmatpush1.bf16.msra.mxu0 %v136
  %405 = vmatprep.subr.bf16.mxu0 0
  %406 = vmatpush1.bf16.msra.mxu0 %v137
  %407 = vmatprep.subr.bf16.mxu0 0
  %408 = vmatpush1.bf16.msra.mxu0 %v138
  %409 = vmatprep.subr.bf16.mxu0 0
  %410 = vmatpush1.bf16.msra.mxu0 %v139
  %411 = vmatprep.subr.bf16.mxu0 0
  %412 = vmatpush1.bf16.msra.mxu0 %v140
  %413 = vmatprep.subr.bf16.mxu0 0
  %414 = vmatpush1.bf16.msra.mxu0 %v141
  %415 = vmatprep.subr.bf16.mxu0 0
  %416 = vmatpush1.bf16.msra.mxu0 %v142
  %417 = vmatprep.subr.bf16.mxu0 0
  %418 = vmatpush1.bf16.msra.mxu0 %v143
  %419 = vmatprep.subr.bf16.mxu0 0
  %420 = vmatpush1.bf16.msra.mxu0 %v144
  %421 = vmatprep.subr.bf16.mxu0 0
  %422 = vmatpush1.bf16.msra.mxu0 %v145
  %423 = vmatprep.subr.bf16.mxu0 0
  %424 = vmatpush1.bf16.msra.mxu0 %v146
  %425 = vmatprep.subr.bf16.mxu0 0
  %426 = vmatpush1.bf16.msra.mxu0 %v147
  %427 = vmatprep.mubr.bf16.mxu0 %v352
  %428 = vmatmul.mubr.bf16.gmra.mrb[0].mxu0 %v351
  %v429 = vpop.f32.mrb[0].mxu0
  %v430 = vadd.f32 %v390, %v429
  %v431 = vpop.f32.mrb[0].mxu0
  %v432 = vpop.f32.mrb[0].mxu0
  %v433 = vpop.f32.mrb[0].mxu0
  %434 = vdwg.mxu0
  %435 = vmatprep.subr.bf16.mxu0 0
  %436 = vmatpush1.bf16.msra.mxu0 %v148
  %437 = vmatprep.subr.bf16.mxu0 0
  %438 = vmatpush1.bf16.msra.mxu0 %v149
  %439 = vmatprep.subr.bf16.mxu0 0
  %440 = vmatpush1.bf16.msra.mxu0 %v150
  %441 = vmatprep.subr.bf16.mxu0 0
  %442 = vmatpush1.bf16.msra.mxu0 %v151
  %443 = vmatprep.subr.bf16.mxu0 0
  %444 = vmatpush1.bf16.msra.mxu0 %v152
  %445 = vmatprep.subr.bf16.mxu0 0
  %446 = vmatpush1.bf16.msra.mxu0 %v153
  %447 = vmatprep.subr.bf16.mxu0 0
  %448 = vmatpush1.bf16.msra.mxu0 %v154
  %449 = vmatprep.subr.bf16.mxu0 0
  %450 = vmatpush1.bf16.msra.mxu0 %v155
  %451 = vmatprep.subr.bf16.mxu0 0
  %452 = vmatpush1.bf16.msra.mxu0 %v156
  %453 = vmatprep.subr.bf16.mxu0 0
  %454 = vmatpush1.bf16.msra.mxu0 %v157
  %455 = vmatprep.subr.bf16.mxu0 0
  %456 = vmatpush1.bf16.msra.mxu0 %v158
  %457 = vmatprep.subr.bf16.mxu0 0
  %458 = vmatpush1.bf16.msra.mxu0 %v159
  %459 = vmatprep.subr.bf16.mxu0 0
  %460 = vmatpush1.bf16.msra.mxu0 %v160
  %461 = vmatprep.subr.bf16.mxu0 0
  %462 = vmatpush1.bf16.msra.mxu0 %v161
  %463 = vmatprep.subr.bf16.mxu0 0
  %464 = vmatpush1.bf16.msra.mxu0 %v162
  %465 = vmatprep.subr.bf16.mxu0 0
  %466 = vmatpush1.bf16.msra.mxu0 %v163
  %467 = vmatprep.mubr.bf16.mxu0 %v354
  %468 = vmatmul.mubr.bf16.gmra.mrb[0].mxu0 %v353
  %v469 = vpop.f32.mrb[0].mxu0
  %v470 = vadd.f32 %v430, %v469
  %v471 = vpop.f32.mrb[0].mxu0
  %v472 = vpop.f32.mrb[0].mxu0
  %v473 = vpop.f32.mrb[0].mxu0
  %474 = vdwg.mxu0
  %v475 = vmax.f32 %v470, 0.0
  %476 = vst [vmem:[%s4] sm:$0xff] %v312
  %477 = vst [vmem:[%s4 + $0x8] sm:$0xf] %v313
  %478 = vst [vmem:[%s4 + $0xc] sm:$0x3] %v475
  %479 = vst [vmem:[%s4 + $0xe] sm:$0x3] 0.0
  %vm480 = vcmask 1045504
  %v481 = vsel %vm480, %v312, 0.0
  %v482 = vrot.slane %v481, 4
  %v483 = vadd.f32 %v481, %v482
  %v484 = vrot.slane %v483, 2
  %v485 = vadd.f32 %v483, %v484
  %v486 = vrot.slane %v485, 1
  %v487 = vadd.f32 %v485, %v486
  %v488 = vrcp.pop 6.0
  %v489 = vmul.f32 %v487, %v488
  %v490 = vsub.f32 %v312, %v489
  %491 = vmatprep.subr.mxu0 0.0
  %492 = vmatpush1.xpose.msra.mxu0 %v490
  %493 = vmatprep.subr.mxu0 0.0
  %494 = vmatpush1.xpose.msra.mxu0 0.0
  %495 = vmatprep.subr.mxu0 0.0
  %496 = vmatpush1.xpose.msra.mxu0 0.0
  %497 = vmatprep.subr.mxu0 0.0
  %498 = vmatpush1.xpose.msra.mxu0 0.0
  %499 = vmatprep.subr.mxu0 0.0
  %500 = vmatpush1.xpose.msra.mxu0 0.0
  %501 = vmatprep.subr.mxu0 0.0
  %502 = vmatpush1.xpose.msra.mxu0 0.0
  %503 = vmatprep.subr.mxu0 0.0
  %504 = vmatpush1.xpose.msra.mxu0 0.0
  %505 = vmatprep.subr.mxu0 0.0
  %506 = vmatpush1.xpose.msra.mxu0 0.0
  %507 = vmatprep.subr.mxu0 0.0
  %508 = vmatpush1.xpose.msra.mxu0 0.0
  %509 = vmatprep.subr.mxu0 0.0
  %510 = vmatpush1.xpose.msra.mxu0 0.0
  %511 = vmatprep.subr.mxu0 0.0
  %512 = vmatpush1.xpose.msra.mxu0 0.0
  %513 = vmatprep.subr.mxu0 0.0
  %514 = vmatpush1.xpose.msra.mxu0 0.0
  %515 = vmatprep.subr.mxu0 0.0
  %516 = vmatpush1.xpose.msra.mxu0 0.0
  %517 = vmatprep.subr.mxu0 0.0
  %518 = vmatpush1.xpose.msra.mxu0 0.0
  %519 = vmatprep.subr.mxu0 0.0
  %520 = vmatpush1.xpose.msra.mxu0 0.0
  %521 = vmatprep.subr.mxu0 0.0
  %522 = vmatpush1.xpose.msra.mxu0 0.0
  %523 = vmatprep.subr.mxu0 0.0
  %524 = vmatpush1.xpose.msra.mxu0 0.0
  %525 = vmatprep.subr.mxu0 0.0
  %526 = vmatpush1.xpose.msra.mxu0 0.0
  %527 = vmatprep.subr.mxu0 0.0
  %528 = vmatpush1.xpose.msra.mxu0 0.0
  %529 = vmatprep.subr.mxu0 0.0
  %530 = vmatpush1.xpose.msra.mxu0 0.0
  %531 = vmatprep.subr.mxu0 0.0
  %532 = vmatpush1.xpose.msra.mxu0 0.0
  %533 = vmatprep.subr.mxu0 0.0
  %534 = vmatpush1.xpose.msra.mxu0 0.0
  %535 = vmatprep.subr.mxu0 0.0
  %536 = vmatpush1.xpose.msra.mxu0 0.0
  %537 = vmatprep.subr.mxu0 0.0
  %538 = vmatpush1.xpose.msra.mxu0 0.0
  %539 = vmatprep.subr.mxu0 0.0
  %540 = vmatpush1.xpose.msra.mxu0 0.0
  %541 = vmatprep.subr.mxu0 0.0
  %542 = vmatpush1.xpose.msra.mxu0 0.0
  %543 = vmatprep.subr.mxu0 0.0
  %544 = vmatpush1.xpose.msra.mxu0 0.0
  %545 = vmatprep.subr.mxu0 0.0
  %546 = vmatpush1.xpose.msra.mxu0 0.0
  %547 = vmatprep.subr.mxu0 0.0
  %548 = vmatpush1.xpose.msra.mxu0 0.0
  %549 = vmatprep.subr.mxu0 0.0
  %550 = vmatpush1.xpose.msra.mxu0 0.0
  %551 = vmatprep.subr.mxu0 0.0
  %552 = vmatpush1.xpose.msra.mxu0 0.0
  %553 = vmatprep.subr.mxu0 0.0
  %554 = vmatpush1.xpose.msra.mxu0 0.0
  %555 = vmatprep.mubr.f32.mxu0 0.0
  %556 = vmatmul.mubr.f32.gmra.mrb[0].mxu0 %v490
  %v557 = vpop.f32.mrb[0].mxu0
  %v558 = vadd.f32 0.0, %v557
  %v559 = vpop.f32.mrb[0].mxu0
  %560 = vdwg.mxu0
  %vm561 = vcmask 46080
  %562 = vst.msk [vmem:[%s5] sm:$0x3f] %vm561, %v558
  %vm565 = vcmask 1041408
  %v566 = vrot.slane %v312, 6
  %v567 = vrot.slane %v313, 6
  %v568 = vsel %vm565, %v566, %v567
  %v570 = vsel %vm480, %v568, 0.0
  %v571 = vrot.slane %v570, 4
  %v572 = vadd.f32 %v570, %v571
  %v573 = vrot.slane %v572, 2
  %v574 = vadd.f32 %v572, %v573
  %v575 = vrot.slane %v574, 1
  %v576 = vadd.f32 %v574, %v575
  %v577 = vmul.f32 %v576, %v488
  %v578 = vsub.f32 %v312, %v577
  %v579 = vsub.f32 %v313, %v577
  %v582 = vrot.slane %v578, 6
  %v583 = vrot.slane %v579, 6
  %v584 = vsel %vm565, %v582, %v583
  %586 = vmatprep.subr.mxu0 0.0
  %587 = vmatpush1.xpose.msra.mxu0 %v584
  %588 = vmatprep.subr.mxu0 0.0
  %589 = vmatpush1.xpose.msra.mxu0 0.0
  %590 = vmatprep.subr.mxu0 0.0
  %591 = vmatpush1.xpose.msra.mxu0 0.0
  %592 = vmatprep.subr.mxu0 0.0
  %593 = vmatpush1.xpose.msra.mxu0 0.0
  %594 = vmatprep.subr.mxu0 0.0
  %595 = vmatpush1.xpose.msra.mxu0 0.0
  %596 = vmatprep.subr.mxu0 0.0
  %597 = vmatpush1.xpose.msra.mxu0 0.0
  %598 = vmatprep.subr.mxu0 0.0
  %599 = vmatpush1.xpose.msra.mxu0 0.0
  %600 = vmatprep.subr.mxu0 0.0
  %601 = vmatpush1.xpose.msra.mxu0 0.0
  %602 = vmatprep.subr.mxu0 0.0
  %603 = vmatpush1.xpose.msra.mxu0 0.0
  %604 = vmatprep.subr.mxu0 0.0
  %605 = vmatpush1.xpose.msra.mxu0 0.0
  %606 = vmatprep.subr.mxu0 0.0
  %607 = vmatpush1.xpose.msra.mxu0 0.0
  %608 = vmatprep.subr.mxu0 0.0
  %609 = vmatpush1.xpose.msra.mxu0 0.0
  %610 = vmatprep.subr.mxu0 0.0
  %611 = vmatpush1.xpose.msra.mxu0 0.0
  %612 = vmatprep.subr.mxu0 0.0
  %613 = vmatpush1.xpose.msra.mxu0 0.0
  %614 = vmatprep.subr.mxu0 0.0
  %615 = vmatpush1.xpose.msra.mxu0 0.0
  %616 = vmatprep.subr.mxu0 0.0
  %617 = vmatpush1.xpose.msra.mxu0 0.0
  %618 = vmatprep.subr.mxu0 0.0
  %619 = vmatpush1.xpose.msra.mxu0 0.0
  %620 = vmatprep.subr.mxu0 0.0
  %621 = vmatpush1.xpose.msra.mxu0 0.0
  %622 = vmatprep.subr.mxu0 0.0
  %623 = vmatpush1.xpose.msra.mxu0 0.0
  %624 = vmatprep.subr.mxu0 0.0
  %625 = vmatpush1.xpose.msra.mxu0 0.0
  %626 = vmatprep.subr.mxu0 0.0
  %627 = vmatpush1.xpose.msra.mxu0 0.0
  %628 = vmatprep.subr.mxu0 0.0
  %629 = vmatpush1.xpose.msra.mxu0 0.0
  %630 = vmatprep.subr.mxu0 0.0
  %631 = vmatpush1.xpose.msra.mxu0 0.0
  %632 = vmatprep.subr.mxu0 0.0
  %633 = vmatpush1.xpose.msra.mxu0 0.0
  %634 = vmatprep.subr.mxu0 0.0
  %635 = vmatpush1.xpose.msra.mxu0 0.0
  %636 = vmatprep.subr.mxu0 0.0
  %637 = vmatpush1.xpose.msra.mxu0 0.0
  %638 = vmatprep.subr.mxu0 0.0
  %639 = vmatpush1.xpose.msra.mxu0 0.0
  %640 = vmatprep.subr.mxu0 0.0
  %641 = vmatpush1.xpose.msra.mxu0 0.0
  %642 = vmatprep.subr.mxu0 0.0
  %643 = vmatpush1.xpose.msra.mxu0 0.0
  %644 = vmatprep.subr.mxu0 0.0
  %645 = vmatpush1.xpose.msra.mxu0 0.0
  %646 = vmatprep.subr.mxu0 0.0
  %647 = vmatpush1.xpose.msra.mxu0 0.0
  %648 = vmatprep.subr.mxu0 0.0
  %649 = vmatpush1.xpose.msra.mxu0 0.0
  %650 = vmatprep.mubr.f32.mxu0 0.0
  %651 = vmatmul.mubr.f32.gmra.mrb[0].mxu0 %v584
  %v652 = vpop.f32.mrb[0].mxu0
  %v653 = vadd.f32 0.0, %v652
  %v654 = vpop.f32.mrb[0].mxu0
  %655 = vdwg.mxu0
  %s656 = scalar_lea.vmem %s5, 8
  %657 = vst.msk [vmem:[%s656] sm:$0x3f] %vm561, %v653
  // Predicated region
  $region18: #{my_model_forward.2} parent=0 // pred_check
    _
  $region19: #{my_model_forward.2} parent=0 // pred_check_branch
    %659 = sbr.rel (0) target = $region21
  $region20: #{my_model_forward.2} parent=0 // pred_region
    _
  $region21: #{my_model_forward.2} parent=0 // pred_fallthru
    _
  // Predicated region
  $region22: #{my_model_forward.2} parent=0 // pred_check
    _
  $region23: #{my_model_forward.2} parent=0 // pred_check_branch
    %661 = sbr.rel (0) target = $region25
  $region24: #{my_model_forward.2} parent=0 // pred_region
    _
  $region25: #{my_model_forward.2} parent=0 // pred_fallthru
    _
  // Predicated region
  $region26: #{my_model_forward.2} parent=0 // pred_check
    _
  $region27: #{my_model_forward.2} parent=0 // pred_check_branch
    %663 = sbr.rel (0) target = $region29
  $region28: #{my_model_forward.2} parent=0 // pred_region
    _
  $region29: #{my_model_forward.2} parent=0 // pred_fallthru
    _
  // Predicated region
  $region30: #{my_model_forward.2} parent=0 // pred_check
    _
  $region31: #{my_model_forward.2} parent=0 // pred_check_branch
    %665 = sbr.rel (0) target = $region33
  $region32: #{my_model_forward.2} parent=0 // pred_region
    _
  $region33: #{my_model_forward.2} parent=0 // pred_fallthru
    _

// kernel: my_model_forward.3
$region0: #{my_model_forward.3}
  #allocation0 [shape = 'u32[]', space=smem, size = 0x4, offset = 0x4, fixed_abs, tag = 'smem constant byte address 0x4 - core index']
  #allocation1 [shape = 'u32[144,128]{1,0:T(1,128)}', space=vmem, size = 0x12000, scoped, tag = 'internal scratch']
  %s0 = inlined_call_operand.vmem [shape: f32[16,128], index: 0, kind: input, shape index: {}]
  %s1 = inlined_call_operand.vmem [shape: f32[2,6], index: 1, kind: input, shape index: {}]
  %s2 = inlined_call_operand.vmem [shape: f32[2,6,6], index: 2, kind: input, shape index: {}]
  %s3 = inlined_call_operand.vmem [shape: f32[8,128], index: 3, kind: output, shape index: {}]
  %s4 = sld [smem:[#allocation0]]
  $region22: #{my_model_forward.3} parent=0
    _
  %s6 = ssub.s32 1, %s4
  %s7 = scalar_select 0, %s6, %s4
  // Predicated region
  $region2: #{my_model_forward.3} parent=0 // pred_check
    _
  $region3: #{my_model_forward.3} parent=0 // pred_check_branch
    %9 = sbr.rel (0) target = $region5
  $region4: #{my_model_forward.3} parent=0 // pred_region
    _
  $region5: #{my_model_forward.3} parent=0 // pred_fallthru
    _
  // Predicated region
  $region6: #{my_model_forward.3} parent=0 // pred_check
    _
  $region7: #{my_model_forward.3} parent=0 // pred_check_branch
    %11 = sbr.rel (0) target = $region9
  $region8: #{my_model_forward.3} parent=0 // pred_region
    _
  $region9: #{my_model_forward.3} parent=0 // pred_fallthru
    _
  // Predicated region
  $region10: #{my_model_forward.3} parent=0 // pred_check
    _
  $region11: #{my_model_forward.3} parent=0 // pred_check_branch
    %13 = sbr.rel (0) target = $region13
  $region12: #{my_model_forward.3} parent=0 // pred_region
    _
  $region13: #{my_model_forward.3} parent=0 // pred_fallthru
    _
  %v14 = vld [vmem:[%s0] sm:$0xff]
  %v15 = vld [vmem:[%s0 + $0x8] sm:$0xff]
  %v16 = vld [vmem:[%s1] sm:$0x3]
  %v17 = vlaneseq
  %v18 = vand.u32 %v17, 127
  %vm19 = vcmp.ge.s32.totalorder %v18, 1
  %vm20 = vcmask 1045504
  %v21 = vsel %vm20, %v14, 0.0
  %v22 = vrot.slane %v21, 4
  %v23 = vadd.f32 %v21, %v22
  %v24 = vrot.slane %v23, 2
  %v25 = vadd.f32 %v23, %v24
  %v26 = vrot.slane %v25, 1
  %v27 = vadd.f32 %v25, %v26
  %v28 = vrcp.pop 6.0
  %v29 = vmul.f32 %v27, %v28
  %v30 = vsub.f32 %v14, %v29
  %v31 = vmax.f32 %v16, 1e-12
  %v32 = vrcp.pop %v31
  %v33 = vmul.f32 1.0, %v32
  %v34 = vsel %vm19, %v33, 0.0
  %v35 = vld [vmem:[%s2] sm:$0x3f]
  %v36 = vlaneseq
  %v37 = vshrl.u32 %v36, 7
  %v38 = vsub.s32 0, %v37
  %v39 = vrot.slane %v34, %v38
  %v40 = vmul.f32 %v35, %v39
  %vm41 = vcmask 48128
  %v43 = vsel %vm41, %v40, 0
  %v46 = vsel %vm41, %v35, 0
  %48 = vmatprep.subr.mxu0 0.0
  %49 = vmatpush1.xpose.msra.mxu0 %v46
  %50 = vmatprep.subr.mxu0 0.0
  %51 = vmatpush1.xpose.msra.mxu0 0.0
  %52 = vmatprep.subr.mxu0 0.0
  %53 = vmatpush1.xpose.msra.mxu0 0.0
  %54 = vmatprep.subr.mxu0 0.0
  %55 = vmatpush1.xpose.msra.mxu0 0.0
  %56 = vmatprep.subr.mxu0 0.0
  %57 = vmatpush1.xpose.msra.mxu0 0.0
  %58 = vmatprep.subr.mxu0 0.0
  %59 = vmatpush1.xpose.msra.mxu0 0.0
  %60 = vmatprep.subr.mxu0 0.0
  %61 = vmatpush1.xpose.msra.mxu0 0.0
  %62 = vmatprep.subr.mxu0 0.0
  %63 = vmatpush1.xpose.msra.mxu0 0.0
  %64 = vmatprep.subr.mxu0 0.0
  %65 = vmatpush1.xpose.msra.mxu0 0.0
  %66 = vmatprep.subr.mxu0 0.0
  %67 = vmatpush1.xpose.msra.mxu0 0.0
  %68 = vmatprep.subr.mxu0 0.0
  %69 = vmatpush1.xpose.msra.mxu0 0.0
  %70 = vmatprep.subr.mxu0 0.0
  %71 = vmatpush1.xpose.msra.mxu0 0.0
  %72 = vmatprep.subr.mxu0 0.0
  %73 = vmatpush1.xpose.msra.mxu0 0.0
  %74 = vmatprep.subr.mxu0 0.0
  %75 = vmatpush1.xpose.msra.mxu0 0.0
  %76 = vmatprep.subr.mxu0 0.0
  %77 = vmatpush1.xpose.msra.mxu0 0.0
  %78 = vmatprep.subr.mxu0 0.0
  %79 = vmatpush1.xpose.msra.mxu0 0.0
  %80 = vmatprep.subr.mxu0 0.0
  %81 = vmatpush1.xpose.msra.mxu0 0.0
  %82 = vmatprep.subr.mxu0 0.0
  %83 = vmatpush1.xpose.msra.mxu0 0.0
  %84 = vmatprep.subr.mxu0 0.0
  %85 = vmatpush1.xpose.msra.mxu0 0.0
  %86 = vmatprep.subr.mxu0 0.0
  %87 = vmatpush1.xpose.msra.mxu0 0.0
  %88 = vmatprep.subr.mxu0 0.0
  %89 = vmatpush1.xpose.msra.mxu0 0.0
  %90 = vmatprep.subr.mxu0 0.0
  %91 = vmatpush1.xpose.msra.mxu0 0.0
  %92 = vmatprep.subr.mxu0 0.0
  %93 = vmatpush1.xpose.msra.mxu0 0.0
  %94 = vmatprep.subr.mxu0 0.0
  %95 = vmatpush1.xpose.msra.mxu0 0.0
  %96 = vmatprep.subr.mxu0 0.0
  %97 = vmatpush1.xpose.msra.mxu0 0.0
  %98 = vmatprep.subr.mxu0 0.0
  %99 = vmatpush1.xpose.msra.mxu0 0.0
  %100 = vmatprep.subr.mxu0 0.0
  %101 = vmatpush1.xpose.msra.mxu0 0.0
  %102 = vmatprep.subr.mxu0 0.0
  %103 = vmatpush1.xpose.msra.mxu0 0.0
  %104 = vmatprep.subr.mxu0 0.0
  %105 = vmatpush1.xpose.msra.mxu0 0.0
  %106 = vmatprep.subr.mxu0 0.0
  %107 = vmatpush1.xpose.msra.mxu0 0.0
  %108 = vmatprep.subr.mxu0 0.0
  %109 = vmatpush1.xpose.msra.mxu0 0.0
  %110 = vmatprep.subr.mxu0 0.0
  %111 = vmatpush1.xpose.msra.mxu0 0.0
  %112 = vmatprep.mubr.f32.mxu0 0.0
  %113 = vmatmul.mubr.f32.gmra.mrb[0].mxu0 %v43
  %v114 = vpop.f32.mrb[0].mxu0
  %v115 = vadd.f32 0.0, %v114
  %v116 = vpop.f32.mrb[0].mxu0
  %117 = vdwg.mxu0
  %v118 = vsub.f32 %v15, %v29
  %v120 = vrot.slane %v118, 4
  %122 = vmatprep.subr.mxu0 0.0
  %123 = vmatpush1.xpose.msra.mxu0 %v30
  %124 = vmatprep.subr.mxu0 0.0
  %125 = vmatpush1.xpose.msra.mxu0 0.0
  %126 = vmatprep.subr.mxu0 0.0
  %127 = vmatpush1.xpose.msra.mxu0 0.0
  %128 = vmatprep.subr.mxu0 0.0
  %129 = vmatpush1.xpose.msra.mxu0 0.0
  %130 = vmatprep.subr.mxu0 0.0
  %131 = vmatpush1.xpose.msra.mxu0 0.0
  %132 = vmatprep.subr.mxu0 0.0
  %133 = vmatpush1.xpose.msra.mxu0 0.0
  %134 = vmatprep.subr.mxu0 0.0
  %135 = vmatpush1.xpose.msra.mxu0 0.0
  %136 = vmatprep.subr.mxu0 0.0
  %137 = vmatpush1.xpose.msra.mxu0 0.0
  %138 = vmatprep.subr.mxu0 0.0
  %139 = vmatpush1.xpose.msra.mxu0 0.0
  %140 = vmatprep.subr.mxu0 0.0
  %141 = vmatpush1.xpose.msra.mxu0 0.0
  %142 = vmatprep.subr.mxu0 0.0
  %143 = vmatpush1.xpose.msra.mxu0 0.0
  %144 = vmatprep.subr.mxu0 0.0
  %145 = vmatpush1.xpose.msra.mxu0 0.0
  %146 = vmatprep.subr.mxu0 0.0
  %147 = vmatpush1.xpose.msra.mxu0 0.0
  %148 = vmatprep.subr.mxu0 0.0
  %149 = vmatpush1.xpose.msra.mxu0 0.0
  %150 = vmatprep.subr.mxu0 0.0
  %151 = vmatpush1.xpose.msra.mxu0 0.0
  %152 = vmatprep.subr.mxu0 0.0
  %153 = vmatpush1.xpose.msra.mxu0 0.0
  %154 = vmatprep.subr.mxu0 0.0
  %155 = vmatpush1.xpose.msra.mxu0 0.0
  %156 = vmatprep.subr.mxu0 0.0
  %157 = vmatpush1.xpose.msra.mxu0 0.0
  %158 = vmatprep.subr.mxu0 0.0
  %159 = vmatpush1.xpose.msra.mxu0 0.0
  %160 = vmatprep.subr.mxu0 0.0
  %161 = vmatpush1.xpose.msra.mxu0 0.0
  %162 = vmatprep.subr.mxu0 0.0
  %163 = vmatpush1.xpose.msra.mxu0 0.0
  %164 = vmatprep.subr.mxu0 0.0
  %165 = vmatpush1.xpose.msra.mxu0 0.0
  %166 = vmatprep.subr.mxu0 0.0
  %167 = vmatpush1.xpose.msra.mxu0 0.0
  %168 = vmatprep.subr.mxu0 0.0
  %169 = vmatpush1.xpose.msra.mxu0 0.0
  %170 = vmatprep.subr.mxu0 0.0
  %171 = vmatpush1.xpose.msra.mxu0 0.0
  %172 = vmatprep.subr.mxu0 0.0
  %173 = vmatpush1.xpose.msra.mxu0 0.0
  %174 = vmatprep.subr.mxu0 0.0
  %175 = vmatpush1.xpose.msra.mxu0 0.0
  %176 = vmatprep.subr.mxu0 0.0
  %177 = vmatpush1.xpose.msra.mxu0 0.0
  %178 = vmatprep.subr.mxu0 0.0
  %179 = vmatpush1.xpose.msra.mxu0 0.0
  %180 = vmatprep.subr.mxu0 0.0
  %181 = vmatpush1.xpose.msra.mxu0 0.0
  %182 = vmatprep.subr.mxu0 0.0
  %183 = vmatpush1.xpose.msra.mxu0 0.0
  %184 = vmatprep.subr.mxu0 0.0
  %185 = vmatpush1.xpose.msra.mxu0 0.0
  %186 = vmatprep.mubr.f32.mxu0 0.0
  %187 = vmatmul.mubr.f32.gmra.mrb[0].mxu0 %v120
  %v188 = vpop.f32.mrb[0].mxu0
  %v189 = vadd.f32 0.0, %v188
  %v190 = vpop.f32.mrb[0].mxu0
  %191 = vdwg.mxu0
  %v193 = vsel %vm41, %v189, 0
  %v196 = vsel %vm20, %v115, 0
  %198 = vmatprep.subr.mxu0 0.0
  %199 = vmatpush1.msra.mxu0 %v196
  %200 = vmatprep.subr.mxu0 0.0
  %201 = vmatpush1.msra.mxu0 0.0
  %202 = vmatprep.subr.mxu0 0.0
  %203 = vmatpush1.msra.mxu0 0.0
  %204 = vmatprep.subr.mxu0 0.0
  %205 = vmatpush1.msra.mxu0 0.0
  %206 = vmatprep.subr.mxu0 0.0
  %207 = vmatpush1.msra.mxu0 0.0
  %208 = vmatprep.subr.mxu0 0.0
  %209 = vmatpush1.msra.mxu0 0.0
  %210 = vmatprep.subr.mxu0 0.0
  %211 = vmatpush1.msra.mxu0 0.0
  %212 = vmatprep.subr.mxu0 0.0
  %213 = vmatpush1.msra.mxu0 0.0
  %214 = vmatprep.subr.mxu0 0.0
  %215 = vmatpush1.msra.mxu0 0.0
  %216 = vmatprep.subr.mxu0 0.0
  %217 = vmatpush1.msra.mxu0 0.0
  %218 = vmatprep.subr.mxu0 0.0
  %219 = vmatpush1.msra.mxu0 0.0
  %220 = vmatprep.subr.mxu0 0.0
  %221 = vmatpush1.msra.mxu0 0.0
  %222 = vmatprep.subr.mxu0 0.0
  %223 = vmatpush1.msra.mxu0 0.0
  %224 = vmatprep.subr.mxu0 0.0
  %225 = vmatpush1.msra.mxu0 0.0
  %226 = vmatprep.subr.mxu0 0.0
  %227 = vmatpush1.msra.mxu0 0.0
  %228 = vmatprep.subr.mxu0 0.0
  %229 = vmatpush1.msra.mxu0 0.0
  %230 = vmatprep.subr.mxu0 0.0
  %231 = vmatpush1.msra.mxu0 0.0
  %232 = vmatprep.subr.mxu0 0.0
  %233 = vmatpush1.msra.mxu0 0.0
  %234 = vmatprep.subr.mxu0 0.0
  %235 = vmatpush1.msra.mxu0 0.0
  %236 = vmatprep.subr.mxu0 0.0
  %237 = vmatpush1.msra.mxu0 0.0
  %238 = vmatprep.subr.mxu0 0.0
  %239 = vmatpush1.msra.mxu0 0.0
  %240 = vmatprep.subr.mxu0 0.0
  %241 = vmatpush1.msra.mxu0 0.0
  %242 = vmatprep.subr.mxu0 0.0
  %243 = vmatpush1.msra.mxu0 0.0
  %244 = vmatprep.subr.mxu0 0.0
  %245 = vmatpush1.msra.mxu0 0.0
  %246 = vmatprep.subr.mxu0 0.0
  %247 = vmatpush1.msra.mxu0 0.0
  %248 = vmatprep.subr.mxu0 0.0
  %249 = vmatpush1.msra.mxu0 0.0
  %250 = vmatprep.subr.mxu0 0.0
  %251 = vmatpush1.msra.mxu0 0.0
  %252 = vmatprep.subr.mxu0 0.0
  %253 = vmatpush1.msra.mxu0 0.0
  %254 = vmatprep.subr.mxu0 0.0
  %255 = vmatpush1.msra.mxu0 0.0
  %256 = vmatprep.subr.mxu0 0.0
  %257 = vmatpush1.msra.mxu0 0.0
  %258 = vmatprep.subr.mxu0 0.0
  %259 = vmatpush1.msra.mxu0 0.0
  %260 = vmatprep.subr.mxu0 0.0
  %261 = vmatpush1.msra.mxu0 0.0
  %262 = vmatprep.mubr.f32.mxu0 0.0
  %263 = vmatmul.mubr.f32.gmra.mrb[0].mxu0 %v193
  %v264 = vpop.f32.mrb[0].mxu0
  %v265 = vadd.f32 0.0, %v264
  %v266 = vpop.f32.mrb[0].mxu0
  %267 = vdwg.mxu0
  %v269 = vsel %vm41, %v265, 0
  %v272 = vsel %vm20, %v30, 0
  %274 = vmatprep.subr.mxu0 0.0
  %275 = vmatpush1.msra.mxu0 %v272
  %276 = vmatprep.subr.mxu0 0.0
  %277 = vmatpush1.msra.mxu0 0.0
  %278 = vmatprep.subr.mxu0 0.0
  %279 = vmatpush1.msra.mxu0 0.0
  %280 = vmatprep.subr.mxu0 0.0
  %281 = vmatpush1.msra.mxu0 0.0
  %282 = vmatprep.subr.mxu0 0.0
  %283 = vmatpush1.msra.mxu0 0.0
  %284 = vmatprep.subr.mxu0 0.0
  %285 = vmatpush1.msra.mxu0 0.0
  %286 = vmatprep.subr.mxu0 0.0
  %287 = vmatpush1.msra.mxu0 0.0
  %288 = vmatprep.subr.mxu0 0.0
  %289 = vmatpush1.msra.mxu0 0.0
  %290 = vmatprep.subr.mxu0 0.0
  %291 = vmatpush1.msra.mxu0 0.0
  %292 = vmatprep.subr.mxu0 0.0
  %293 = vmatpush1.msra.mxu0 0.0
  %294 = vmatprep.subr.mxu0 0.0
  %295 = vmatpush1.msra.mxu0 0.0
  %296 = vmatprep.subr.mxu0 0.0
  %297 = vmatpush1.msra.mxu0 0.0
  %298 = vmatprep.subr.mxu0 0.0
  %299 = vmatpush1.msra.mxu0 0.0
  %300 = vmatprep.subr.mxu0 0.0
  %301 = vmatpush1.msra.mxu0 0.0
  %302 = vmatprep.subr.mxu0 0.0
  %303 = vmatpush1.msra.mxu0 0.0
  %304 = vmatprep.subr.mxu0 0.0
  %305 = vmatpush1.msra.mxu0 0.0
  %306 = vmatprep.subr.mxu0 0.0
  %307 = vmatpush1.msra.mxu0 0.0
  %308 = vmatprep.subr.mxu0 0.0
  %309 = vmatpush1.msra.mxu0 0.0
  %310 = vmatprep.subr.mxu0 0.0
  %311 = vmatpush1.msra.mxu0 0.0
  %312 = vmatprep.subr.mxu0 0.0
  %313 = vmatpush1.msra.mxu0 0.0
  %314 = vmatprep.subr.mxu0 0.0
  %315 = vmatpush1.msra.mxu0 0.0
  %316 = vmatprep.subr.mxu0 0.0
  %317 = vmatpush1.msra.mxu0 0.0
  %318 = vmatprep.subr.mxu0 0.0
  %319 = vmatpush1.msra.mxu0 0.0
  %320 = vmatprep.subr.mxu0 0.0
  %321 = vmatpush1.msra.mxu0 0.0
  %322 = vmatprep.subr.mxu0 0.0
  %323 = vmatpush1.msra.mxu0 0.0
  %324 = vmatprep.subr.mxu0 0.0
  %325 = vmatpush1.msra.mxu0 0.0
  %326 = vmatprep.subr.mxu0 0.0
  %327 = vmatpush1.msra.mxu0 0.0
  %328 = vmatprep.subr.mxu0 0.0
  %329 = vmatpush1.msra.mxu0 0.0
  %330 = vmatprep.subr.mxu0 0.0
  %331 = vmatpush1.msra.mxu0 0.0
  %332 = vmatprep.subr.mxu0 0.0
  %333 = vmatpush1.msra.mxu0 0.0
  %334 = vmatprep.subr.mxu0 0.0
  %335 = vmatpush1.msra.mxu0 0.0
  %336 = vmatprep.subr.mxu0 0.0
  %337 = vmatpush1.msra.mxu0 0.0
  %338 = vmatprep.mubr.f32.mxu0 0.0
  %339 = vmatmul.mubr.f32.gmra.mrb[0].mxu0 %v269
  %v340 = vpop.f32.mrb[0].mxu0
  %v341 = vadd.f32 %v29, %v340
  %v342 = vpop.f32.mrb[0].mxu0
  %343 = vdwg.mxu0
  %v345 = vrot.slane %v341, 4
  %v347 = vmul.f32 %v15, %v345
  %vm348 = vcmask 1045508
  %v349 = vsel %vm348, %v347, 0.0
  %350 = vadd.xlane.f32.xlu0 %v349
  %v351 = vpop.xlane.xlu0 %350
  %v352 = vmul.f32 %v15, %v15
  %v353 = vsel %vm348, %v352, 0.0
  %354 = vadd.xlane.f32.xlu0 %v353
  %v355 = vpop.xlane.xlu0 %354
  %v356 = vadd.f32 %v355, 1e-12
  %v357 = vrsqrt.pop %v356
  %v358 = vmul.f32 %v356, %v357
  %vm359 = vcmp.eq.f32.partialorder %v356, inf
  %v360 = vsel %vm359, %v356, %v358
  %vm361 = vcmp.eq.f32.partialorder %v356, 0.0
  %v362 = vand.u32 %v356, 2147483648
  %v363 = vsel %vm361, %v362, %v360
  %v364 = vmul.f32 %v341, %v341
  %vm365 = vcmask 1041408
  %v366 = vsel %vm365, %v364, 0.0
  %367 = vadd.xlane.f32.xlu0 %v366
  %v368 = vpop.xlane.xlu0 %367
  %v369 = vadd.f32 %v368, 1e-12
  %v370 = vrsqrt.pop %v369
  %v371 = vmul.f32 %v369, %v370
  %vm372 = vcmp.eq.f32.partialorder %v369, inf
  %v373 = vsel %vm372, %v369, %v371
  %vm374 = vcmp.eq.f32.partialorder %v369, 0.0
  %v375 = vand.u32 %v369, 2147483648
  %v376 = vsel %vm374, %v375, %v373
  %v378 = vrot.slane %v376, 4
  %v380 = vmul.f32 %v363, %v378
  %v381 = vrcp.pop %v380
  %v382 = vmul.f32 %v351, %v381
  %v385 = vrot.slane %v14, 6
  %v386 = vrot.slane %v15, 6
  %v387 = vsel %vm365, %v385, %v386
  %v389 = vsel %vm20, %v387, 0.0
  %v390 = vrot.slane %v389, 4
  %v391 = vadd.f32 %v389, %v390
  %v392 = vrot.slane %v391, 2
  %v393 = vadd.f32 %v391, %v392
  %v394 = vrot.slane %v393, 1
  %v395 = vadd.f32 %v393, %v394
  %v396 = vmul.f32 %v395, %v28
  %v397 = vsub.f32 %v14, %v396
  %v398 = vsub.f32 %v15, %v396
  %s399 = scalar_lea.vmem %s2, 8
  %v400 = vld [vmem:[%s399] sm:$0x3f]
  %v401 = vlaneseq
  %v402 = vshrl.u32 %v401, 7
  %v403 = vsub.s32 1, %v402
  %v404 = vrot.slane %v34, %v403
  %v405 = vmul.f32 %v400, %v404
  %v407 = vsel %vm41, %v405, 0
  %v410 = vsel %vm41, %v400, 0
  %412 = vmatprep.subr.mxu0 0.0
  %413 = vmatpush1.xpose.msra.mxu0 %v410
  %414 = vmatprep.subr.mxu0 0.0
  %415 = vmatpush1.xpose.msra.mxu0 0.0
  %416 = vmatprep.subr.mxu0 0.0
  %417 = vmatpush1.xpose.msra.mxu0 0.0
  %418 = vmatprep.subr.mxu0 0.0
  %419 = vmatpush1.xpose.msra.mxu0 0.0
  %420 = vmatprep.subr.mxu0 0.0
  %421 = vmatpush1.xpose.msra.mxu0 0.0
  %422 = vmatprep.subr.mxu0 0.0
  %423 = vmatpush1.xpose.msra.mxu0 0.0
  %424 = vmatprep.subr.mxu0 0.0
  %425 = vmatpush1.xpose.msra.mxu0 0.0
  %426 = vmatprep.subr.mxu0 0.0
  %427 = vmatpush1.xpose.msra.mxu0 0.0
  %428 = vmatprep.subr.mxu0 0.0
  %429 = vmatpush1.xpose.msra.mxu0 0.0
  %430 = vmatprep.subr.mxu0 0.0
  %431 = vmatpush1.xpose.msra.mxu0 0.0
  %432 = vmatprep.subr.mxu0 0.0
  %433 = vmatpush1.xpose.msra.mxu0 0.0
  %434 = vmatprep.subr.mxu0 0.0
  %435 = vmatpush1.xpose.msra.mxu0 0.0
  %436 = vmatprep.subr.mxu0 0.0
  %437 = vmatpush1.xpose.msra.mxu0 0.0
  %438 = vmatprep.subr.mxu0 0.0
  %439 = vmatpush1.xpose.msra.mxu0 0.0
  %440 = vmatprep.subr.mxu0 0.0
  %441 = vmatpush1.xpose.msra.mxu0 0.0
  %442 = vmatprep.subr.mxu0 0.0
  %443 = vmatpush1.xpose.msra.mxu0 0.0
  %444 = vmatprep.subr.mxu0 0.0
  %445 = vmatpush1.xpose.msra.mxu0 0.0
  %446 = vmatprep.subr.mxu0 0.0
  %447 = vmatpush1.xpose.msra.mxu0 0.0
  %448 = vmatprep.subr.mxu0 0.0
  %449 = vmatpush1.xpose.msra.mxu0 0.0
  %450 = vmatprep.subr.mxu0 0.0
  %451 = vmatpush1.xpose.msra.mxu0 0.0
  %452 = vmatprep.subr.mxu0 0.0
  %453 = vmatpush1.xpose.msra.mxu0 0.0
  %454 = vmatprep.subr.mxu0 0.0
  %455 = vmatpush1.xpose.msra.mxu0 0.0
  %456 = vmatprep.subr.mxu0 0.0
  %457 = vmatpush1.xpose.msra.mxu0 0.0
  %458 = vmatprep.subr.mxu0 0.0
  %459 = vmatpush1.xpose.msra.mxu0 0.0
  %460 = vmatprep.subr.mxu0 0.0
  %461 = vmatpush1.xpose.msra.mxu0 0.0
  %462 = vmatprep.subr.mxu0 0.0
  %463 = vmatpush1.xpose.msra.mxu0 0.0
  %464 = vmatprep.subr.mxu0 0.0
  %465 = vmatpush1.xpose.msra.mxu0 0.0
  %466 = vmatprep.subr.mxu0 0.0
  %467 = vmatpush1.xpose.msra.mxu0 0.0
  %468 = vmatprep.subr.mxu0 0.0
  %469 = vmatpush1.xpose.msra.mxu0 0.0
  %470 = vmatprep.subr.mxu0 0.0
  %471 = vmatpush1.xpose.msra.mxu0 0.0
  %472 = vmatprep.subr.mxu0 0.0
  %473 = vmatpush1.xpose.msra.mxu0 0.0
  %474 = vmatprep.subr.mxu0 0.0
  %475 = vmatpush1.xpose.msra.mxu0 0.0
  %476 = vmatprep.mubr.f32.mxu0 0.0
  %477 = vmatmul.mubr.f32.gmra.mrb[0].mxu0 %v407
  %v478 = vpop.f32.mrb[0].mxu0
  %v479 = vadd.f32 0.0, %v478
  %v480 = vpop.f32.mrb[0].mxu0
  %481 = vdwg.mxu0
  %v483 = vrot.slane %v398, 4
  %v486 = vrot.slane %v397, 6
  %v487 = vrot.slane %v398, 6
  %v488 = vsel %vm365, %v486, %v487
  %490 = vmatprep.subr.mxu0 0.0
  %491 = vmatpush1.xpose.msra.mxu0 %v488
  %492 = vmatprep.subr.mxu0 0.0
  %493 = vmatpush1.xpose.msra.mxu0 0.0
  %494 = vmatprep.subr.mxu0 0.0
  %495 = vmatpush1.xpose.msra.mxu0 0.0
  %496 = vmatprep.subr.mxu0 0.0
  %497 = vmatpush1.xpose.msra.mxu0 0.0
  %498 = vmatprep.subr.mxu0 0.0
  %499 = vmatpush1.xpose.msra.mxu0 0.0
  %500 = vmatprep.subr.mxu0 0.0
  %501 = vmatpush1.xpose.msra.mxu0 0.0
  %502 = vmatprep.subr.mxu0 0.0
  %503 = vmatpush1.xpose.msra.mxu0 0.0
  %504 = vmatprep.subr.mxu0 0.0
  %505 = vmatpush1.xpose.msra.mxu0 0.0
  %506 = vmatprep.subr.mxu0 0.0
  %507 = vmatpush1.xpose.msra.mxu0 0.0
  %508 = vmatprep.subr.mxu0 0.0
  %509 = vmatpush1.xpose.msra.mxu0 0.0
  %510 = vmatprep.subr.mxu0 0.0
  %511 = vmatpush1.xpose.msra.mxu0 0.0
  %512 = vmatprep.subr.mxu0 0.0
  %513 = vmatpush1.xpose.msra.mxu0 0.0
  %514 = vmatprep.subr.mxu0 0.0
  %515 = vmatpush1.xpose.msra.mxu0 0.0
  %516 = vmatprep.subr.mxu0 0.0
  %517 = vmatpush1.xpose.msra.mxu0 0.0
  %518 = vmatprep.subr.mxu0 0.0
  %519 = vmatpush1.xpose.msra.mxu0 0.0
  %520 = vmatprep.subr.mxu0 0.0
  %521 = vmatpush1.xpose.msra.mxu0 0.0
  %522 = vmatprep.subr.mxu0 0.0
  %523 = vmatpush1.xpose.msra.mxu0 0.0
  %524 = vmatprep.subr.mxu0 0.0
  %525 = vmatpush1.xpose.msra.mxu0 0.0
  %526 = vmatprep.subr.mxu0 0.0
  %527 = vmatpush1.xpose.msra.mxu0 0.0
  %528 = vmatprep.subr.mxu0 0.0
  %529 = vmatpush1.xpose.msra.mxu0 0.0
  %530 = vmatprep.subr.mxu0 0.0
  %531 = vmatpush1.xpose.msra.mxu0 0.0
  %532 = vmatprep.subr.mxu0 0.0
  %533 = vmatpush1.xpose.msra.mxu0 0.0
  %534 = vmatprep.subr.mxu0 0.0
  %535 = vmatpush1.xpose.msra.mxu0 0.0
  %536 = vmatprep.subr.mxu0 0.0
  %537 = vmatpush1.xpose.msra.mxu0 0.0
  %538 = vmatprep.subr.mxu0 0.0
  %539 = vmatpush1.xpose.msra.mxu0 0.0
  %540 = vmatprep.subr.mxu0 0.0
  %541 = vmatpush1.xpose.msra.mxu0 0.0
  %542 = vmatprep.subr.mxu0 0.0
  %543 = vmatpush1.xpose.msra.mxu0 0.0
  %544 = vmatprep.subr.mxu0 0.0
  %545 = vmatpush1.xpose.msra.mxu0 0.0
  %546 = vmatprep.subr.mxu0 0.0
  %547 = vmatpush1.xpose.msra.mxu0 0.0
  %548 = vmatprep.subr.mxu0 0.0
  %549 = vmatpush1.xpose.msra.mxu0 0.0
  %550 = vmatprep.subr.mxu0 0.0
  %551 = vmatpush1.xpose.msra.mxu0 0.0
  %552 = vmatprep.subr.mxu0 0.0
  %553 = vmatpush1.xpose.msra.mxu0 0.0
  %554 = vmatprep.mubr.f32.mxu0 0.0
  %555 = vmatmul.mubr.f32.gmra.mrb[0].mxu0 %v483
  %v556 = vpop.f32.mrb[0].mxu0
  %v557 = vadd.f32 0.0, %v556
  %v558 = vpop.f32.mrb[0].mxu0
  %559 = vdwg.mxu0
  %v561 = vsel %vm41, %v557, 0
  %v564 = vsel %vm20, %v479, 0
  %566 = vmatprep.subr.mxu0 0.0
  %567 = vmatpush1.msra.mxu0 %v564
  %568 = vmatprep.subr.mxu0 0.0
  %569 = vmatpush1.msra.mxu0 0.0
  %570 = vmatprep.subr.mxu0 0.0
  %571 = vmatpush1.msra.mxu0 0.0
  %572 = vmatprep.subr.mxu0 0.0
  %573 = vmatpush1.msra.mxu0 0.0
  %574 = vmatprep.subr.mxu0 0.0
  %575 = vmatpush1.msra.mxu0 0.0
  %576 = vmatprep.subr.mxu0 0.0
  %577 = vmatpush1.msra.mxu0 0.0
  %578 = vmatprep.subr.mxu0 0.0
  %579 = vmatpush1.msra.mxu0 0.0
  %580 = vmatprep.subr.mxu0 0.0
  %581 = vmatpush1.msra.mxu0 0.0
  %582 = vmatprep.subr.mxu0 0.0
  %583 = vmatpush1.msra.mxu0 0.0
  %584 = vmatprep.subr.mxu0 0.0
  %585 = vmatpush1.msra.mxu0 0.0
  %586 = vmatprep.subr.mxu0 0.0
  %587 = vmatpush1.msra.mxu0 0.0
  %588 = vmatprep.subr.mxu0 0.0
  %589 = vmatpush1.msra.mxu0 0.0
  %590 = vmatprep.subr.mxu0 0.0
  %591 = vmatpush1.msra.mxu0 0.0
  %592 = vmatprep.subr.mxu0 0.0
  %593 = vmatpush1.msra.mxu0 0.0
  %594 = vmatprep.subr.mxu0 0.0
  %595 = vmatpush1.msra.mxu0 0.0
  %596 = vmatprep.subr.mxu0 0.0
  %597 = vmatpush1.msra.mxu0 0.0
  %598 = vmatprep.subr.mxu0 0.0
  %599 = vmatpush1.msra.mxu0 0.0
  %600 = vmatprep.subr.mxu0 0.0
  %601 = vmatpush1.msra.mxu0 0.0
  %602 = vmatprep.subr.mxu0 0.0
  %603 = vmatpush1.msra.mxu0 0.0
  %604 = vmatprep.subr.mxu0 0.0
  %605 = vmatpush1.msra.mxu0 0.0
  %606 = vmatprep.subr.mxu0 0.0
  %607 = vmatpush1.msra.mxu0 0.0
  %608 = vmatprep.subr.mxu0 0.0
  %609 = vmatpush1.msra.mxu0 0.0
  %610 = vmatprep.subr.mxu0 0.0
  %611 = vmatpush1.msra.mxu0 0.0
  %612 = vmatprep.subr.mxu0 0.0
  %613 = vmatpush1.msra.mxu0 0.0
  %614 = vmatprep.subr.mxu0 0.0
  %615 = vmatpush1.msra.mxu0 0.0
  %616 = vmatprep.subr.mxu0 0.0
  %617 = vmatpush1.msra.mxu0 0.0
  %618 = vmatprep.subr.mxu0 0.0
  %619 = vmatpush1.msra.mxu0 0.0
  %620 = vmatprep.subr.mxu0 0.0
  %621 = vmatpush1.msra.mxu0 0.0
  %622 = vmatprep.subr.mxu0 0.0
  %623 = vmatpush1.msra.mxu0 0.0
  %624 = vmatprep.subr.mxu0 0.0
  %625 = vmatpush1.msra.mxu0 0.0
  %626 = vmatprep.subr.mxu0 0.0
  %627 = vmatpush1.msra.mxu0 0.0
  %628 = vmatprep.subr.mxu0 0.0
  %629 = vmatpush1.msra.mxu0 0.0
  %630 = vmatprep.mubr.f32.mxu0 0.0
  %631 = vmatmul.mubr.f32.gmra.mrb[0].mxu0 %v561
  %v632 = vpop.f32.mrb[0].mxu0
  %v633 = vadd.f32 0.0, %v632
  %v634 = vpop.f32.mrb[0].mxu0
  %635 = vdwg.mxu0
  %v637 = vsel %vm41, %v633, 0
  %v639 = vsel %vm20, %v488, 0
  %641 = vmatprep.subr.mxu0 0.0
  %642 = vmatpush1.msra.mxu0 %v639
  %643 = vmatprep.subr.mxu0 0.0
  %644 = vmatpush1.msra.mxu0 0.0
  %645 = vmatprep.subr.mxu0 0.0
  %646 = vmatpush1.msra.mxu0 0.0
  %647 = vmatprep.subr.mxu0 0.0
  %648 = vmatpush1.msra.mxu0 0.0
  %649 = vmatprep.subr.mxu0 0.0
  %650 = vmatpush1.msra.mxu0 0.0
  %651 = vmatprep.subr.mxu0 0.0
  %652 = vmatpush1.msra.mxu0 0.0
  %653 = vmatprep.subr.mxu0 0.0
  %654 = vmatpush1.msra.mxu0 0.0
  %655 = vmatprep.subr.mxu0 0.0
  %656 = vmatpush1.msra.mxu0 0.0
  %657 = vmatprep.subr.mxu0 0.0
  %658 = vmatpush1.msra.mxu0 0.0
  %659 = vmatprep.subr.mxu0 0.0
  %660 = vmatpush1.msra.mxu0 0.0
  %661 = vmatprep.subr.mxu0 0.0
  %662 = vmatpush1.msra.mxu0 0.0
  %663 = vmatprep.subr.mxu0 0.0
  %664 = vmatpush1.msra.mxu0 0.0
  %665 = vmatprep.subr.mxu0 0.0
  %666 = vmatpush1.msra.mxu0 0.0
  %667 = vmatprep.subr.mxu0 0.0
  %668 = vmatpush1.msra.mxu0 0.0
  %669 = vmatprep.subr.mxu0 0.0
  %670 = vmatpush1.msra.mxu0 0.0
  %671 = vmatprep.subr.mxu0 0.0
  %672 = vmatpush1.msra.mxu0 0.0
  %673 = vmatprep.subr.mxu0 0.0
  %674 = vmatpush1.msra.mxu0 0.0
  %675 = vmatprep.subr.mxu0 0.0
  %676 = vmatpush1.msra.mxu0 0.0
  %677 = vmatprep.subr.mxu0 0.0
  %678 = vmatpush1.msra.mxu0 0.0
  %679 = vmatprep.subr.mxu0 0.0
  %680 = vmatpush1.msra.mxu0 0.0
  %681 = vmatprep.subr.mxu0 0.0
  %682 = vmatpush1.msra.mxu0 0.0
  %683 = vmatprep.subr.mxu0 0.0
  %684 = vmatpush1.msra.mxu0 0.0
  %685 = vmatprep.subr.mxu0 0.0
  %686 = vmatpush1.msra.mxu0 0.0
  %687 = vmatprep.subr.mxu0 0.0
  %688 = vmatpush1.msra.mxu0 0.0
  %689 = vmatprep.subr.mxu0 0.0
  %690 = vmatpush1.msra.mxu0 0.0
  %691 = vmatprep.subr.mxu0 0.0
  %692 = vmatpush1.msra.mxu0 0.0
  %693 = vmatprep.subr.mxu0 0.0
  %694 = vmatpush1.msra.mxu0 0.0
  %695 = vmatprep.subr.mxu0 0.0
  %696 = vmatpush1.msra.mxu0 0.0
  %697 = vmatprep.subr.mxu0 0.0
  %698 = vmatpush1.msra.mxu0 0.0
  %699 = vmatprep.subr.mxu0 0.0
  %700 = vmatpush1.msra.mxu0 0.0
  %701 = vmatprep.subr.mxu0 0.0
  %702 = vmatpush1.msra.mxu0 0.0
  %703 = vmatprep.subr.mxu0 0.0
  %704 = vmatpush1.msra.mxu0 0.0
  %705 = vmatprep.mubr.f32.mxu0 0.0
  %706 = vmatmul.mubr.f32.gmra.mrb[0].mxu0 %v637
  %v707 = vpop.f32.mrb[0].mxu0
  %v708 = vadd.f32 %v396, %v707
  %v709 = vpop.f32.mrb[0].mxu0
  %710 = vdwg.mxu0
  %v712 = vrot.slane %v708, 4
  %v714 = vmul.f32 %v15, %v712
  %v715 = vsel %vm348, %v714, 0.0
  %716 = vadd.xlane.f32.xlu0 %v715
  %v717 = vpop.xlane.xlu0 %716
  %v718 = vmul.f32 %v708, %v708
  %v719 = vsel %vm365, %v718, 0.0
  %720 = vadd.xlane.f32.xlu0 %v719
  %v721 = vpop.xlane.xlu0 %720
  %v722 = vadd.f32 %v721, 1e-12
  %v723 = vrsqrt.pop %v722
  %v724 = vmul.f32 %v722, %v723
  %vm725 = vcmp.eq.f32.partialorder %v722, inf
  %v726 = vsel %vm725, %v722, %v724
  %vm727 = vcmp.eq.f32.partialorder %v722, 0.0
  %v728 = vand.u32 %v722, 2147483648
  %v729 = vsel %vm727, %v728, %v726
  %v731 = vrot.slane %v729, 4
  %v733 = vmul.f32 %v363, %v731
  %v734 = vrcp.pop %v733
  %v735 = vmul.f32 %v717, %v734
  %736 = vmatprep.subr.mxu0 0.0
  %737 = vmatpush1.xpose.msra.mxu0 %v488
  %738 = vmatprep.subr.mxu0 0.0
  %739 = vmatpush1.xpose.msra.mxu0 0.0
  %740 = vmatprep.subr.mxu0 0.0
  %741 = vmatpush1.xpose.msra.mxu0 0.0
  %742 = vmatprep.subr.mxu0 0.0
  %743 = vmatpush1.xpose.msra.mxu0 0.0
  %744 = vmatprep.subr.mxu0 0.0
  %745 = vmatpush1.xpose.msra.mxu0 0.0
  %746 = vmatprep.subr.mxu0 0.0
  %747 = vmatpush1.xpose.msra.mxu0 0.0
  %748 = vmatprep.subr.mxu0 0.0
  %749 = vmatpush1.xpose.msra.mxu0 0.0
  %750 = vmatprep.subr.mxu0 0.0
  %751 = vmatpush1.xpose.msra.mxu0 0.0
  %752 = vmatprep.subr.mxu0 0.0
  %753 = vmatpush1.xpose.msra.mxu0 0.0
  %754 = vmatprep.subr.mxu0 0.0
  %755 = vmatpush1.xpose.msra.mxu0 0.0
  %756 = vmatprep.subr.mxu0 0.0
  %757 = vmatpush1.xpose.msra.mxu0 0.0
  %758 = vmatprep.subr.mxu0 0.0
  %759 = vmatpush1.xpose.msra.mxu0 0.0
  %760 = vmatprep.subr.mxu0 0.0
  %761 = vmatpush1.xpose.msra.mxu0 0.0
  %762 = vmatprep.subr.mxu0 0.0
  %763 = vmatpush1.xpose.msra.mxu0 0.0
  %764 = vmatprep.subr.mxu0 0.0
  %765 = vmatpush1.xpose.msra.mxu0 0.0
  %766 = vmatprep.subr.mxu0 0.0
  %767 = vmatpush1.xpose.msra.mxu0 0.0
  %768 = vmatprep.subr.mxu0 0.0
  %769 = vmatpush1.xpose.msra.mxu0 0.0
  %770 = vmatprep.subr.mxu0 0.0
  %771 = vmatpush1.xpose.msra.mxu0 0.0
  %772 = vmatprep.subr.mxu0 0.0
  %773 = vmatpush1.xpose.msra.mxu0 0.0
  %774 = vmatprep.subr.mxu0 0.0
  %775 = vmatpush1.xpose.msra.mxu0 0.0
  %776 = vmatprep.subr.mxu0 0.0
  %777 = vmatpush1.xpose.msra.mxu0 0.0
  %778 = vmatprep.subr.mxu0 0.0
  %779 = vmatpush1.xpose.msra.mxu0 0.0
  %780 = vmatprep.subr.mxu0 0.0
  %781 = vmatpush1.xpose.msra.mxu0 0.0
  %782 = vmatprep.subr.mxu0 0.0
  %783 = vmatpush1.xpose.msra.mxu0 0.0
  %784 = vmatprep.subr.mxu0 0.0
  %785 = vmatpush1.xpose.msra.mxu0 0.0
  %786 = vmatprep.subr.mxu0 0.0
  %787 = vmatpush1.xpose.msra.mxu0 0.0
  %788 = vmatprep.subr.mxu0 0.0
  %789 = vmatpush1.xpose.msra.mxu0 0.0
  %790 = vmatprep.subr.mxu0 0.0
  %791 = vmatpush1.xpose.msra.mxu0 0.0
  %792 = vmatprep.subr.mxu0 0.0
  %793 = vmatpush1.xpose.msra.mxu0 0.0
  %794 = vmatprep.subr.mxu0 0.0
  %795 = vmatpush1.xpose.msra.mxu0 0.0
  %796 = vmatprep.subr.mxu0 0.0
  %797 = vmatpush1.xpose.msra.mxu0 0.0
  %798 = vmatprep.subr.mxu0 0.0
  %799 = vmatpush1.xpose.msra.mxu0 0.0
  %800 = vmatprep.mubr.f32.mxu0 0.0
  %801 = vmatmul.mubr.f32.gmra.mrb[0].mxu0 %v30
  %v802 = vpop.f32.mrb[0].mxu0
  %v803 = vadd.f32 0.0, %v802
  %v804 = vpop.f32.mrb[0].mxu0
  %805 = vdwg.mxu0
  %v807 = vsel %vm41, %v803, 0
  %809 = vmatprep.subr.mxu0 0.0
  %810 = vmatpush1.msra.mxu0 %v564
  %811 = vmatprep.subr.mxu0 0.0
  %812 = vmatpush1.msra.mxu0 0.0
  %813 = vmatprep.subr.mxu0 0.0
  %814 = vmatpush1.msra.mxu0 0.0
  %815 = vmatprep.subr.mxu0 0.0
  %816 = vmatpush1.msra.mxu0 0.0
  %817 = vmatprep.subr.mxu0 0.0
  %818 = vmatpush1.msra.mxu0 0.0
  %819 = vmatprep.subr.mxu0 0.0
  %820 = vmatpush1.msra.mxu0 0.0
  %821 = vmatprep.subr.mxu0 0.0
  %822 = vmatpush1.msra.mxu0 0.0
  %823 = vmatprep.subr.mxu0 0.0
  %824 = vmatpush1.msra.mxu0 0.0
  %825 = vmatprep.subr.mxu0 0.0
  %826 = vmatpush1.msra.mxu0 0.0
  %827 = vmatprep.subr.mxu0 0.0
  %828 = vmatpush1.msra.mxu0 0.0
  %829 = vmatprep.subr.mxu0 0.0
  %830 = vmatpush1.msra.mxu0 0.0
  %831 = vmatprep.subr.mxu0 0.0
  %832 = vmatpush1.msra.mxu0 0.0
  %833 = vmatprep.subr.mxu0 0.0
  %834 = vmatpush1.msra.mxu0 0.0
  %835 = vmatprep.subr.mxu0 0.0
  %836 = vmatpush1.msra.mxu0 0.0
  %837 = vmatprep.subr.mxu0 0.0
  %838 = vmatpush1.msra.mxu0 0.0
  %839 = vmatprep.subr.mxu0 0.0
  %840 = vmatpush1.msra.mxu0 0.0
  %841 = vmatprep.subr.mxu0 0.0
  %842 = vmatpush1.msra.mxu0 0.0
  %843 = vmatprep.subr.mxu0 0.0
  %844 = vmatpush1.msra.mxu0 0.0
  %845 = vmatprep.subr.mxu0 0.0
  %846 = vmatpush1.msra.mxu0 0.0
  %847 = vmatprep.subr.mxu0 0.0
  %848 = vmatpush1.msra.mxu0 0.0
  %849 = vmatprep.subr.mxu0 0.0
  %850 = vmatpush1.msra.mxu0 0.0
  %851 = vmatprep.subr.mxu0 0.0
  %852 = vmatpush1.msra.mxu0 0.0
  %853 = vmatprep.subr.mxu0 0.0
  %854 = vmatpush1.msra.mxu0 0.0
  %855 = vmatprep.subr.mxu0 0.0
  %856 = vmatpush1.msra.mxu0 0.0
  %857 = vmatprep.subr.mxu0 0.0
  %858 = vmatpush1.msra.mxu0 0.0
  %859 = vmatprep.subr.mxu0 0.0
  %860 = vmatpush1.msra.mxu0 0.0
  %861 = vmatprep.subr.mxu0 0.0
  %862 = vmatpush1.msra.mxu0 0.0
  %863 = vmatprep.subr.mxu0 0.0
  %864 = vmatpush1.msra.mxu0 0.0
  %865 = vmatprep.subr.mxu0 0.0
  %866 = vmatpush1.msra.mxu0 0.0
  %867 = vmatprep.subr.mxu0 0.0
  %868 = vmatpush1.msra.mxu0 0.0
  %869 = vmatprep.subr.mxu0 0.0
  %870 = vmatpush1.msra.mxu0 0.0
  %871 = vmatprep.subr.mxu0 0.0
  %872 = vmatpush1.msra.mxu0 0.0
  %873 = vmatprep.mubr.f32.mxu0 0.0
  %874 = vmatmul.mubr.f32.gmra.mrb[0].mxu0 %v807
  %v875 = vpop.f32.mrb[0].mxu0
  %v876 = vadd.f32 0.0, %v875
  %v877 = vpop.f32.mrb[0].mxu0
  %878 = vdwg.mxu0
  %v880 = vsel %vm41, %v876, 0
  %882 = vmatprep.subr.mxu0 0.0
  %883 = vmatpush1.xpose.msra.mxu0 %v807
  %884 = vmatprep.subr.mxu0 0.0
  %885 = vmatpush1.xpose.msra.mxu0 0.0
  %886 = vmatprep.subr.mxu0 0.0
  %887 = vmatpush1.xpose.msra.mxu0 0.0
  %888 = vmatprep.subr.mxu0 0.0
  %889 = vmatpush1.xpose.msra.mxu0 0.0
  %890 = vmatprep.subr.mxu0 0.0
  %891 = vmatpush1.xpose.msra.mxu0 0.0
  %892 = vmatprep.subr.mxu0 0.0
  %893 = vmatpush1.xpose.msra.mxu0 0.0
  %894 = vmatprep.subr.mxu0 0.0
  %895 = vmatpush1.xpose.msra.mxu0 0.0
  %896 = vmatprep.subr.mxu0 0.0
  %897 = vmatpush1.xpose.msra.mxu0 0.0
  %898 = vmatprep.subr.mxu0 0.0
  %899 = vmatpush1.xpose.msra.mxu0 0.0
  %900 = vmatprep.subr.mxu0 0.0
  %901 = vmatpush1.xpose.msra.mxu0 0.0
  %902 = vmatprep.subr.mxu0 0.0
  %903 = vmatpush1.xpose.msra.mxu0 0.0
  %904 = vmatprep.subr.mxu0 0.0
  %905 = vmatpush1.xpose.msra.mxu0 0.0
  %906 = vmatprep.subr.mxu0 0.0
  %907 = vmatpush1.xpose.msra.mxu0 0.0
  %908 = vmatprep.subr.mxu0 0.0
  %909 = vmatpush1.xpose.msra.mxu0 0.0
  %910 = vmatprep.subr.mxu0 0.0
  %911 = vmatpush1.xpose.msra.mxu0 0.0
  %912 = vmatprep.subr.mxu0 0.0
  %913 = vmatpush1.xpose.msra.mxu0 0.0
  %914 = vmatprep.subr.mxu0 0.0
  %915 = vmatpush1.xpose.msra.mxu0 0.0
  %916 = vmatprep.subr.mxu0 0.0
  %917 = vmatpush1.xpose.msra.mxu0 0.0
  %918 = vmatprep.subr.mxu0 0.0
  %919 = vmatpush1.xpose.msra.mxu0 0.0
  %920 = vmatprep.subr.mxu0 0.0
  %921 = vmatpush1.xpose.msra.mxu0 0.0
  %922 = vmatprep.subr.mxu0 0.0
  %923 = vmatpush1.xpose.msra.mxu0 0.0
  %924 = vmatprep.subr.mxu0 0.0
  %925 = vmatpush1.xpose.msra.mxu0 0.0
  %926 = vmatprep.subr.mxu0 0.0
  %927 = vmatpush1.xpose.msra.mxu0 0.0
  %928 = vmatprep.subr.mxu0 0.0
  %929 = vmatpush1.xpose.msra.mxu0 0.0
  %930 = vmatprep.subr.mxu0 0.0
  %931 = vmatpush1.xpose.msra.mxu0 0.0
  %932 = vmatprep.subr.mxu0 0.0
  %933 = vmatpush1.xpose.msra.mxu0 0.0
  %934 = vmatprep.subr.mxu0 0.0
  %935 = vmatpush1.xpose.msra.mxu0 0.0
  %936 = vmatprep.subr.mxu0 0.0
  %937 = vmatpush1.xpose.msra.mxu0 0.0
  %938 = vmatprep.subr.mxu0 0.0
  %939 = vmatpush1.xpose.msra.mxu0 0.0
  %940 = vmatprep.subr.mxu0 0.0
  %941 = vmatpush1.xpose.msra.mxu0 0.0
  %942 = vmatprep.subr.mxu0 0.0
  %943 = vmatpush1.xpose.msra.mxu0 0.0
  %944 = vmatprep.subr.mxu0 0.0
  %945 = vmatpush1.xpose.msra.mxu0 0.0
  %946 = vmatprep.mubr.f32.mxu0 0.0
  %947 = vmatmul.mubr.f32.gmra.mrb[0].mxu0 %v880
  %v948 = vpop.f32.mrb[0].mxu0
  %v949 = vadd.f32 0.0, %v948
  %v950 = vpop.f32.mrb[0].mxu0
  %951 = vdwg.mxu0
  %v952 = vmul.f32 %v949, %v115
  %vm953 = vcmask 46080
  %v954 = vsel %vm953, %v952, 0.0
  %955 = vadd.xlane.f32.xlu0 %v954
  %v956 = vpop.xlane.xlu0 %955
  %v957 = vrot.slane %v956, 4
  %v958 = vadd.f32 %v956, %v957
  %v959 = vrot.slane %v958, 2
  %v960 = vadd.f32 %v958, %v959
  %v961 = vrot.slane %v960, 1
  %v962 = vadd.f32 %v960, %v961
  %s963 = vtos %v962
  %s964 = smul.f32 %s963, 2.0
  %v965 = vmul.f32 %v14, %v14
  %966 = vadd.xlane.f32.xlu0 %v965
  %v967 = vpop.xlane.xlu0 %966
  %v968 = vsel %vm20, %v352, 0.0
  %969 = vadd.xlane.f32.xlu0 %v968
  %v970 = vpop.xlane.xlu0 %969
  %v971 = vadd.f32 %v967, 1e-12
  %v972 = vadd.f32 %v970, 1e-12
  %v973 = vrsqrt.pop %v971
  %v974 = vmul.f32 %v971, %v973
  %vm975 = vcmp.eq.f32.partialorder %v971, inf
  %v976 = vsel %vm975, %v971, %v974
  %vm977 = vcmp.eq.f32.partialorder %v971, 0.0
  %v978 = vand.u32 %v971, 2147483648
  %v979 = vsel %vm977, %v978, %v976
  %v980 = vrsqrt.pop %v972
  %v981 = vmul.f32 %v972, %v980
  %vm982 = vcmp.eq.f32.partialorder %v972, inf
  %v983 = vsel %vm982, %v972, %v981
  %vm984 = vcmp.eq.f32.partialorder %v972, 0.0
  %v985 = vand.u32 %v972, 2147483648
  %v986 = vsel %vm984, %v985, %v983
  %v987 = vrcp.pop %v979
  %v988 = vmul.f32 %v14, %v987
  %v989 = vrcp.pop %v986
  %v990 = vmul.f32 %v15, %v989
  %991 = vmatprep.subr.mxu0 0.0
  %992 = vmatpush1.xpose.msra.mxu0 %v988
  %993 = vmatprep.subr.mxu0 0.0
  %994 = vmatpush1.xpose.msra.mxu0 %v990
  %995 = vmatprep.subr.mxu0 0.0
  %996 = vmatpush1.xpose.msra.mxu0 0.0
  %997 = vmatprep.subr.mxu0 0.0
  %998 = vmatpush1.xpose.msra.mxu0 0.0
  %999 = vmatprep.subr.mxu0 0.0
  %1000 = vmatpush1.xpose.msra.mxu0 0.0
  %1001 = vmatprep.subr.mxu0 0.0
  %1002 = vmatpush1.xpose.msra.mxu0 0.0
  %1003 = vmatprep.subr.mxu0 0.0
  %1004 = vmatpush1.xpose.msra.mxu0 0.0
  %1005 = vmatprep.subr.mxu0 0.0
  %1006 = vmatpush1.xpose.msra.mxu0 0.0
  %1007 = vmatprep.subr.mxu0 0.0
  %1008 = vmatpush1.xpose.msra.mxu0 0.0
  %1009 = vmatprep.subr.mxu0 0.0
  %1010 = vmatpush1.xpose.msra.mxu0 0.0
  %1011 = vmatprep.subr.mxu0 0.0
  %1012 = vmatpush1.xpose.msra.mxu0 0.0
  %1013 = vmatprep.subr.mxu0 0.0
  %1014 = vmatpush1.xpose.msra.mxu0 0.0
  %1015 = vmatprep.subr.mxu0 0.0
  %1016 = vmatpush1.xpose.msra.mxu0 0.0
  %1017 = vmatprep.subr.mxu0 0.0
  %1018 = vmatpush1.xpose.msra.mxu0 0.0
  %1019 = vmatprep.subr.mxu0 0.0
  %1020 = vmatpush1.xpose.msra.mxu0 0.0
  %1021 = vmatprep.subr.mxu0 0.0
  %1022 = vmatpush1.xpose.msra.mxu0 0.0
  %1023 = vmatprep.subr.mxu0 0.0
  %1024 = vmatpush1.xpose.msra.mxu0 0.0
  %1025 = vmatprep.subr.mxu0 0.0
  %1026 = vmatpush1.xpose.msra.mxu0 0.0
  %1027 = vmatprep.subr.mxu0 0.0
  %1028 = vmatpush1.xpose.msra.mxu0 0.0
  %1029 = vmatprep.subr.mxu0 0.0
  %1030 = vmatpush1.xpose.msra.mxu0 0.0
  %1031 = vmatprep.subr.mxu0 0.0
  %1032 = vmatpush1.xpose.msra.mxu0 0.0
  %1033 = vmatprep.subr.mxu0 0.0
  %1034 = vmatpush1.xpose.msra.mxu0 0.0
  %1035 = vmatprep.subr.mxu0 0.0
  %1036 = vmatpush1.xpose.msra.mxu0 0.0
  %1037 = vmatprep.subr.mxu0 0.0
  %1038 = vmatpush1.xpose.msra.mxu0 0.0
  %1039 = vmatprep.subr.mxu0 0.0
  %1040 = vmatpush1.xpose.msra.mxu0 0.0
  %1041 = vmatprep.subr.mxu0 0.0
  %1042 = vmatpush1.xpose.msra.mxu0 0.0
  %1043 = vmatprep.subr.mxu0 0.0
  %1044 = vmatpush1.xpose.msra.mxu0 0.0
  %1045 = vmatprep.subr.mxu0 0.0
  %1046 = vmatpush1.xpose.msra.mxu0 0.0
  %1047 = vmatprep.subr.mxu0 0.0
  %1048 = vmatpush1.xpose.msra.mxu0 0.0
  %1049 = vmatprep.subr.mxu0 0.0
  %1050 = vmatpush1.xpose.msra.mxu0 0.0
  %1051 = vmatprep.subr.mxu0 0.0
  %1052 = vmatpush1.xpose.msra.mxu0 0.0
  %1053 = vmatprep.subr.mxu0 0.0
  %1054 = vmatpush1.xpose.msra.mxu0 0.0
  %1055 = vmatprep.mubr.f32.mxu0 0.0
  %1056 = vmatmul.mubr.f32.gmra.mrb[0].mxu0 %v988
  %v1057 = vpop.f32.mrb[0].mxu0
  %v1058 = vadd.f32 0.0, %v1057
  %v1059 = vpop.f32.mrb[0].mxu0
  %1060 = vmatprep.mubr.f32.mxu0 0.0
  %1061 = vmatmul.mubr.f32.gmra.mrb[0].mxu0 %v990
  %v1062 = vpop.f32.mrb[0].mxu0
  %v1063 = vadd.f32 0.0, %v1062
  %v1064 = vpop.f32.mrb[0].mxu0
  %1065 = vdwg.mxu0
  %v1066 = vrcp.pop 0.07
  %v1067 = vmul.f32 %v1058, %v1066
  %v1068 = vmul.f32 %v1063, %v1066
  %v1069 = vlaneseq
  %v1070 = vshrl.u32 %v1069, 7
  %v1071 = vadd.s32 %v1070, 8
  %vm1072 = vcmp.ne.s32.totalorder %v1070, %v18
  %vm1073 = vcmp.ne.s32.totalorder %v1071, %v18
  %v1074 = vsel %vm1072, 1, 0
  %v1075 = vsel %vm1073, 1, 0
  %v1076 = vcvt.s32.f32 %v1074
  %v1077 = vcvt.s32.f32 %v1075
  %vm1078 = vcmp.ge.s32.totalorder %v1070, 6
  %vm1079 = vcmp.ge.s32.totalorder %v1071, 6
  %vm1080 = vcmp.lt.s32.totalorder %v1070, 12
  %vm1081 = vcmp.lt.s32.totalorder %v1071, 12
  %vm1082 = vmand %vm1078, %vm1080
  %vm1083 = vmand %vm1079, %vm1081
  %vm1084 = vcmp.ge.s32.totalorder %v1070, 13
  %vm1085 = vcmp.ge.s32.totalorder %v1071, 13
  %vm1086 = vmor %vm1082, %vm1084
  %vm1087 = vmor %vm1083, %vm1085
  %vm1088 = vcmp.ge.s32.totalorder %v18, 6
  %vm1089 = vcmp.lt.s32.totalorder %v18, 12
  %vm1090 = vmand %vm1088, %vm1089
  %vm1091 = vcmp.ge.s32.totalorder %v18, 13
  %vm1092 = vmor %vm1090, %vm1091
  %vm1093 = vmxor %vm1086, %vm1092
  %vm1094 = vmxor %vm1087, %vm1092
  %vm1095 = vmxor %vm1093, 1
  %vm1096 = vmxor %vm1094, 1
  %vm1097 = vmand %vm1095, %vm1072
  %vm1098 = vmand %vm1096, %vm1073
  %v1099 = vsel %vm1097, 1, 0
  %v1100 = vsel %vm1098, 1, 0
  %v1101 = vcvt.s32.f32 %v1099
  %v1102 = vcvt.s32.f32 %v1100
  %vm1103 = vcmask 113664
  %v1104 = vsel %vm1103, %v1067, -inf
  %1105 = vmax.xlane.f32.xlu0 %v1104
  %v1106 = vpop.xlane.xlu0 %1105
  %vm1107 = vcmask 111616
  %v1108 = vsel %vm1107, %v1068, -inf
  %1109 = vmax.xlane.f32.xlu0 %v1108
  %v1110 = vpop.xlane.xlu0 %1109
  %v1111 = vsub.f32 %v1067, %v1106
  %v1112 = vsub.f32 %v1068, %v1110
  %v1113 = vmul.f32 %v1111, 1.442695
  %v1114 = vpow.pop %v1113
  %v1115 = vmul.f32 %v1112, 1.442695
  %v1116 = vpow.pop %v1115
  %v1117 = vmul.f32 %v1114, %v1076
  %v1118 = vmul.f32 %v1116, %v1077
  %v1119 = vsel %vm1103, %v1117, 0.0
  %1120 = vadd.xlane.f32.xlu0 %v1119
  %v1121 = vpop.xlane.xlu0 %1120
  %v1122 = vsel %vm1107, %v1118, 0.0
  %1123 = vadd.xlane.f32.xlu0 %v1122
  %v1124 = vpop.xlane.xlu0 %1123
  %v1125 = vadd.f32 %v1121, 1e-12
  %v1126 = vadd.f32 %v1124, 1e-12
  %v1127 = vlog2.pop %v1125
  %v1128 = vmul.f32 %v1127, 0.6931472
  %v1129 = vlog2.pop %v1126
  %v1130 = vmul.f32 %v1129, 0.6931472
  %v1131 = vsub.f32 %v1111, %v1128
  %v1132 = vsub.f32 %v1112, %v1130
  %v1133 = vmul.f32 %v1101, %v1131
  %v1134 = vmul.f32 %v1102, %v1132
  %v1135 = vsel %vm1103, %v1133, 0.0
  %1136 = vadd.xlane.f32.xlu0 %v1135
  %v1137 = vpop.xlane.xlu0 %1136
  %v1138 = vsel %vm1107, %v1134, 0.0
  %1139 = vadd.xlane.f32.xlu0 %v1138
  %v1140 = vpop.xlane.xlu0 %1139
  %v1141 = vsel %vm1103, %v1101, 0.0
  %1142 = vadd.xlane.f32.xlu0 %v1141
  %v1143 = vpop.xlane.xlu0 %1142
  %v1144 = vsel %vm1107, %v1102, 0.0
  %1145 = vadd.xlane.f32.xlu0 %v1144
  %v1146 = vpop.xlane.xlu0 %1145
  %v1147 = vadd.f32 %v1143, 1e-12
  %v1148 = vadd.f32 %v1146, 1e-12
  %v1149 = vrcp.pop %v1147
  %v1150 = vmul.f32 %v1137, %v1149
  %v1151 = vrcp.pop %v1148
  %v1152 = vmul.f32 %v1140, %v1151
  %vm1153 = vcmask 7168
  %v1154 = vsel %vm1153, %v1150, 0.0
  %vm1155 = vcmask 5120
  %v1156 = vsel %vm1155, %v1152, 0.0
  %v1157 = vadd.f32 %v1154, %v1156
  %1158 = vadd.xlane.f32.xlu0 %v1157
  %v1159 = vpop.xlane.xlu0 %1158
  %v1160 = vrot.slane %v1159, 4
  %v1161 = vadd.f32 %v1159, %v1160
  %v1162 = vrot.slane %v1161, 2
  %v1163 = vadd.f32 %v1161, %v1162
  %v1164 = vrot.slane %v1163, 1
  %v1165 = vadd.f32 %v1163, %v1164
  %s1166 = vtos %v1165
  %v1167 = vrcp.pop 14.0
  %s1168 = vtos %v1167
  %s1169 = smul.f32 %s1166, %s1168
  %s1170 = smul.f32 %s1169, -1.0
  %1171 = vst [vmem:[%s3] sm:$0xff] 0.0
  %1173 = vset.pattern.permute.xlu0 0
  %1174 = vperm.xlu0 %1173, %v382
  %v1175 = vpop.permute.xlu0 %1174
  %1177 = vst [vmem:[%s3 - $0x4] sm:$0x10] %v1175
  %1179 = vset.pattern.permute.xlu0 0
  %1180 = vperm.xlu0 %1179, %v735
  %v1181 = vpop.permute.xlu0 %1180
  %1183 = vst [vmem:[%s3 - $0x3] sm:$0x10] %v1181
  %1184 = vst [vmem:[%s3 - $0x3] sm:$0x20] %v1175
  %1185 = vst [vmem:[%s3 - $0x2] sm:$0x20] %v1181
  %v1186 = vstv %s964
  %1187 = vst [vmem:[%s3 + $0x4] sm:$0x1] %v1186
  %v1188 = vstv %s1170
  %1189 = vst [vmem:[%s3 + $0x5] sm:$0x1] %v1188
  // Predicated region
  $region14: #{my_model_forward.3} parent=0 // pred_check
    _
  $region15: #{my_model_forward.3} parent=0 // pred_check_branch
    %1191 = sbr.rel (0) target = $region17
  $region16: #{my_model_forward.3} parent=0 // pred_region
    _
  $region17: #{my_model_forward.3} parent=0 // pred_fallthru
    _
  // Predicated region
  $region18: #{my_model_forward.3} parent=0 // pred_check
    _
  $region19: #{my_model_forward.3} parent=0 // pred_check_branch
    %1193 = sbr.rel (0) target = $region21
  $region20: #{my_model_forward.3} parent=0 // pred_region
    _
  $region21: #{my_model_forward.3} parent=0 // pred_fallthru
    _

</llo_original>
